<compile_context>
chip_gen: v5e
topology: v5e:2x2
jax: 0.10.0
libtpu: 0.0.40
codegen_flags: <defaults>
</compile_context>

<pallas_src>
import functools

import numpy as np
import jax
import jax.numpy as jnp
from jax import lax
from jax.experimental import pallas as pl
from jax.experimental.pallas import tpu as pltpu

NUM_DISTR = 10     # Density_estimator num_distr
EST_OUT_DIM = 10   # Density_estimator default output_dim (task-likelihood head)
OUT_LANES = 128    # packed (classification | task_likelihood | pad) output width

# HIGHEST-precision dot used only by the pure-JAX reference.
_DOT = functools.partial(jnp.dot, preferred_element_type=jnp.float32,
                         precision=jax.lax.Precision.HIGHEST)


# ----------------------------------------------------------------------------------
# Host-side weight lowering / constant 0-1 matrices (O(params) work, done once)
# ----------------------------------------------------------------------------------
def _lower_conv(w, width_in, width_out):
    """Lower an OIHW conv weight (O,C,KH,KW) into KH banded matrices.

    M[ki, c*width_in + xi, o*width_out + xo] = w[o, c, ki, xi - xo]  (0 <= xi-xo < KW)
    so that out_row[r] = sum_ki in_row[r+ki] @ M[ki] is the valid 2-D convolution
    with input channels folded into the lane dimension.
    """
    O, C, KH, KW = w.shape
    xi = jnp.arange(width_in)[:, None]
    xo = jnp.arange(width_out)[None, :]
    kj = xi - xo
    valid = ((kj >= 0) & (kj < KW)).astype(w.dtype)
    kj_c = jnp.clip(kj, 0, KW - 1)
    band = w[:, :, :, kj_c] * valid                       # (O, C, KH, Win, Wout)
    m = jnp.transpose(band, (2, 1, 3, 0, 4))              # (KH, C, Win, O, Wout)
    return m.reshape(KH, C * width_in, O * width_out)


def _pool_lane_mats(n_ch, w_in):
    # even/odd lane selectors within each channel block: (2, n_ch*w_in, n_ch*w_in//2)
    w_out = w_in // 2
    ce = np.zeros((n_ch * w_in, n_ch * w_out), np.float32)
    co = np.zeros_like(ce)
    for c in range(n_ch):
        for j in range(w_out):
            ce[c * w_in + 2 * j, c * w_out + j] = 1.0
            co[c * w_in + 2 * j + 1, c * w_out + j] = 1.0
    return jnp.asarray(np.stack([ce, co]))


def _flatten_perm(n_ch=16, hw=5):
    # kernel feature lane (y*80 + c*5 + x)  ->  PyTorch NCHW flatten index (c*25+y*5+x)
    idx = np.zeros(n_ch * hw * hw, np.int32)
    for y in range(hw):
        for c in range(n_ch):
            for x in range(hw):
                idx[y * (n_ch * hw) + c * hw + x] = c * hw * hw + y * hw + x
    return idx


def _ceil_to(n, m):
    return ((n + m - 1) // m) * m


# ----------------------------------------------------------------------------------
# Fused Multi_head forward kernel
# ----------------------------------------------------------------------------------
def _make_mh_kernel(tb, n_classes, return_probs):
    RH = 16 * tb     # rows per row-parity group (j-major: row = j*tb + sample)

    def kernel(x_ref, m1_ref, b1_ref, pc1_ref, m2_ref, b2_ref, pc2_ref,
               w1_ref, wb1_ref, w2_ref, wb2_ref, wo_ref, bo_ref,
               we_ref, be_ref, out_ref):
        bf16 = jnp.bfloat16

        def mm(a, b):
            # bf16 x bf16 on the MXU, f32 accumulate
            return jnp.dot(a.astype(bf16), b, preferred_element_type=jnp.float32)

        def group_lse(v, n_groups):
            # per-group logsumexp over NUM_DISTR mixture logits (per-group max shift)
            cols = []
            for g in range(n_groups):
                sub = v[:, g * NUM_DISTR:(g + 1) * NUM_DISTR]
                m = jnp.max(sub, axis=-1, keepdims=True)
                cols.append(jnp.log(jnp.sum(jnp.exp(sub - m), axis=-1,
                                            keepdims=True)) + m)
            return jnp.concatenate(cols, axis=1)

        def softmax(v):
            m = jnp.max(v, axis=-1, keepdims=True)
            e = jnp.exp(v - m)
            return e / jnp.sum(e, axis=-1, keepdims=True)

        # ---- conv1 (3->6, 5x5 valid): one long-K matmul (K = 5*96 = 480) ----------
        a1 = jnp.maximum(mm(x_ref[...], m1_ref[...]) + b1_ref[...], 0.0)  # (32tb,168)

        # ---- 2x2 max pool: row pairs = even/odd halves of the block (host layout),
        #      column pairs via tiny 0/1 selection matmuls ---------------------------
        rmax = jnp.maximum(a1[0:RH, :], a1[RH:2 * RH, :])                 # (16tb,168)
        p1 = jnp.maximum(mm(rmax, pc1_ref[0]), mm(rmax, pc1_ref[1]))      # (16tb,84)

        # ---- conv2 (6->16, 5x5 valid): j-major rows => the 5 taps are contiguous
        #      row slabs; fold them into one long-K matmul (K = 5*84 = 420) ---------
        l2 = jnp.concatenate([p1[ki * tb:(ki + 10) * tb, :] for ki in range(5)],
                             axis=1)                                      # (10tb,420)
        a2 = jnp.maximum(mm(l2, m2_ref[...]) + b2_ref[...], 0.0)          # (10tb,160)
        c2 = jnp.maximum(mm(a2, pc2_ref[0]), mm(a2, pc2_ref[1]))          # (10tb,80)

        # ---- 2x2 row pool + flatten: rows are y-major so both are contiguous row
        #      slabs lane-concatenated; NCHW permutation folded into w1/we ----------
        z = jnp.concatenate(
            [jnp.maximum(c2[(2 * y) * tb:(2 * y + 1) * tb, :],
                         c2[(2 * y + 1) * tb:(2 * y + 2) * tb, :])
             for y in range(5)], axis=1)                                  # (tb,400)

        # ---- Sub_module column: Linear+clamp x2 -> density estimator -> softmax ---
        h = jnp.maximum(mm(z, w1_ref[...]) + wb1_ref[...], 0.0)           # (tb,200)
        h = jnp.maximum(mm(h, w2_ref[...]) + wb2_ref[...], 0.0)           # (tb,200)
        cl = mm(h, wo_ref[...]) + bo_ref[...]                             # (tb,nc*10)
        cls = softmax(group_lse(cl, n_classes))                           # (tb,nc)

        # ---- task-likelihood estimator on (detached) shared features ---------------
        el = mm(z, we_ref[...]) + be_ref[...]                             # (tb,100)
        tl = group_lse(el, EST_OUT_DIM)                                   # (tb,10)
        est = softmax(tl) if return_probs else tl

        pieces = [cls, est]
        pad_w = OUT_LANES - n_classes - EST_OUT_DIM
        if pad_w > 0:
            pieces.append(jnp.zeros((tb, pad_w), jnp.float32))
        out_ref[...] = jnp.concatenate(pieces, axis=1)                    # (tb,128)

    return kernel


def multi_head_forward(params, x, task_idx=0, return_probs=True):
    B = x.shape[0]
    assert x.shape[1:] == (3, 32, 32)
    col = params['columns'][task_idx]
    n_classes = col['out_w'].shape[1] // NUM_DISTR
    assert n_classes + EST_OUT_DIM <= OUT_LANES

    # Batch tiling: tiles are multiples of 8, capped at 64; keep >= 2 grid blocks
    # when the batch allows so v7x's two TensorCores can both be used.
    b8 = max(8, _ceil_to(B, 8))
    if b8 >= 128:
        tb = 64
    elif b8 >= 16:
        tb = _ceil_to(b8 // 2, 8)
    else:
        tb = b8
    b_pad = _ceil_to(b8, tb)
    nblk = b_pad // tb

    xp = x.astype(jnp.float32)
    if b_pad != B:
        xp = jnp.concatenate([xp, jnp.zeros((b_pad - B, 3, 32, 32), jnp.float32)], 0)

    # conv1 LHS built host-side: the 5 kernel-row taps are folded into lanes (K=480)
    # and rows are ordered (block, row-parity, pooled-row j, sample) so the 2x2 row
    # pool, the conv2 band taps and the final flatten are contiguous slices in-kernel.
    xr = jnp.transpose(xp, (2, 0, 1, 3)).reshape(32, b_pad, 96)           # [h, b, c*32+w]
    xz = jnp.concatenate([xr, jnp.zeros((4, b_pad, 96), xr.dtype)], axis=0)
    taps = jnp.concatenate([xz[ki:ki + 32] for ki in range(5)], axis=-1)  # (32, b, 480)
    taps = taps.reshape(16, 2, b_pad, 480).transpose(1, 0, 2, 3)          # (e, j, b, 480)
    x1 = (taps.reshape(2, 16, nblk, tb, 480).transpose(2, 0, 1, 3, 4)
          .reshape(nblk * 32 * tb, 480).astype(jnp.bfloat16))

    bf = lambda a: a.astype(jnp.bfloat16)
    perm = _flatten_perm()
    consts = [
        bf(_lower_conv(params['conv1_w'], 32, 28).reshape(5 * 96, 6 * 28)),   # m1cat
        jnp.repeat(params['conv1_b'], 28)[None, :],                           # b1 (f32)
        bf(_pool_lane_mats(6, 28)),                                           # pc1
        bf(_lower_conv(params['conv2_w'], 14, 10).reshape(5 * 84, 16 * 10)),  # m2cat
        jnp.repeat(params['conv2_b'], 10)[None, :],                           # b2 (f32)
        bf(_pool_lane_mats(16, 10)),                                          # pc2
        bf(col['d1_w'][perm, :]), col['d1_b'][None, :],
        bf(col['d2_w']), col['d2_b'][None, :],
        bf(col['out_w']), col['out_b'][None, :],
        bf(params['est_w'][perm, :]), params['est_b'][None, :],
    ]

    def cspec(a):
        return pl.BlockSpec(a.shape, lambda g, nd=a.ndim: (0,) * nd)

    out = pl.pallas_call(
        _make_mh_kernel(tb, n_classes, return_probs),
        grid=(nblk,),
        in_specs=[pl.BlockSpec((32 * tb, 480), lambda g: (g, 0))]
                 + [cspec(a) for a in consts],
        out_specs=pl.BlockSpec((tb, OUT_LANES), lambda g: (g, 0)),
        out_shape=jax.ShapeDtypeStruct((b_pad, OUT_LANES), jnp.float32),
        compiler_params=pltpu.CompilerParams(
            dimension_semantics=("parallel",),
            vmem_limit_bytes=32 * 1024 * 1024),
    )(x1, *consts)

    cls = out[:B, :n_classes]
    est = out[:B, n_classes:n_classes + EST_OUT_DIM]
    return cls, est


# ----------------------------------------------------------------------------------
# Deterministic parameter init (synthetic; PyTorch-style uniform(-1/sqrt(fan_in), .))
# ----------------------------------------------------------------------------------
def _linear_init(key, fan_in, fan_out):
    kw, kb = jax.random.split(key)
    bound = 1.0 / float(np.sqrt(fan_in))
    w = jax.random.uniform(kw, (fan_in, fan_out), jnp.float32, -bound, bound)
    b = jax.random.uniform(kb, (fan_out,), jnp.float32, -bound, bound)
    return w, b


def _conv_init(key, co, ci, kh, kw_):
    k1, k2 = jax.random.split(key)
    bound = 1.0 / float(np.sqrt(ci * kh * kw_))
    w = jax.random.uniform(k1, (co, ci, kh, kw_), jnp.float32, -bound, bound)   # OIHW
    b = jax.random.uniform(k2, (co,), jnp.float32, -bound, bound)
    return w, b


def init_params(key, task_labels):
    keys = jax.random.split(key, 3 + len(task_labels))
    c1w, c1b = _conv_init(keys[0], 6, 3, 5, 5)
    c2w, c2b = _conv_init(keys[1], 16, 6, 5, 5)
    ew, eb = _linear_init(keys[2], 400, EST_OUT_DIM * NUM_DISTR)
    columns = []
    for t, label in enumerate(task_labels):
        k1, k2, k3 = jax.random.split(keys[3 + t], 3)
        d1w, d1b = _linear_init(k1, 400, 200)
        d2w, d2b = _linear_init(k2, 200, 200)
        ow, ob = _linear_init(k3, 200, len(label) * NUM_DISTR)
        columns.append(dict(d1_w=d1w, d1_b=d1b, d2_w=d2w, d2_b=d2b, out_w=ow, out_b=ob))
    return dict(conv1_w=c1w, conv1_b=c1b, conv2_w=c2w, conv2_b=c2b,
                est_w=ew, est_b=eb, columns=columns)


# ----------------------------------------------------------------------------------
# Pure-JAX reference (same assumed semantics) for a correctness check
# ----------------------------------------------------------------------------------
def ref_forward(params, x, task_idx=0, return_probs=True):
    prec = jax.lax.Precision.HIGHEST

    def conv(z, w, b):
        out = lax.conv_general_dilated(z, w, (1, 1), 'VALID',
                                       dimension_numbers=('NCHW', 'OIHW', 'NCHW'),
                                       precision=prec)
        return jnp.maximum(out + b[None, :, None, None], 0.0)

    def pool(z):
        return lax.reduce_window(z, -jnp.inf, lax.max, (1, 1, 2, 2), (1, 1, 2, 2), 'VALID')

    z = pool(conv(x, params['conv1_w'], params['conv1_b']))
    z = pool(conv(z, params['conv2_w'], params['conv2_b']))
    zf = z.reshape(x.shape[0], 400)
    col = params['columns'][task_idx]
    h = jnp.maximum(_DOT(zf, col['d1_w']) + col['d1_b'], 0.0)
    h = jnp.maximum(_DOT(h, col['d2_w']) + col['d2_b'], 0.0)
    nc = col['out_w'].shape[1] // NUM_DISTR
    cl = (_DOT(h, col['out_w']) + col['out_b']).reshape(-1, nc, NUM_DISTR)
    cls = jax.nn.softmax(jax.scipy.special.logsumexp(cl, axis=-1), axis=-1)
    el = (_DOT(zf, params['est_w']) + params['est_b']).reshape(-1, EST_OUT_DIM, NUM_DISTR)
    el = jax.scipy.special.logsumexp(el, axis=-1)
    est = jax.nn.softmax(el, axis=-1) if return_probs else el
    return cls, est


if __name__ == "__main__":
    key = jax.random.PRNGKey(0)
    k_param, k_x = jax.random.split(key)

    task_labels = [[0, 1], [2, 3, 4]]               # 2 tasks: a 2-way head and a 3-way head
    params = init_params(k_param, task_labels)
    x = jax.random.normal(k_x, (2, 3, 32, 32), jnp.float32)   # NCHW, 32x32 -> 16*5*5 features

    classification, task_likelihood = multi_head_forward(params, x, task_idx=0,
                                                         return_probs=True)
    jax.block_until_ready((classification, task_likelihood))

    assert classification.shape == (2, len(task_labels[0]))
    assert task_likelihood.shape == (2, EST_OUT_DIM)

    ref_cls, ref_tl = ref_forward(params, x, task_idx=0, return_probs=True)
    np.testing.assert_allclose(np.asarray(classification), np.asarray(ref_cls),
                               rtol=2e-2, atol=2e-2)
    np.testing.assert_allclose(np.asarray(task_likelihood), np.asarray(ref_tl),
                               rtol=2e-2, atol=2e-2)

    print("KERNEL_OK")
</pallas_src>

<mosaic_0001>
module attributes {stable_mosaic.version = 11 : i64} {
  func.func @kernel(%arg0: i32, %arg1: memref<256x480xbf16, #tpu.memory_space<vmem>>, %arg2: memref<480x168xbf16, #tpu.memory_space<vmem>>, %arg3: memref<1x168xf32, #tpu.memory_space<vmem>>, %arg4: memref<2x168x84xbf16, #tpu.memory_space<vmem>>, %arg5: memref<420x160xbf16, #tpu.memory_space<vmem>>, %arg6: memref<1x160xf32, #tpu.memory_space<vmem>>, %arg7: memref<2x160x80xbf16, #tpu.memory_space<vmem>>, %arg8: memref<400x200xbf16, #tpu.memory_space<vmem>>, %arg9: memref<1x200xf32, #tpu.memory_space<vmem>>, %arg10: memref<200x200xbf16, #tpu.memory_space<vmem>>, %arg11: memref<1x200xf32, #tpu.memory_space<vmem>>, %arg12: memref<200x20xbf16, #tpu.memory_space<vmem>>, %arg13: memref<1x20xf32, #tpu.memory_space<vmem>>, %arg14: memref<400x100xbf16, #tpu.memory_space<vmem>>, %arg15: memref<1x100xf32, #tpu.memory_space<vmem>>, %arg16: memref<8x128xf32, #tpu.memory_space<vmem>>) attributes {dimension_semantics = [#tpu.dimension_semantics<parallel>], iteration_bounds = array<i64: 1>, scalar_prefetch = 0 : i64, scratch_operands = 0 : i64, tpu.core_type = #tpu.core_type<tc>, window_params = [{transform_indices = @transform_0, window_bounds = array<i64: 256, 480>}, {pipeline_mode = #tpu.pipeline_mode<synchronous>, transform_indices = @transform_1, window_bounds = array<i64: 480, 168>}, {pipeline_mode = #tpu.pipeline_mode<synchronous>, transform_indices = @transform_2, window_bounds = array<i64: 1, 168>}, {pipeline_mode = #tpu.pipeline_mode<synchronous>, transform_indices = @transform_3, window_bounds = array<i64: 2, 168, 84>}, {pipeline_mode = #tpu.pipeline_mode<synchronous>, transform_indices = @transform_4, window_bounds = array<i64: 420, 160>}, {pipeline_mode = #tpu.pipeline_mode<synchronous>, transform_indices = @transform_5, window_bounds = array<i64: 1, 160>}, {pipeline_mode = #tpu.pipeline_mode<synchronous>, transform_indices = @transform_6, window_bounds = array<i64: 2, 160, 80>}, {pipeline_mode = #tpu.pipeline_mode<synchronous>, transform_indices = @transform_7, window_bounds = array<i64: 400, 200>}, {pipeline_mode = #tpu.pipeline_mode<synchronous>, transform_indices = @transform_8, window_bounds = array<i64: 1, 200>}, {pipeline_mode = #tpu.pipeline_mode<synchronous>, transform_indices = @transform_9, window_bounds = array<i64: 200, 200>}, {pipeline_mode = #tpu.pipeline_mode<synchronous>, transform_indices = @transform_10, window_bounds = array<i64: 1, 200>}, {pipeline_mode = #tpu.pipeline_mode<synchronous>, transform_indices = @transform_11, window_bounds = array<i64: 200, 20>}, {pipeline_mode = #tpu.pipeline_mode<synchronous>, transform_indices = @transform_12, window_bounds = array<i64: 1, 20>}, {pipeline_mode = #tpu.pipeline_mode<synchronous>, transform_indices = @transform_13, window_bounds = array<i64: 400, 100>}, {pipeline_mode = #tpu.pipeline_mode<synchronous>, transform_indices = @transform_14, window_bounds = array<i64: 1, 100>}, {transform_indices = @transform_15, window_bounds = array<i64: 8, 128>}]} {
    %c0 = arith.constant 0 : index
    %c0_0 = arith.constant 0 : index
    %0 = vector.load %arg1[%c0, %c0_0] : memref<256x480xbf16, #tpu.memory_space<vmem>>, vector<256x480xbf16>
    %c0_1 = arith.constant 0 : index
    %c0_2 = arith.constant 0 : index
    %1 = vector.load %arg2[%c0_1, %c0_2] : memref<480x168xbf16, #tpu.memory_space<vmem>>, vector<480x168xbf16>
    %cst = arith.constant dense<0.000000e+00> : vector<256x168xf32>
    %2 = tpu.matmul %0, %1, %cst {dimension_numbers = #tpu.dot_dimension_numbers<[1], [0], [0], [1], [0, 0, 1, 1], [], []>} : vector<256x480xbf16>, vector<480x168xbf16>, vector<256x168xf32> -> vector<256x168xf32>
    %c0_3 = arith.constant 0 : index
    %c0_4 = arith.constant 0 : index
    %3 = vector.load %arg3[%c0_3, %c0_4] : memref<1x168xf32, #tpu.memory_space<vmem>>, vector<1x168xf32>
    %4 = vector.broadcast %3 : vector<1x168xf32> to vector<256x168xf32>
    %5 = arith.addf %2, %4 : vector<256x168xf32>
    %cst_5 = arith.constant 0.000000e+00 : f32
    %6 = vector.broadcast %cst_5 : f32 to vector<256x168xf32>
    %7 = arith.maximumf %5, %6 : vector<256x168xf32>
    %8 = vector.extract_strided_slice %7 {offsets = [0, 0], sizes = [128, 168], strides = [1, 1]} : vector<256x168xf32> to vector<128x168xf32>
    %9 = vector.extract_strided_slice %7 {offsets = [128, 0], sizes = [128, 168], strides = [1, 1]} : vector<256x168xf32> to vector<128x168xf32>
    %10 = arith.maximumf %8, %9 : vector<128x168xf32>
    %c0_6 = arith.constant 0 : index
    %c0_7 = arith.constant 0 : index
    %c0_8 = arith.constant 0 : index
    %11 = vector.load %arg4[%c0_6, %c0_7, %c0_8] : memref<2x168x84xbf16, #tpu.memory_space<vmem>>, vector<1x168x84xbf16>
    %12 = vector.shape_cast %11 : vector<1x168x84xbf16> to vector<168x84xbf16>
    %13 = arith.truncf %10 : vector<128x168xf32> to vector<128x168xbf16>
    %cst_9 = arith.constant dense<0.000000e+00> : vector<128x84xf32>
    %14 = tpu.matmul %13, %12, %cst_9 {dimension_numbers = #tpu.dot_dimension_numbers<[1], [0], [0], [1], [0, 0, 1, 1], [], []>} : vector<128x168xbf16>, vector<168x84xbf16>, vector<128x84xf32> -> vector<128x84xf32>
    %c1 = arith.constant 1 : index
    %c0_10 = arith.constant 0 : index
    %c0_11 = arith.constant 0 : index
    %15 = vector.load %arg4[%c1, %c0_10, %c0_11] : memref<2x168x84xbf16, #tpu.memory_space<vmem>>, vector<1x168x84xbf16>
    %16 = vector.shape_cast %15 : vector<1x168x84xbf16> to vector<168x84xbf16>
    %17 = arith.truncf %10 : vector<128x168xf32> to vector<128x168xbf16>
    %cst_12 = arith.constant dense<0.000000e+00> : vector<128x84xf32>
    %18 = tpu.matmul %17, %16, %cst_12 {dimension_numbers = #tpu.dot_dimension_numbers<[1], [0], [0], [1], [0, 0, 1, 1], [], []>} : vector<128x168xbf16>, vector<168x84xbf16>, vector<128x84xf32> -> vector<128x84xf32>
    %19 = arith.maximumf %14, %18 : vector<128x84xf32>
    %20 = vector.extract_strided_slice %19 {offsets = [0, 0], sizes = [80, 84], strides = [1, 1]} : vector<128x84xf32> to vector<80x84xf32>
    %21 = vector.extract_strided_slice %19 {offsets = [8, 0], sizes = [80, 84], strides = [1, 1]} : vector<128x84xf32> to vector<80x84xf32>
    %22 = vector.extract_strided_slice %19 {offsets = [16, 0], sizes = [80, 84], strides = [1, 1]} : vector<128x84xf32> to vector<80x84xf32>
    %23 = vector.extract_strided_slice %19 {offsets = [24, 0], sizes = [80, 84], strides = [1, 1]} : vector<128x84xf32> to vector<80x84xf32>
    %24 = vector.extract_strided_slice %19 {offsets = [32, 0], sizes = [80, 84], strides = [1, 1]} : vector<128x84xf32> to vector<80x84xf32>
    %25 = tpu.concatenate %20, %21, %22, %23, %24 in 1 : vector<80x84xf32>, vector<80x84xf32>, vector<80x84xf32>, vector<80x84xf32>, vector<80x84xf32> -> vector<80x420xf32>
    %c0_13 = arith.constant 0 : index
    %c0_14 = arith.constant 0 : index
    %26 = vector.load %arg5[%c0_13, %c0_14] : memref<420x160xbf16, #tpu.memory_space<vmem>>, vector<420x160xbf16>
    %27 = arith.truncf %25 : vector<80x420xf32> to vector<80x420xbf16>
    %cst_15 = arith.constant dense<0.000000e+00> : vector<80x160xf32>
    %28 = tpu.matmul %27, %26, %cst_15 {dimension_numbers = #tpu.dot_dimension_numbers<[1], [0], [0], [1], [0, 0, 1, 1], [], []>} : vector<80x420xbf16>, vector<420x160xbf16>, vector<80x160xf32> -> vector<80x160xf32>
    %c0_16 = arith.constant 0 : index
    %c0_17 = arith.constant 0 : index
    %29 = vector.load %arg6[%c0_16, %c0_17] : memref<1x160xf32, #tpu.memory_space<vmem>>, vector<1x160xf32>
    %30 = vector.broadcast %29 : vector<1x160xf32> to vector<80x160xf32>
    %31 = arith.addf %28, %30 : vector<80x160xf32>
    %cst_18 = arith.constant 0.000000e+00 : f32
    %32 = vector.broadcast %cst_18 : f32 to vector<80x160xf32>
    %33 = arith.maximumf %31, %32 : vector<80x160xf32>
    %c0_19 = arith.constant 0 : index
    %c0_20 = arith.constant 0 : index
    %c0_21 = arith.constant 0 : index
    %34 = vector.load %arg7[%c0_19, %c0_20, %c0_21] : memref<2x160x80xbf16, #tpu.memory_space<vmem>>, vector<1x160x80xbf16>
    %35 = vector.shape_cast %34 : vector<1x160x80xbf16> to vector<160x80xbf16>
    %36 = arith.truncf %33 : vector<80x160xf32> to vector<80x160xbf16>
    %cst_22 = arith.constant dense<0.000000e+00> : vector<80x80xf32>
    %37 = tpu.matmul %36, %35, %cst_22 {dimension_numbers = #tpu.dot_dimension_numbers<[1], [0], [0], [1], [0, 0, 1, 1], [], []>} : vector<80x160xbf16>, vector<160x80xbf16>, vector<80x80xf32> -> vector<80x80xf32>
    %c1_23 = arith.constant 1 : index
    %c0_24 = arith.constant 0 : index
    %c0_25 = arith.constant 0 : index
    %38 = vector.load %arg7[%c1_23, %c0_24, %c0_25] : memref<2x160x80xbf16, #tpu.memory_space<vmem>>, vector<1x160x80xbf16>
    %39 = vector.shape_cast %38 : vector<1x160x80xbf16> to vector<160x80xbf16>
    %40 = arith.truncf %33 : vector<80x160xf32> to vector<80x160xbf16>
    %cst_26 = arith.constant dense<0.000000e+00> : vector<80x80xf32>
    %41 = tpu.matmul %40, %39, %cst_26 {dimension_numbers = #tpu.dot_dimension_numbers<[1], [0], [0], [1], [0, 0, 1, 1], [], []>} : vector<80x160xbf16>, vector<160x80xbf16>, vector<80x80xf32> -> vector<80x80xf32>
    %42 = arith.maximumf %37, %41 : vector<80x80xf32>
    %43 = vector.extract_strided_slice %42 {offsets = [0, 0], sizes = [8, 80], strides = [1, 1]} : vector<80x80xf32> to vector<8x80xf32>
    %44 = vector.extract_strided_slice %42 {offsets = [8, 0], sizes = [8, 80], strides = [1, 1]} : vector<80x80xf32> to vector<8x80xf32>
    %45 = arith.maximumf %43, %44 : vector<8x80xf32>
    %46 = vector.extract_strided_slice %42 {offsets = [16, 0], sizes = [8, 80], strides = [1, 1]} : vector<80x80xf32> to vector<8x80xf32>
    %47 = vector.extract_strided_slice %42 {offsets = [24, 0], sizes = [8, 80], strides = [1, 1]} : vector<80x80xf32> to vector<8x80xf32>
    %48 = arith.maximumf %46, %47 : vector<8x80xf32>
    %49 = vector.extract_strided_slice %42 {offsets = [32, 0], sizes = [8, 80], strides = [1, 1]} : vector<80x80xf32> to vector<8x80xf32>
    %50 = vector.extract_strided_slice %42 {offsets = [40, 0], sizes = [8, 80], strides = [1, 1]} : vector<80x80xf32> to vector<8x80xf32>
    %51 = arith.maximumf %49, %50 : vector<8x80xf32>
    %52 = vector.extract_strided_slice %42 {offsets = [48, 0], sizes = [8, 80], strides = [1, 1]} : vector<80x80xf32> to vector<8x80xf32>
    %53 = vector.extract_strided_slice %42 {offsets = [56, 0], sizes = [8, 80], strides = [1, 1]} : vector<80x80xf32> to vector<8x80xf32>
    %54 = arith.maximumf %52, %53 : vector<8x80xf32>
    %55 = vector.extract_strided_slice %42 {offsets = [64, 0], sizes = [8, 80], strides = [1, 1]} : vector<80x80xf32> to vector<8x80xf32>
    %56 = vector.extract_strided_slice %42 {offsets = [72, 0], sizes = [8, 80], strides = [1, 1]} : vector<80x80xf32> to vector<8x80xf32>
    %57 = arith.maximumf %55, %56 : vector<8x80xf32>
    %58 = tpu.concatenate %45, %48, %51, %54, %57 in 1 : vector<8x80xf32>, vector<8x80xf32>, vector<8x80xf32>, vector<8x80xf32>, vector<8x80xf32> -> vector<8x400xf32>
    %c0_27 = arith.constant 0 : index
    %c0_28 = arith.constant 0 : index
    %59 = vector.load %arg8[%c0_27, %c0_28] : memref<400x200xbf16, #tpu.memory_space<vmem>>, vector<400x200xbf16>
    %60 = arith.truncf %58 : vector<8x400xf32> to vector<8x400xbf16>
    %cst_29 = arith.constant dense<0.000000e+00> : vector<8x200xf32>
    %61 = tpu.matmul %60, %59, %cst_29 {dimension_numbers = #tpu.dot_dimension_numbers<[1], [0], [0], [1], [0, 0, 1, 1], [], []>} : vector<8x400xbf16>, vector<400x200xbf16>, vector<8x200xf32> -> vector<8x200xf32>
    %c0_30 = arith.constant 0 : index
    %c0_31 = arith.constant 0 : index
    %62 = vector.load %arg9[%c0_30, %c0_31] : memref<1x200xf32, #tpu.memory_space<vmem>>, vector<1x200xf32>
    %63 = vector.broadcast %62 : vector<1x200xf32> to vector<8x200xf32>
    %64 = arith.addf %61, %63 : vector<8x200xf32>
    %cst_32 = arith.constant 0.000000e+00 : f32
    %65 = vector.broadcast %cst_32 : f32 to vector<8x200xf32>
    %66 = arith.maximumf %64, %65 : vector<8x200xf32>
    %c0_33 = arith.constant 0 : index
    %c0_34 = arith.constant 0 : index
    %67 = vector.load %arg10[%c0_33, %c0_34] : memref<200x200xbf16, #tpu.memory_space<vmem>>, vector<200x200xbf16>
    %68 = arith.truncf %66 : vector<8x200xf32> to vector<8x200xbf16>
    %cst_35 = arith.constant dense<0.000000e+00> : vector<8x200xf32>
    %69 = tpu.matmul %68, %67, %cst_35 {dimension_numbers = #tpu.dot_dimension_numbers<[1], [0], [0], [1], [0, 0, 1, 1], [], []>} : vector<8x200xbf16>, vector<200x200xbf16>, vector<8x200xf32> -> vector<8x200xf32>
    %c0_36 = arith.constant 0 : index
    %c0_37 = arith.constant 0 : index
    %70 = vector.load %arg11[%c0_36, %c0_37] : memref<1x200xf32, #tpu.memory_space<vmem>>, vector<1x200xf32>
    %71 = vector.broadcast %70 : vector<1x200xf32> to vector<8x200xf32>
    %72 = arith.addf %69, %71 : vector<8x200xf32>
    %cst_38 = arith.constant 0.000000e+00 : f32
    %73 = vector.broadcast %cst_38 : f32 to vector<8x200xf32>
    %74 = arith.maximumf %72, %73 : vector<8x200xf32>
    %c0_39 = arith.constant 0 : index
    %c0_40 = arith.constant 0 : index
    %75 = vector.load %arg12[%c0_39, %c0_40] : memref<200x20xbf16, #tpu.memory_space<vmem>>, vector<200x20xbf16>
    %76 = arith.truncf %74 : vector<8x200xf32> to vector<8x200xbf16>
    %cst_41 = arith.constant dense<0.000000e+00> : vector<8x20xf32>
    %77 = tpu.matmul %76, %75, %cst_41 {dimension_numbers = #tpu.dot_dimension_numbers<[1], [0], [0], [1], [0, 0, 1, 1], [], []>} : vector<8x200xbf16>, vector<200x20xbf16>, vector<8x20xf32> -> vector<8x20xf32>
    %c0_42 = arith.constant 0 : index
    %c0_43 = arith.constant 0 : index
    %78 = vector.load %arg13[%c0_42, %c0_43] : memref<1x20xf32, #tpu.memory_space<vmem>>, vector<1x20xf32>
    %79 = vector.broadcast %78 : vector<1x20xf32> to vector<8x20xf32>
    %80 = arith.addf %77, %79 : vector<8x20xf32>
    %81 = vector.extract_strided_slice %80 {offsets = [0, 0], sizes = [8, 10], strides = [1, 1]} : vector<8x20xf32> to vector<8x10xf32>
    %cst_44 = arith.constant dense<0xFF800000> : vector<8xf32>
    %82 = vector.multi_reduction <maximumf>, %81, %cst_44 [1] : vector<8x10xf32> to vector<8xf32>
    %83 = vector.shape_cast %82 : vector<8xf32> to vector<8x1xf32>
    %84 = vector.broadcast %83 : vector<8x1xf32> to vector<8x10xf32>
    %85 = arith.subf %81, %84 : vector<8x10xf32>
    %86 = math.exp %85 : vector<8x10xf32>
    %cst_45 = arith.constant dense<0.000000e+00> : vector<8xf32>
    %87 = vector.multi_reduction <add>, %86, %cst_45 [1] : vector<8x10xf32> to vector<8xf32>
    %88 = vector.shape_cast %87 : vector<8xf32> to vector<8x1xf32>
    %89 = math.log %88 : vector<8x1xf32>
    %90 = arith.addf %89, %83 : vector<8x1xf32>
    %91 = vector.extract_strided_slice %80 {offsets = [0, 10], sizes = [8, 10], strides = [1, 1]} : vector<8x20xf32> to vector<8x10xf32>
    %cst_46 = arith.constant dense<0xFF800000> : vector<8xf32>
    %92 = vector.multi_reduction <maximumf>, %91, %cst_46 [1] : vector<8x10xf32> to vector<8xf32>
    %93 = vector.shape_cast %92 : vector<8xf32> to vector<8x1xf32>
    %94 = vector.broadcast %93 : vector<8x1xf32> to vector<8x10xf32>
    %95 = arith.subf %91, %94 : vector<8x10xf32>
    %96 = math.exp %95 : vector<8x10xf32>
    %cst_47 = arith.constant dense<0.000000e+00> : vector<8xf32>
    %97 = vector.multi_reduction <add>, %96, %cst_47 [1] : vector<8x10xf32> to vector<8xf32>
    %98 = vector.shape_cast %97 : vector<8xf32> to vector<8x1xf32>
    %99 = math.log %98 : vector<8x1xf32>
    %100 = arith.addf %99, %93 : vector<8x1xf32>
    %101 = tpu.concatenate %90, %100 in 1 : vector<8x1xf32>, vector<8x1xf32> -> vector<8x2xf32>
    %cst_48 = arith.constant dense<0xFF800000> : vector<8xf32>
    %102 = vector.multi_reduction <maximumf>, %101, %cst_48 [1] : vector<8x2xf32> to vector<8xf32>
    %103 = vector.shape_cast %102 : vector<8xf32> to vector<8x1xf32>
    %104 = vector.broadcast %103 : vector<8x1xf32> to vector<8x2xf32>
    %105 = arith.subf %101, %104 : vector<8x2xf32>
    %106 = math.exp %105 : vector<8x2xf32>
    %cst_49 = arith.constant dense<0.000000e+00> : vector<8xf32>
    %107 = vector.multi_reduction <add>, %106, %cst_49 [1] : vector<8x2xf32> to vector<8xf32>
    %108 = vector.shape_cast %107 : vector<8xf32> to vector<8x1xf32>
    %109 = vector.broadcast %108 : vector<8x1xf32> to vector<8x2xf32>
    %110 = arith.divf %106, %109 : vector<8x2xf32>
    %c0_50 = arith.constant 0 : index
    %c0_51 = arith.constant 0 : index
    %111 = vector.load %arg14[%c0_50, %c0_51] : memref<400x100xbf16, #tpu.memory_space<vmem>>, vector<400x100xbf16>
    %112 = arith.truncf %58 : vector<8x400xf32> to vector<8x400xbf16>
    %cst_52 = arith.constant dense<0.000000e+00> : vector<8x100xf32>
    %113 = tpu.matmul %112, %111, %cst_52 {dimension_numbers = #tpu.dot_dimension_numbers<[1], [0], [0], [1], [0, 0, 1, 1], [], []>} : vector<8x400xbf16>, vector<400x100xbf16>, vector<8x100xf32> -> vector<8x100xf32>
    %c0_53 = arith.constant 0 : index
    %c0_54 = arith.constant 0 : index
    %114 = vector.load %arg15[%c0_53, %c0_54] : memref<1x100xf32, #tpu.memory_space<vmem>>, vector<1x100xf32>
    %115 = vector.broadcast %114 : vector<1x100xf32> to vector<8x100xf32>
    %116 = arith.addf %113, %115 : vector<8x100xf32>
    %117 = vector.extract_strided_slice %116 {offsets = [0, 0], sizes = [8, 10], strides = [1, 1]} : vector<8x100xf32> to vector<8x10xf32>
    %cst_55 = arith.constant dense<0xFF800000> : vector<8xf32>
    %118 = vector.multi_reduction <maximumf>, %117, %cst_55 [1] : vector<8x10xf32> to vector<8xf32>
    %119 = vector.shape_cast %118 : vector<8xf32> to vector<8x1xf32>
    %120 = vector.broadcast %119 : vector<8x1xf32> to vector<8x10xf32>
    %121 = arith.subf %117, %120 : vector<8x10xf32>
    %122 = math.exp %121 : vector<8x10xf32>
    %cst_56 = arith.constant dense<0.000000e+00> : vector<8xf32>
    %123 = vector.multi_reduction <add>, %122, %cst_56 [1] : vector<8x10xf32> to vector<8xf32>
    %124 = vector.shape_cast %123 : vector<8xf32> to vector<8x1xf32>
    %125 = math.log %124 : vector<8x1xf32>
    %126 = arith.addf %125, %119 : vector<8x1xf32>
    %127 = vector.extract_strided_slice %116 {offsets = [0, 10], sizes = [8, 10], strides = [1, 1]} : vector<8x100xf32> to vector<8x10xf32>
    %cst_57 = arith.constant dense<0xFF800000> : vector<8xf32>
    %128 = vector.multi_reduction <maximumf>, %127, %cst_57 [1] : vector<8x10xf32> to vector<8xf32>
    %129 = vector.shape_cast %128 : vector<8xf32> to vector<8x1xf32>
    %130 = vector.broadcast %129 : vector<8x1xf32> to vector<8x10xf32>
    %131 = arith.subf %127, %130 : vector<8x10xf32>
    %132 = math.exp %131 : vector<8x10xf32>
    %cst_58 = arith.constant dense<0.000000e+00> : vector<8xf32>
    %133 = vector.multi_reduction <add>, %132, %cst_58 [1] : vector<8x10xf32> to vector<8xf32>
    %134 = vector.shape_cast %133 : vector<8xf32> to vector<8x1xf32>
    %135 = math.log %134 : vector<8x1xf32>
    %136 = arith.addf %135, %129 : vector<8x1xf32>
    %137 = vector.extract_strided_slice %116 {offsets = [0, 20], sizes = [8, 10], strides = [1, 1]} : vector<8x100xf32> to vector<8x10xf32>
    %cst_59 = arith.constant dense<0xFF800000> : vector<8xf32>
    %138 = vector.multi_reduction <maximumf>, %137, %cst_59 [1] : vector<8x10xf32> to vector<8xf32>
    %139 = vector.shape_cast %138 : vector<8xf32> to vector<8x1xf32>
    %140 = vector.broadcast %139 : vector<8x1xf32> to vector<8x10xf32>
    %141 = arith.subf %137, %140 : vector<8x10xf32>
    %142 = math.exp %141 : vector<8x10xf32>
    %cst_60 = arith.constant dense<0.000000e+00> : vector<8xf32>
    %143 = vector.multi_reduction <add>, %142, %cst_60 [1] : vector<8x10xf32> to vector<8xf32>
    %144 = vector.shape_cast %143 : vector<8xf32> to vector<8x1xf32>
    %145 = math.log %144 : vector<8x1xf32>
    %146 = arith.addf %145, %139 : vector<8x1xf32>
    %147 = vector.extract_strided_slice %116 {offsets = [0, 30], sizes = [8, 10], strides = [1, 1]} : vector<8x100xf32> to vector<8x10xf32>
    %cst_61 = arith.constant dense<0xFF800000> : vector<8xf32>
    %148 = vector.multi_reduction <maximumf>, %147, %cst_61 [1] : vector<8x10xf32> to vector<8xf32>
    %149 = vector.shape_cast %148 : vector<8xf32> to vector<8x1xf32>
    %150 = vector.broadcast %149 : vector<8x1xf32> to vector<8x10xf32>
    %151 = arith.subf %147, %150 : vector<8x10xf32>
    %152 = math.exp %151 : vector<8x10xf32>
    %cst_62 = arith.constant dense<0.000000e+00> : vector<8xf32>
    %153 = vector.multi_reduction <add>, %152, %cst_62 [1] : vector<8x10xf32> to vector<8xf32>
    %154 = vector.shape_cast %153 : vector<8xf32> to vector<8x1xf32>
    %155 = math.log %154 : vector<8x1xf32>
    %156 = arith.addf %155, %149 : vector<8x1xf32>
    %157 = vector.extract_strided_slice %116 {offsets = [0, 40], sizes = [8, 10], strides = [1, 1]} : vector<8x100xf32> to vector<8x10xf32>
    %cst_63 = arith.constant dense<0xFF800000> : vector<8xf32>
    %158 = vector.multi_reduction <maximumf>, %157, %cst_63 [1] : vector<8x10xf32> to vector<8xf32>
    %159 = vector.shape_cast %158 : vector<8xf32> to vector<8x1xf32>
    %160 = vector.broadcast %159 : vector<8x1xf32> to vector<8x10xf32>
    %161 = arith.subf %157, %160 : vector<8x10xf32>
    %162 = math.exp %161 : vector<8x10xf32>
    %cst_64 = arith.constant dense<0.000000e+00> : vector<8xf32>
    %163 = vector.multi_reduction <add>, %162, %cst_64 [1] : vector<8x10xf32> to vector<8xf32>
    %164 = vector.shape_cast %163 : vector<8xf32> to vector<8x1xf32>
    %165 = math.log %164 : vector<8x1xf32>
    %166 = arith.addf %165, %159 : vector<8x1xf32>
    %167 = vector.extract_strided_slice %116 {offsets = [0, 50], sizes = [8, 10], strides = [1, 1]} : vector<8x100xf32> to vector<8x10xf32>
    %cst_65 = arith.constant dense<0xFF800000> : vector<8xf32>
    %168 = vector.multi_reduction <maximumf>, %167, %cst_65 [1] : vector<8x10xf32> to vector<8xf32>
    %169 = vector.shape_cast %168 : vector<8xf32> to vector<8x1xf32>
    %170 = vector.broadcast %169 : vector<8x1xf32> to vector<8x10xf32>
    %171 = arith.subf %167, %170 : vector<8x10xf32>
    %172 = math.exp %171 : vector<8x10xf32>
    %cst_66 = arith.constant dense<0.000000e+00> : vector<8xf32>
    %173 = vector.multi_reduction <add>, %172, %cst_66 [1] : vector<8x10xf32> to vector<8xf32>
    %174 = vector.shape_cast %173 : vector<8xf32> to vector<8x1xf32>
    %175 = math.log %174 : vector<8x1xf32>
    %176 = arith.addf %175, %169 : vector<8x1xf32>
    %177 = vector.extract_strided_slice %116 {offsets = [0, 60], sizes = [8, 10], strides = [1, 1]} : vector<8x100xf32> to vector<8x10xf32>
    %cst_67 = arith.constant dense<0xFF800000> : vector<8xf32>
    %178 = vector.multi_reduction <maximumf>, %177, %cst_67 [1] : vector<8x10xf32> to vector<8xf32>
    %179 = vector.shape_cast %178 : vector<8xf32> to vector<8x1xf32>
    %180 = vector.broadcast %179 : vector<8x1xf32> to vector<8x10xf32>
    %181 = arith.subf %177, %180 : vector<8x10xf32>
    %182 = math.exp %181 : vector<8x10xf32>
    %cst_68 = arith.constant dense<0.000000e+00> : vector<8xf32>
    %183 = vector.multi_reduction <add>, %182, %cst_68 [1] : vector<8x10xf32> to vector<8xf32>
    %184 = vector.shape_cast %183 : vector<8xf32> to vector<8x1xf32>
    %185 = math.log %184 : vector<8x1xf32>
    %186 = arith.addf %185, %179 : vector<8x1xf32>
    %187 = vector.extract_strided_slice %116 {offsets = [0, 70], sizes = [8, 10], strides = [1, 1]} : vector<8x100xf32> to vector<8x10xf32>
    %cst_69 = arith.constant dense<0xFF800000> : vector<8xf32>
    %188 = vector.multi_reduction <maximumf>, %187, %cst_69 [1] : vector<8x10xf32> to vector<8xf32>
    %189 = vector.shape_cast %188 : vector<8xf32> to vector<8x1xf32>
    %190 = vector.broadcast %189 : vector<8x1xf32> to vector<8x10xf32>
    %191 = arith.subf %187, %190 : vector<8x10xf32>
    %192 = math.exp %191 : vector<8x10xf32>
    %cst_70 = arith.constant dense<0.000000e+00> : vector<8xf32>
    %193 = vector.multi_reduction <add>, %192, %cst_70 [1] : vector<8x10xf32> to vector<8xf32>
    %194 = vector.shape_cast %193 : vector<8xf32> to vector<8x1xf32>
    %195 = math.log %194 : vector<8x1xf32>
    %196 = arith.addf %195, %189 : vector<8x1xf32>
    %197 = vector.extract_strided_slice %116 {offsets = [0, 80], sizes = [8, 10], strides = [1, 1]} : vector<8x100xf32> to vector<8x10xf32>
    %cst_71 = arith.constant dense<0xFF800000> : vector<8xf32>
    %198 = vector.multi_reduction <maximumf>, %197, %cst_71 [1] : vector<8x10xf32> to vector<8xf32>
    %199 = vector.shape_cast %198 : vector<8xf32> to vector<8x1xf32>
    %200 = vector.broadcast %199 : vector<8x1xf32> to vector<8x10xf32>
    %201 = arith.subf %197, %200 : vector<8x10xf32>
    %202 = math.exp %201 : vector<8x10xf32>
    %cst_72 = arith.constant dense<0.000000e+00> : vector<8xf32>
    %203 = vector.multi_reduction <add>, %202, %cst_72 [1] : vector<8x10xf32> to vector<8xf32>
    %204 = vector.shape_cast %203 : vector<8xf32> to vector<8x1xf32>
    %205 = math.log %204 : vector<8x1xf32>
    %206 = arith.addf %205, %199 : vector<8x1xf32>
    %207 = vector.extract_strided_slice %116 {offsets = [0, 90], sizes = [8, 10], strides = [1, 1]} : vector<8x100xf32> to vector<8x10xf32>
    %cst_73 = arith.constant dense<0xFF800000> : vector<8xf32>
    %208 = vector.multi_reduction <maximumf>, %207, %cst_73 [1] : vector<8x10xf32> to vector<8xf32>
    %209 = vector.shape_cast %208 : vector<8xf32> to vector<8x1xf32>
    %210 = vector.broadcast %209 : vector<8x1xf32> to vector<8x10xf32>
    %211 = arith.subf %207, %210 : vector<8x10xf32>
    %212 = math.exp %211 : vector<8x10xf32>
    %cst_74 = arith.constant dense<0.000000e+00> : vector<8xf32>
    %213 = vector.multi_reduction <add>, %212, %cst_74 [1] : vector<8x10xf32> to vector<8xf32>
    %214 = vector.shape_cast %213 : vector<8xf32> to vector<8x1xf32>
    %215 = math.log %214 : vector<8x1xf32>
    %216 = arith.addf %215, %209 : vector<8x1xf32>
    %217 = tpu.concatenate %126, %136, %146, %156, %166, %176, %186, %196, %206, %216 in 1 : vector<8x1xf32>, vector<8x1xf32>, vector<8x1xf32>, vector<8x1xf32>, vector<8x1xf32>, vector<8x1xf32>, vector<8x1xf32>, vector<8x1xf32>, vector<8x1xf32>, vector<8x1xf32> -> vector<8x10xf32>
    %cst_75 = arith.constant dense<0xFF800000> : vector<8xf32>
    %218 = vector.multi_reduction <maximumf>, %217, %cst_75 [1] : vector<8x10xf32> to vector<8xf32>
    %219 = vector.shape_cast %218 : vector<8xf32> to vector<8x1xf32>
    %220 = vector.broadcast %219 : vector<8x1xf32> to vector<8x10xf32>
    %221 = arith.subf %217, %220 : vector<8x10xf32>
    %222 = math.exp %221 : vector<8x10xf32>
    %cst_76 = arith.constant dense<0.000000e+00> : vector<8xf32>
    %223 = vector.multi_reduction <add>, %222, %cst_76 [1] : vector<8x10xf32> to vector<8xf32>
    %224 = vector.shape_cast %223 : vector<8xf32> to vector<8x1xf32>
    %225 = vector.broadcast %224 : vector<8x1xf32> to vector<8x10xf32>
    %226 = arith.divf %222, %225 : vector<8x10xf32>
    %cst_77 = arith.constant 0.000000e+00 : f32
    %227 = vector.broadcast %cst_77 : f32 to vector<8x116xf32>
    %228 = tpu.concatenate %110, %226, %227 in 1 : vector<8x2xf32>, vector<8x10xf32>, vector<8x116xf32> -> vector<8x128xf32>
    %c0_78 = arith.constant 0 : index
    %c0_79 = arith.constant 0 : index
    %229 = vector.load %arg16[%c0_78, %c0_79] : memref<8x128xf32, #tpu.memory_space<vmem>>, vector<8x128xf32>
    tpu.vector_store %arg16[%c0_78, %c0_79], %228 {strides = array<i32>} : memref<8x128xf32, #tpu.memory_space<vmem>>, vector<8x128xf32>,
    return
  }
  func.func @transform_0(%arg0: i32) -> (i32, i32) {
    %c0_i32 = arith.constant 0 : i32
    %c0_i32_0 = arith.constant 0 : i32
    return %arg0, %c0_i32 : i32, i32
  }
  func.func @transform_1(%arg0: i32) -> (i32, i32) {
    %c0_i32 = arith.constant 0 : i32
    %c0_i32_0 = arith.constant 0 : i32
    %c0_i32_1 = arith.constant 0 : i32
    return %c0_i32, %c0_i32_0 : i32, i32
  }
  func.func @transform_2(%arg0: i32) -> (i32, i32) {
    %c0_i32 = arith.constant 0 : i32
    %c0_i32_0 = arith.constant 0 : i32
    %c0_i32_1 = arith.constant 0 : i32
    return %c0_i32, %c0_i32_0 : i32, i32
  }
  func.func @transform_3(%arg0: i32) -> (i32, i32, i32) {
    %c0_i32 = arith.constant 0 : i32
    %c0_i32_0 = arith.constant 0 : i32
    %c0_i32_1 = arith.constant 0 : i32
    %c0_i32_2 = arith.constant 0 : i32
    return %c0_i32, %c0_i32_0, %c0_i32_1 : i32, i32, i32
  }
  func.func @transform_4(%arg0: i32) -> (i32, i32) {
    %c0_i32 = arith.constant 0 : i32
    %c0_i32_0 = arith.constant 0 : i32
    %c0_i32_1 = arith.constant 0 : i32
    return %c0_i32, %c0_i32_0 : i32, i32
  }
  func.func @transform_5(%arg0: i32) -> (i32, i32) {
    %c0_i32 = arith.constant 0 : i32
    %c0_i32_0 = arith.constant 0 : i32
    %c0_i32_1 = arith.constant 0 : i32
    return %c0_i32, %c0_i32_0 : i32, i32
  }
  func.func @transform_6(%arg0: i32) -> (i32, i32, i32) {
    %c0_i32 = arith.constant 0 : i32
    %c0_i32_0 = arith.constant 0 : i32
    %c0_i32_1 = arith.constant 0 : i32
    %c0_i32_2 = arith.constant 0 : i32
    return %c0_i32, %c0_i32_0, %c0_i32_1 : i32, i32, i32
  }
  func.func @transform_7(%arg0: i32) -> (i32, i32) {
    %c0_i32 = arith.constant 0 : i32
    %c0_i32_0 = arith.constant 0 : i32
    %c0_i32_1 = arith.constant 0 : i32
    return %c0_i32, %c0_i32_0 : i32, i32
  }
  func.func @transform_8(%arg0: i32) -> (i32, i32) {
    %c0_i32 = arith.constant 0 : i32
    %c0_i32_0 = arith.constant 0 : i32
    %c0_i32_1 = arith.constant 0 : i32
    return %c0_i32, %c0_i32_0 : i32, i32
  }
  func.func @transform_9(%arg0: i32) -> (i32, i32) {
    %c0_i32 = arith.constant 0 : i32
    %c0_i32_0 = arith.constant 0 : i32
    %c0_i32_1 = arith.constant 0 : i32
    return %c0_i32, %c0_i32_0 : i32, i32
  }
  func.func @transform_10(%arg0: i32) -> (i32, i32) {
    %c0_i32 = arith.constant 0 : i32
    %c0_i32_0 = arith.constant 0 : i32
    %c0_i32_1 = arith.constant 0 : i32
    return %c0_i32, %c0_i32_0 : i32, i32
  }
  func.func @transform_11(%arg0: i32) -> (i32, i32) {
    %c0_i32 = arith.constant 0 : i32
    %c0_i32_0 = arith.constant 0 : i32
    %c0_i32_1 = arith.constant 0 : i32
    return %c0_i32, %c0_i32_0 : i32, i32
  }
  func.func @transform_12(%arg0: i32) -> (i32, i32) {
    %c0_i32 = arith.constant 0 : i32
    %c0_i32_0 = arith.constant 0 : i32
    %c0_i32_1 = arith.constant 0 : i32
    return %c0_i32, %c0_i32_0 : i32, i32
  }
  func.func @transform_13(%arg0: i32) -> (i32, i32) {
    %c0_i32 = arith.constant 0 : i32
    %c0_i32_0 = arith.constant 0 : i32
    %c0_i32_1 = arith.constant 0 : i32
    return %c0_i32, %c0_i32_0 : i32, i32
  }
  func.func @transform_14(%arg0: i32) -> (i32, i32) {
    %c0_i32 = arith.constant 0 : i32
    %c0_i32_0 = arith.constant 0 : i32
    %c0_i32_1 = arith.constant 0 : i32
    return %c0_i32, %c0_i32_0 : i32, i32
  }
  func.func @transform_15(%arg0: i32) -> (i32, i32) {
    %c0_i32 = arith.constant 0 : i32
    %c0_i32_0 = arith.constant 0 : i32
    return %arg0, %c0_i32 : i32, i32
  }
}

</mosaic_0001>

<llo_original>
// kernel: tpu_custom_call.1
$region0: #{tpu_custom_call.1}
  #allocation0 [shape = 'u32[]', space=smem, size = 0x4, offset = 0x4, fixed_abs, tag = 'smem constant byte address 0x4 - core index']
  #allocation1 [shape = 'u32[72,128]{1,0:T(1,128)}', space=vmem, size = 0x9000, scoped, tag = 'internal scratch']
  %s0 = inlined_call_operand.vmem [shape: bf16[256,480], index: 0, kind: input, shape index: {}]
  %s1 = inlined_call_operand.vmem [shape: bf16[480,168], index: 1, kind: input, shape index: {}]
  %s2 = inlined_call_operand.vmem [shape: f32[1,168], index: 2, kind: input, shape index: {}]
  %s3 = inlined_call_operand.vmem [shape: bf16[2,168,84], index: 3, kind: input, shape index: {}]
  %s4 = inlined_call_operand.vmem [shape: bf16[420,160], index: 4, kind: input, shape index: {}]
  %s5 = inlined_call_operand.vmem [shape: f32[1,160], index: 5, kind: input, shape index: {}]
  %s6 = inlined_call_operand.vmem [shape: bf16[2,160,80], index: 6, kind: input, shape index: {}]
  %s7 = inlined_call_operand.vmem [shape: bf16[400,200], index: 7, kind: input, shape index: {}]
  %s8 = inlined_call_operand.vmem [shape: f32[1,200], index: 8, kind: input, shape index: {}]
  %s9 = inlined_call_operand.vmem [shape: bf16[200,200], index: 9, kind: input, shape index: {}]
  %s10 = inlined_call_operand.vmem [shape: f32[1,200], index: 10, kind: input, shape index: {}]
  %s11 = inlined_call_operand.vmem [shape: bf16[200,20], index: 11, kind: input, shape index: {}]
  %s12 = inlined_call_operand.vmem [shape: f32[1,20], index: 12, kind: input, shape index: {}]
  %s13 = inlined_call_operand.vmem [shape: bf16[400,100], index: 13, kind: input, shape index: {}]
  %s14 = inlined_call_operand.vmem [shape: f32[1,100], index: 14, kind: input, shape index: {}]
  %s15 = inlined_call_operand.hbm [shape: f32[8,128], index: 15, kind: output, shape index: {}]
  %s16 = sld [smem:[#allocation0]]
  $region70: #{tpu_custom_call.1} parent=0
    _
  %s18 = ssub.s32 1, %s16
  %s19 = scalar_select 0, %s18, %s16
  $region1: #{tpu_custom_call.1} parent=0
    #allocation2 [shape = 'u8[4096]{0}', space=vmem, size = 0x1000, scoped, tag = 'output window, operand 0, single buffered']
    #allocation3 [shape = 's32[1]{0}', space=sflag, size = 0x4, scoped, tag = 'scoped memory for tpu_custom_call.1']
    %20 = vsyncpa [#allocation3], 0
    // Predicated region
    $region2: #{tpu_custom_call.1} parent=1 // pred_check
      _
    $region3: #{tpu_custom_call.1} parent=1 // pred_check_branch
      %22 = sbr.rel (0) target = $region5
    $region4: #{tpu_custom_call.1} parent=1 // pred_region
      _
    $region5: #{tpu_custom_call.1} parent=1 // pred_fallthru
      _
    // Predicated region
    $region6: #{tpu_custom_call.1} parent=1 // pred_check
      _
    $region7: #{tpu_custom_call.1} parent=1 // pred_check_branch
      %24 = sbr.rel (0) target = $region9
    $region8: #{tpu_custom_call.1} parent=1 // pred_region
      _
    $region9: #{tpu_custom_call.1} parent=1 // pred_fallthru
      _
    // Predicated region
    $region10: #{tpu_custom_call.1} parent=1 // pred_check
      _
    $region11: #{tpu_custom_call.1} parent=1 // pred_check_branch
      %26 = sbr.rel (0) target = $region13
    $region12: #{tpu_custom_call.1} parent=1 // pred_region
      _
    $region13: #{tpu_custom_call.1} parent=1 // pred_fallthru
      _
    // Predicated region
    $region14: #{tpu_custom_call.1} parent=1 // pred_check
      _
    $region15: #{tpu_custom_call.1} parent=1 // pred_check_branch
      %28 = sbr.rel (0) target = $region17
    $region16: #{tpu_custom_call.1} parent=1 // pred_region
      _
    $region17: #{tpu_custom_call.1} parent=1 // pred_fallthru
      _
    // Predicated region
    $region18: #{tpu_custom_call.1} parent=1 // pred_check
      _
    $region19: #{tpu_custom_call.1} parent=1 // pred_check_branch
      %30 = sbr.rel (0) target = $region21
    $region20: #{tpu_custom_call.1} parent=1 // pred_region
      _
    $region21: #{tpu_custom_call.1} parent=1 // pred_fallthru
      _
    // Predicated region
    $region22: #{tpu_custom_call.1} parent=1 // pred_check
      _
    $region23: #{tpu_custom_call.1} parent=1 // pred_check_branch
      %32 = sbr.rel (0) target = $region25
    $region24: #{tpu_custom_call.1} parent=1 // pred_region
      _
    $region25: #{tpu_custom_call.1} parent=1 // pred_fallthru
      _
    // Predicated region
    $region26: #{tpu_custom_call.1} parent=1 // pred_check
      _
    $region27: #{tpu_custom_call.1} parent=1 // pred_check_branch
      %34 = sbr.rel (0) target = $region29
    $region28: #{tpu_custom_call.1} parent=1 // pred_region
      _
    $region29: #{tpu_custom_call.1} parent=1 // pred_fallthru
      _
    // Predicated region
    $region30: #{tpu_custom_call.1} parent=1 // pred_check
      _
    $region31: #{tpu_custom_call.1} parent=1 // pred_check_branch
      %36 = sbr.rel (0) target = $region33
    $region32: #{tpu_custom_call.1} parent=1 // pred_region
      _
    $region33: #{tpu_custom_call.1} parent=1 // pred_fallthru
      _
    // Predicated region
    $region34: #{tpu_custom_call.1} parent=1 // pred_check
      _
    $region35: #{tpu_custom_call.1} parent=1 // pred_check_branch
      %38 = sbr.rel (0) target = $region37
    $region36: #{tpu_custom_call.1} parent=1 // pred_region
      _
    $region37: #{tpu_custom_call.1} parent=1 // pred_fallthru
      _
    // Predicated region
    $region38: #{tpu_custom_call.1} parent=1 // pred_check
      _
    $region39: #{tpu_custom_call.1} parent=1 // pred_check_branch
      %40 = sbr.rel (0) target = $region41
    $region40: #{tpu_custom_call.1} parent=1 // pred_region
      _
    $region41: #{tpu_custom_call.1} parent=1 // pred_fallthru
      _
    // Predicated region
    $region42: #{tpu_custom_call.1} parent=1 // pred_check
      _
    $region43: #{tpu_custom_call.1} parent=1 // pred_check_branch
      %42 = sbr.rel (0) target = $region45
    $region44: #{tpu_custom_call.1} parent=1 // pred_region
      _
    $region45: #{tpu_custom_call.1} parent=1 // pred_fallthru
      _
    // Predicated region
    $region46: #{tpu_custom_call.1} parent=1 // pred_check
      _
    $region47: #{tpu_custom_call.1} parent=1 // pred_check_branch
      %44 = sbr.rel (0) target = $region49
    $region48: #{tpu_custom_call.1} parent=1 // pred_region
      _
    $region49: #{tpu_custom_call.1} parent=1 // pred_fallthru
      _
    // Predicated region
    $region50: #{tpu_custom_call.1} parent=1 // pred_check
      _
    $region51: #{tpu_custom_call.1} parent=1 // pred_check_branch
      %46 = sbr.rel (0) target = $region53
    $region52: #{tpu_custom_call.1} parent=1 // pred_region
      _
    $region53: #{tpu_custom_call.1} parent=1 // pred_fallthru
      _
    // Predicated region
    $region54: #{tpu_custom_call.1} parent=1 // pred_check
      _
    $region55: #{tpu_custom_call.1} parent=1 // pred_check_branch
      %48 = sbr.rel (0) target = $region57
    $region56: #{tpu_custom_call.1} parent=1 // pred_region
      _
    $region57: #{tpu_custom_call.1} parent=1 // pred_fallthru
      _
    // Predicated region
    $region58: #{tpu_custom_call.1} parent=1 // pred_check
      _
    $region59: #{tpu_custom_call.1} parent=1 // pred_check_branch
      %50 = sbr.rel (0) target = $region61
    $region60: #{tpu_custom_call.1} parent=1 // pred_region
      _
    $region61: #{tpu_custom_call.1} parent=1 // pred_fallthru
      _
    %v52 = vld [vmem:[%s0] sm:$0xff]
    %v53 = vld [vmem:[%s0 + $0x8] sm:$0xff]
    %v54 = vld [vmem:[%s0 + $0x10] sm:$0xff]
    %v55 = vld [vmem:[%s0 + $0x18] sm:$0xff]
    %v56 = vld [vmem:[%s0 + $0x20] sm:$0xff]
    %v57 = vld [vmem:[%s0 + $0x28] sm:$0xff]
    %v58 = vld [vmem:[%s0 + $0x30] sm:$0xff]
    %v59 = vld [vmem:[%s0 + $0x38] sm:$0xff]
    %v60 = vld [vmem:[%s0 + $0x40] sm:$0xff]
    %v61 = vld [vmem:[%s0 + $0x48] sm:$0xff]
    %v62 = vld [vmem:[%s0 + $0x50] sm:$0xff]
    %v63 = vld [vmem:[%s0 + $0x58] sm:$0xff]
    %v64 = vld [vmem:[%s0 + $0x60] sm:$0xff]
    %v65 = vld [vmem:[%s0 + $0x68] sm:$0xff]
    %v66 = vld [vmem:[%s0 + $0x70] sm:$0xff]
    %v67 = vld [vmem:[%s0 + $0x78] sm:$0xff]
    %v68 = vld [vmem:[%s0 + $0x80] sm:$0xff]
    %v69 = vld [vmem:[%s0 + $0x88] sm:$0xff]
    %v70 = vld [vmem:[%s0 + $0x90] sm:$0xff]
    %v71 = vld [vmem:[%s0 + $0x98] sm:$0xff]
    %v72 = vld [vmem:[%s0 + $0xa0] sm:$0xff]
    %v73 = vld [vmem:[%s0 + $0xa8] sm:$0xff]
    %v74 = vld [vmem:[%s0 + $0xb0] sm:$0xff]
    %v75 = vld [vmem:[%s0 + $0xb8] sm:$0xff]
    %v76 = vld [vmem:[%s0 + $0xc0] sm:$0xff]
    %v77 = vld [vmem:[%s0 + $0xc8] sm:$0xff]
    %v78 = vld [vmem:[%s0 + $0xd0] sm:$0xff]
    %v79 = vld [vmem:[%s0 + $0xd8] sm:$0xff]
    %v80 = vld [vmem:[%s0 + $0xe0] sm:$0xff]
    %v81 = vld [vmem:[%s0 + $0xe8] sm:$0xff]
    %v82 = vld [vmem:[%s0 + $0xf0] sm:$0xff]
    %v83 = vld [vmem:[%s0 + $0xf8] sm:$0xff]
    %v84 = vld [vmem:[%s0 + $0x100] sm:$0xff]
    %v85 = vld [vmem:[%s0 + $0x108] sm:$0xff]
    %v86 = vld [vmem:[%s0 + $0x110] sm:$0xff]
    %v87 = vld [vmem:[%s0 + $0x118] sm:$0xff]
    %v88 = vld [vmem:[%s0 + $0x120] sm:$0xff]
    %v89 = vld [vmem:[%s0 + $0x128] sm:$0xff]
    %v90 = vld [vmem:[%s0 + $0x130] sm:$0xff]
    %v91 = vld [vmem:[%s0 + $0x138] sm:$0xff]
    %v92 = vld [vmem:[%s0 + $0x140] sm:$0xff]
    %v93 = vld [vmem:[%s0 + $0x148] sm:$0xff]
    %v94 = vld [vmem:[%s0 + $0x150] sm:$0xff]
    %v95 = vld [vmem:[%s0 + $0x158] sm:$0xff]
    %v96 = vld [vmem:[%s0 + $0x160] sm:$0xff]
    %v97 = vld [vmem:[%s0 + $0x168] sm:$0xff]
    %v98 = vld [vmem:[%s0 + $0x170] sm:$0xff]
    %v99 = vld [vmem:[%s0 + $0x178] sm:$0xff]
    %v100 = vld [vmem:[%s0 + $0x180] sm:$0xff]
    %v101 = vld [vmem:[%s0 + $0x188] sm:$0xff]
    %v102 = vld [vmem:[%s0 + $0x190] sm:$0xff]
    %v103 = vld [vmem:[%s0 + $0x198] sm:$0xff]
    %v104 = vld [vmem:[%s0 + $0x1a0] sm:$0xff]
    %v105 = vld [vmem:[%s0 + $0x1a8] sm:$0xff]
    %v106 = vld [vmem:[%s0 + $0x1b0] sm:$0xff]
    %v107 = vld [vmem:[%s0 + $0x1b8] sm:$0xff]
    %v108 = vld [vmem:[%s0 + $0x1c0] sm:$0xff]
    %v109 = vld [vmem:[%s0 + $0x1c8] sm:$0xff]
    %v110 = vld [vmem:[%s0 + $0x1d0] sm:$0xff]
    %v111 = vld [vmem:[%s0 + $0x1d8] sm:$0xff]
    %v112 = vld [vmem:[%s0 + $0x1e0] sm:$0xff]
    %v113 = vld [vmem:[%s0 + $0x1e8] sm:$0xff]
    %v114 = vld [vmem:[%s0 + $0x1f0] sm:$0xff]
    %v115 = vld [vmem:[%s0 + $0x1f8] sm:$0xff]
    %v116 = vld [vmem:[%s1] sm:$0xff]
    %v117 = vld [vmem:[%s1 + $0x8] sm:$0xff]
    %v118 = vld [vmem:[%s1 + $0x10] sm:$0xff]
    %v119 = vld [vmem:[%s1 + $0x18] sm:$0xff]
    %v120 = vld [vmem:[%s1 + $0x20] sm:$0xff]
    %v121 = vld [vmem:[%s1 + $0x28] sm:$0xff]
    %v122 = vld [vmem:[%s1 + $0x30] sm:$0xff]
    %v123 = vld [vmem:[%s1 + $0x38] sm:$0xff]
    %v124 = vld [vmem:[%s1 + $0x40] sm:$0xff]
    %v125 = vld [vmem:[%s1 + $0x48] sm:$0xff]
    %v126 = vld [vmem:[%s1 + $0x50] sm:$0xff]
    %v127 = vld [vmem:[%s1 + $0x58] sm:$0xff]
    %v128 = vld [vmem:[%s1 + $0x60] sm:$0xff]
    %v129 = vld [vmem:[%s1 + $0x68] sm:$0xff]
    %v130 = vld [vmem:[%s1 + $0x70] sm:$0xff]
    %v131 = vld [vmem:[%s1 + $0x78] sm:$0xff]
    %v132 = vld [vmem:[%s1 + $0x80] sm:$0xff]
    %v133 = vld [vmem:[%s1 + $0x88] sm:$0xff]
    %v134 = vld [vmem:[%s1 + $0x90] sm:$0xff]
    %v135 = vld [vmem:[%s1 + $0x98] sm:$0xff]
    %v136 = vld [vmem:[%s1 + $0xa0] sm:$0xff]
    %v137 = vld [vmem:[%s1 + $0xa8] sm:$0xff]
    %v138 = vld [vmem:[%s1 + $0xb0] sm:$0xff]
    %v139 = vld [vmem:[%s1 + $0xb8] sm:$0xff]
    %v140 = vld [vmem:[%s1 + $0xc0] sm:$0xff]
    %v141 = vld [vmem:[%s1 + $0xc8] sm:$0xff]
    %v142 = vld [vmem:[%s1 + $0xd0] sm:$0xff]
    %v143 = vld [vmem:[%s1 + $0xd8] sm:$0xff]
    %v144 = vld [vmem:[%s1 + $0xe0] sm:$0xff]
    %v145 = vld [vmem:[%s1 + $0xe8] sm:$0xff]
    %v146 = vld [vmem:[%s1 + $0xf0] sm:$0xff]
    %v147 = vld [vmem:[%s1 + $0xf8] sm:$0xff]
    %v148 = vld [vmem:[%s1 + $0x100] sm:$0xff]
    %v149 = vld [vmem:[%s1 + $0x108] sm:$0xff]
    %v150 = vld [vmem:[%s1 + $0x110] sm:$0xff]
    %v151 = vld [vmem:[%s1 + $0x118] sm:$0xff]
    %v152 = vld [vmem:[%s1 + $0x120] sm:$0xff]
    %v153 = vld [vmem:[%s1 + $0x128] sm:$0xff]
    %v154 = vld [vmem:[%s1 + $0x130] sm:$0xff]
    %v155 = vld [vmem:[%s1 + $0x138] sm:$0xff]
    %v156 = vld [vmem:[%s1 + $0x140] sm:$0xff]
    %v157 = vld [vmem:[%s1 + $0x148] sm:$0xff]
    %v158 = vld [vmem:[%s1 + $0x150] sm:$0xff]
    %v159 = vld [vmem:[%s1 + $0x158] sm:$0xff]
    %v160 = vld [vmem:[%s1 + $0x160] sm:$0xff]
    %v161 = vld [vmem:[%s1 + $0x168] sm:$0xff]
    %v162 = vld [vmem:[%s1 + $0x170] sm:$0xff]
    %v163 = vld [vmem:[%s1 + $0x178] sm:$0xff]
    %v164 = vld [vmem:[%s1 + $0x180] sm:$0xff]
    %v165 = vld [vmem:[%s1 + $0x188] sm:$0xff]
    %v166 = vld [vmem:[%s1 + $0x190] sm:$0xff]
    %v167 = vld [vmem:[%s1 + $0x198] sm:$0xff]
    %v168 = vld [vmem:[%s1 + $0x1a0] sm:$0xff]
    %v169 = vld [vmem:[%s1 + $0x1a8] sm:$0xff]
    %v170 = vld [vmem:[%s1 + $0x1b0] sm:$0xff]
    %v171 = vld [vmem:[%s1 + $0x1b8] sm:$0xff]
    %v172 = vld [vmem:[%s1 + $0x1c0] sm:$0xff]
    %v173 = vld [vmem:[%s1 + $0x1c8] sm:$0xff]
    %v174 = vld [vmem:[%s1 + $0x1d0] sm:$0xff]
    %v175 = vld [vmem:[%s1 + $0x1d8] sm:$0xff]
    %v176 = vld [vmem:[%s2] sm:$0x3]
    %v178 = vperm.slane %v176, 0
    %v179 = vperm.slane %v176, 1
    %v246 = vunpack.c.l.b16 %v52
    %v247 = vunpack.c.h.b16 %v52
    %v248 = vunpack.c.l.b16 %v53
    %v249 = vunpack.c.h.b16 %v53
    %v250 = vunpack.c.l.b16 %v54
    %v251 = vunpack.c.h.b16 %v54
    %v252 = vunpack.c.l.b16 %v55
    %v253 = vunpack.c.h.b16 %v55
    %v254 = vunpack.c.l.b16 %v56
    %v255 = vunpack.c.h.b16 %v56
    %v256 = vunpack.c.l.b16 %v57
    %v257 = vunpack.c.h.b16 %v57
    %v258 = vunpack.c.l.b16 %v58
    %v259 = vunpack.c.h.b16 %v58
    %v260 = vunpack.c.l.b16 %v59
    %v261 = vunpack.c.h.b16 %v59
    %v262 = vunpack.c.l.b16 %v60
    %v263 = vunpack.c.h.b16 %v60
    %v264 = vunpack.c.l.b16 %v61
    %v265 = vunpack.c.h.b16 %v61
    %v266 = vunpack.c.l.b16 %v62
    %v267 = vunpack.c.h.b16 %v62
    %v268 = vunpack.c.l.b16 %v63
    %v269 = vunpack.c.h.b16 %v63
    %v270 = vunpack.c.l.b16 %v64
    %v271 = vunpack.c.h.b16 %v64
    %v272 = vunpack.c.l.b16 %v65
    %v273 = vunpack.c.h.b16 %v65
    %v274 = vunpack.c.l.b16 %v66
    %v275 = vunpack.c.h.b16 %v66
    %v276 = vunpack.c.l.b16 %v67
    %v277 = vunpack.c.h.b16 %v67
    %v278 = vunpack.c.l.b16 %v68
    %v279 = vunpack.c.h.b16 %v68
    %v280 = vunpack.c.l.b16 %v69
    %v281 = vunpack.c.h.b16 %v69
    %v282 = vunpack.c.l.b16 %v70
    %v283 = vunpack.c.h.b16 %v70
    %v284 = vunpack.c.l.b16 %v71
    %v285 = vunpack.c.h.b16 %v71
    %v286 = vunpack.c.l.b16 %v72
    %v287 = vunpack.c.h.b16 %v72
    %v288 = vunpack.c.l.b16 %v73
    %v289 = vunpack.c.h.b16 %v73
    %v290 = vunpack.c.l.b16 %v74
    %v291 = vunpack.c.h.b16 %v74
    %v292 = vunpack.c.l.b16 %v75
    %v293 = vunpack.c.h.b16 %v75
    %v294 = vunpack.c.l.b16 %v76
    %v295 = vunpack.c.h.b16 %v76
    %v296 = vunpack.c.l.b16 %v77
    %v297 = vunpack.c.h.b16 %v77
    %v298 = vunpack.c.l.b16 %v78
    %v299 = vunpack.c.h.b16 %v78
    %v300 = vunpack.c.l.b16 %v79
    %v301 = vunpack.c.h.b16 %v79
    %v302 = vunpack.c.l.b16 %v80
    %v303 = vunpack.c.h.b16 %v80
    %v304 = vunpack.c.l.b16 %v81
    %v305 = vunpack.c.h.b16 %v81
    %v306 = vunpack.c.l.b16 %v82
    %v307 = vunpack.c.h.b16 %v82
    %v308 = vunpack.c.l.b16 %v83
    %v309 = vunpack.c.h.b16 %v83
    %v310 = vunpack.c.l.b16 %v84
    %v311 = vunpack.c.h.b16 %v84
    %v312 = vunpack.c.l.b16 %v85
    %v313 = vunpack.c.h.b16 %v85
    %v314 = vunpack.c.l.b16 %v86
    %v315 = vunpack.c.h.b16 %v86
    %v316 = vunpack.c.l.b16 %v87
    %v317 = vunpack.c.h.b16 %v87
    %v318 = vunpack.c.l.b16 %v88
    %v319 = vunpack.c.h.b16 %v88
    %v320 = vunpack.c.l.b16 %v89
    %v321 = vunpack.c.h.b16 %v89
    %v322 = vunpack.c.l.b16 %v90
    %v323 = vunpack.c.h.b16 %v90
    %v324 = vunpack.c.l.b16 %v91
    %v325 = vunpack.c.h.b16 %v91
    %v326 = vunpack.c.l.b16 %v92
    %v327 = vunpack.c.h.b16 %v92
    %v328 = vunpack.c.l.b16 %v93
    %v329 = vunpack.c.h.b16 %v93
    %v330 = vunpack.c.l.b16 %v94
    %v331 = vunpack.c.h.b16 %v94
    %v332 = vunpack.c.l.b16 %v95
    %v333 = vunpack.c.h.b16 %v95
    %v334 = vunpack.c.l.b16 %v96
    %v335 = vunpack.c.h.b16 %v96
    %v336 = vunpack.c.l.b16 %v97
    %v337 = vunpack.c.h.b16 %v97
    %v338 = vunpack.c.l.b16 %v98
    %v339 = vunpack.c.h.b16 %v98
    %v340 = vunpack.c.l.b16 %v99
    %v341 = vunpack.c.h.b16 %v99
    %v342 = vunpack.c.l.b16 %v100
    %v343 = vunpack.c.h.b16 %v100
    %v344 = vunpack.c.l.b16 %v101
    %v345 = vunpack.c.h.b16 %v101
    %v346 = vunpack.c.l.b16 %v102
    %v347 = vunpack.c.h.b16 %v102
    %v348 = vunpack.c.l.b16 %v103
    %v349 = vunpack.c.h.b16 %v103
    %v350 = vunpack.c.l.b16 %v104
    %v351 = vunpack.c.h.b16 %v104
    %v352 = vunpack.c.l.b16 %v105
    %v353 = vunpack.c.h.b16 %v105
    %v354 = vunpack.c.l.b16 %v106
    %v355 = vunpack.c.h.b16 %v106
    %v356 = vunpack.c.l.b16 %v107
    %v357 = vunpack.c.h.b16 %v107
    %v358 = vunpack.c.l.b16 %v108
    %v359 = vunpack.c.h.b16 %v108
    %v360 = vunpack.c.l.b16 %v109
    %v361 = vunpack.c.h.b16 %v109
    %v362 = vunpack.c.l.b16 %v110
    %v363 = vunpack.c.h.b16 %v110
    %v364 = vunpack.c.l.b16 %v111
    %v365 = vunpack.c.h.b16 %v111
    %v366 = vunpack.c.l.b16 %v112
    %v367 = vunpack.c.h.b16 %v112
    %v368 = vunpack.c.l.b16 %v113
    %v369 = vunpack.c.h.b16 %v113
    %v370 = vunpack.c.l.b16 %v114
    %v371 = vunpack.c.h.b16 %v114
    %v372 = vunpack.c.l.b16 %v115
    %v373 = vunpack.c.h.b16 %v115
    %v374 = vpack.c.b16 %v250, %v246
    %v375 = vpack.c.b16 %v251, %v247
    %v376 = vpack.c.b16 %v252, %v248
    %v377 = vpack.c.b16 %v253, %v249
    %v378 = vpack.c.b16 %v258, %v254
    %v379 = vpack.c.b16 %v259, %v255
    %v380 = vpack.c.b16 %v260, %v256
    %v381 = vpack.c.b16 %v261, %v257
    %v382 = vpack.c.b16 %v266, %v262
    %v383 = vpack.c.b16 %v267, %v263
    %v384 = vpack.c.b16 %v268, %v264
    %v385 = vpack.c.b16 %v269, %v265
    %v386 = vpack.c.b16 %v274, %v270
    %v387 = vpack.c.b16 %v275, %v271
    %v388 = vpack.c.b16 %v276, %v272
    %v389 = vpack.c.b16 %v277, %v273
    %v390 = vpack.c.b16 %v282, %v278
    %v391 = vpack.c.b16 %v283, %v279
    %v392 = vpack.c.b16 %v284, %v280
    %v393 = vpack.c.b16 %v285, %v281
    %v394 = vpack.c.b16 %v290, %v286
    %v395 = vpack.c.b16 %v291, %v287
    %v396 = vpack.c.b16 %v292, %v288
    %v397 = vpack.c.b16 %v293, %v289
    %v398 = vpack.c.b16 %v298, %v294
    %v399 = vpack.c.b16 %v299, %v295
    %v400 = vpack.c.b16 %v300, %v296
    %v401 = vpack.c.b16 %v301, %v297
    %v402 = vpack.c.b16 %v306, %v302
    %v403 = vpack.c.b16 %v307, %v303
    %v404 = vpack.c.b16 %v308, %v304
    %v405 = vpack.c.b16 %v309, %v305
    %v406 = vpack.c.b16 %v314, %v310
    %v407 = vpack.c.b16 %v315, %v311
    %v408 = vpack.c.b16 %v316, %v312
    %v409 = vpack.c.b16 %v317, %v313
    %v410 = vpack.c.b16 %v322, %v318
    %v411 = vpack.c.b16 %v323, %v319
    %v412 = vpack.c.b16 %v324, %v320
    %v413 = vpack.c.b16 %v325, %v321
    %v414 = vpack.c.b16 %v330, %v326
    %v415 = vpack.c.b16 %v331, %v327
    %v416 = vpack.c.b16 %v332, %v328
    %v417 = vpack.c.b16 %v333, %v329
    %v418 = vpack.c.b16 %v338, %v334
    %v419 = vpack.c.b16 %v339, %v335
    %v420 = vpack.c.b16 %v340, %v336
    %v421 = vpack.c.b16 %v341, %v337
    %v422 = vpack.c.b16 %v346, %v342
    %v423 = vpack.c.b16 %v347, %v343
    %v424 = vpack.c.b16 %v348, %v344
    %v425 = vpack.c.b16 %v349, %v345
    %v426 = vpack.c.b16 %v354, %v350
    %v427 = vpack.c.b16 %v355, %v351
    %v428 = vpack.c.b16 %v356, %v352
    %v429 = vpack.c.b16 %v357, %v353
    %v430 = vpack.c.b16 %v362, %v358
    %v431 = vpack.c.b16 %v363, %v359
    %v432 = vpack.c.b16 %v364, %v360
    %v433 = vpack.c.b16 %v365, %v361
    %v434 = vpack.c.b16 %v370, %v366
    %v435 = vpack.c.b16 %v371, %v367
    %v436 = vpack.c.b16 %v372, %v368
    %v437 = vpack.c.b16 %v373, %v369
    %v546 = vunpack.c.l.b16 %v116
    %v547 = vunpack.c.h.b16 %v116
    %v548 = vunpack.c.l.b16 %v117
    %v549 = vunpack.c.h.b16 %v117
    %v550 = vunpack.c.l.b16 %v118
    %v551 = vunpack.c.h.b16 %v118
    %v552 = vunpack.c.l.b16 %v119
    %v553 = vunpack.c.h.b16 %v119
    %v554 = vunpack.c.l.b16 %v120
    %v555 = vunpack.c.h.b16 %v120
    %v556 = vunpack.c.l.b16 %v121
    %v557 = vunpack.c.h.b16 %v121
    %v558 = vunpack.c.l.b16 %v122
    %v559 = vunpack.c.h.b16 %v122
    %v560 = vunpack.c.l.b16 %v123
    %v561 = vunpack.c.h.b16 %v123
    %v562 = vunpack.c.l.b16 %v124
    %v563 = vunpack.c.h.b16 %v124
    %v564 = vunpack.c.l.b16 %v125
    %v565 = vunpack.c.h.b16 %v125
    %v566 = vunpack.c.l.b16 %v126
    %v567 = vunpack.c.h.b16 %v126
    %v568 = vunpack.c.l.b16 %v127
    %v569 = vunpack.c.h.b16 %v127
    %v570 = vunpack.c.l.b16 %v128
    %v571 = vunpack.c.h.b16 %v128
    %v572 = vunpack.c.l.b16 %v129
    %v573 = vunpack.c.h.b16 %v129
    %v574 = vunpack.c.l.b16 %v130
    %v575 = vunpack.c.h.b16 %v130
    %v576 = vunpack.c.l.b16 %v131
    %v577 = vunpack.c.h.b16 %v131
    %v578 = vunpack.c.l.b16 %v132
    %v579 = vunpack.c.h.b16 %v132
    %v580 = vunpack.c.l.b16 %v133
    %v581 = vunpack.c.h.b16 %v133
    %v582 = vunpack.c.l.b16 %v134
    %v583 = vunpack.c.h.b16 %v134
    %v584 = vunpack.c.l.b16 %v135
    %v585 = vunpack.c.h.b16 %v135
    %v586 = vunpack.c.l.b16 %v136
    %v587 = vunpack.c.h.b16 %v136
    %v588 = vunpack.c.l.b16 %v137
    %v589 = vunpack.c.h.b16 %v137
    %v590 = vunpack.c.l.b16 %v138
    %v591 = vunpack.c.h.b16 %v138
    %v592 = vunpack.c.l.b16 %v139
    %v593 = vunpack.c.h.b16 %v139
    %v594 = vunpack.c.l.b16 %v140
    %v595 = vunpack.c.h.b16 %v140
    %v596 = vunpack.c.l.b16 %v141
    %v597 = vunpack.c.h.b16 %v141
    %v598 = vunpack.c.l.b16 %v142
    %v599 = vunpack.c.h.b16 %v142
    %v600 = vunpack.c.l.b16 %v143
    %v601 = vunpack.c.h.b16 %v143
    %v602 = vunpack.c.l.b16 %v144
    %v603 = vunpack.c.h.b16 %v144
    %v604 = vunpack.c.l.b16 %v145
    %v605 = vunpack.c.h.b16 %v145
    %v606 = vunpack.c.l.b16 %v146
    %v607 = vunpack.c.h.b16 %v146
    %v608 = vunpack.c.l.b16 %v147
    %v609 = vunpack.c.h.b16 %v147
    %v610 = vunpack.c.l.b16 %v148
    %v611 = vunpack.c.h.b16 %v148
    %v612 = vunpack.c.l.b16 %v149
    %v613 = vunpack.c.h.b16 %v149
    %v614 = vunpack.c.l.b16 %v150
    %v615 = vunpack.c.h.b16 %v150
    %v616 = vunpack.c.l.b16 %v151
    %v617 = vunpack.c.h.b16 %v151
    %v618 = vunpack.c.l.b16 %v152
    %v619 = vunpack.c.h.b16 %v152
    %v620 = vunpack.c.l.b16 %v153
    %v621 = vunpack.c.h.b16 %v153
    %v622 = vunpack.c.l.b16 %v154
    %v623 = vunpack.c.h.b16 %v154
    %v624 = vunpack.c.l.b16 %v155
    %v625 = vunpack.c.h.b16 %v155
    %v626 = vunpack.c.l.b16 %v156
    %v627 = vunpack.c.h.b16 %v156
    %v628 = vunpack.c.l.b16 %v157
    %v629 = vunpack.c.h.b16 %v157
    %v630 = vunpack.c.l.b16 %v158
    %v631 = vunpack.c.h.b16 %v158
    %v632 = vunpack.c.l.b16 %v159
    %v633 = vunpack.c.h.b16 %v159
    %v634 = vunpack.c.l.b16 %v160
    %v635 = vunpack.c.h.b16 %v160
    %v636 = vunpack.c.l.b16 %v161
    %v637 = vunpack.c.h.b16 %v161
    %v638 = vunpack.c.l.b16 %v162
    %v639 = vunpack.c.h.b16 %v162
    %v640 = vunpack.c.l.b16 %v163
    %v641 = vunpack.c.h.b16 %v163
    %v642 = vunpack.c.l.b16 %v164
    %v643 = vunpack.c.h.b16 %v164
    %v644 = vunpack.c.l.b16 %v165
    %v645 = vunpack.c.h.b16 %v165
    %v646 = vunpack.c.l.b16 %v166
    %v647 = vunpack.c.h.b16 %v166
    %v648 = vunpack.c.l.b16 %v167
    %v649 = vunpack.c.h.b16 %v167
    %v650 = vunpack.c.l.b16 %v168
    %v651 = vunpack.c.h.b16 %v168
    %v652 = vunpack.c.l.b16 %v169
    %v653 = vunpack.c.h.b16 %v169
    %v654 = vunpack.c.l.b16 %v170
    %v655 = vunpack.c.h.b16 %v170
    %v656 = vunpack.c.l.b16 %v171
    %v657 = vunpack.c.h.b16 %v171
    %v658 = vunpack.c.l.b16 %v172
    %v659 = vunpack.c.h.b16 %v172
    %v660 = vunpack.c.l.b16 %v173
    %v661 = vunpack.c.h.b16 %v173
    %v662 = vunpack.c.l.b16 %v174
    %v663 = vunpack.c.h.b16 %v174
    %v664 = vunpack.c.l.b16 %v175
    %v665 = vunpack.c.h.b16 %v175
    %v666 = vpack.c.b16 %v548, %v546
    %v667 = vpack.c.b16 %v549, %v547
    %v668 = vpack.c.b16 %v552, %v550
    %v669 = vpack.c.b16 %v553, %v551
    %v670 = vpack.c.b16 %v556, %v554
    %v671 = vpack.c.b16 %v557, %v555
    %v672 = vpack.c.b16 %v560, %v558
    %v673 = vpack.c.b16 %v561, %v559
    %v674 = vpack.c.b16 %v564, %v562
    %v675 = vpack.c.b16 %v565, %v563
    %v676 = vpack.c.b16 %v568, %v566
    %v677 = vpack.c.b16 %v569, %v567
    %v678 = vpack.c.b16 %v572, %v570
    %v679 = vpack.c.b16 %v573, %v571
    %v680 = vpack.c.b16 %v576, %v574
    %v681 = vpack.c.b16 %v577, %v575
    %v682 = vpack.c.b16 %v580, %v578
    %v683 = vpack.c.b16 %v581, %v579
    %v684 = vpack.c.b16 %v584, %v582
    %v685 = vpack.c.b16 %v585, %v583
    %v686 = vpack.c.b16 %v588, %v586
    %v687 = vpack.c.b16 %v589, %v587
    %v688 = vpack.c.b16 %v592, %v590
    %v689 = vpack.c.b16 %v593, %v591
    %v690 = vpack.c.b16 %v596, %v594
    %v691 = vpack.c.b16 %v597, %v595
    %v692 = vpack.c.b16 %v600, %v598
    %v693 = vpack.c.b16 %v601, %v599
    %v694 = vpack.c.b16 %v604, %v602
    %v695 = vpack.c.b16 %v605, %v603
    %v696 = vpack.c.b16 %v608, %v606
    %v697 = vpack.c.b16 %v609, %v607
    %v698 = vpack.c.b16 %v612, %v610
    %v699 = vpack.c.b16 %v613, %v611
    %v700 = vpack.c.b16 %v616, %v614
    %v701 = vpack.c.b16 %v617, %v615
    %v702 = vpack.c.b16 %v620, %v618
    %v703 = vpack.c.b16 %v621, %v619
    %v704 = vpack.c.b16 %v624, %v622
    %v705 = vpack.c.b16 %v625, %v623
    %v706 = vpack.c.b16 %v628, %v626
    %v707 = vpack.c.b16 %v629, %v627
    %v708 = vpack.c.b16 %v632, %v630
    %v709 = vpack.c.b16 %v633, %v631
    %v710 = vpack.c.b16 %v636, %v634
    %v711 = vpack.c.b16 %v637, %v635
    %v712 = vpack.c.b16 %v640, %v638
    %v713 = vpack.c.b16 %v641, %v639
    %v714 = vpack.c.b16 %v644, %v642
    %v715 = vpack.c.b16 %v645, %v643
    %v716 = vpack.c.b16 %v648, %v646
    %v717 = vpack.c.b16 %v649, %v647
    %v718 = vpack.c.b16 %v652, %v650
    %v719 = vpack.c.b16 %v653, %v651
    %v720 = vpack.c.b16 %v656, %v654
    %v721 = vpack.c.b16 %v657, %v655
    %v722 = vpack.c.b16 %v660, %v658
    %v723 = vpack.c.b16 %v661, %v659
    %v724 = vpack.c.b16 %v664, %v662
    %v725 = vpack.c.b16 %v665, %v663
    %vm786 = vcmask 785408
    %v788 = vsel %vm786, %v377, 0
    %v791 = vsel %vm786, %v381, 0
    %v794 = vsel %vm786, %v385, 0
    %v797 = vsel %vm786, %v389, 0
    %v800 = vsel %vm786, %v393, 0
    %v803 = vsel %vm786, %v397, 0
    %v806 = vsel %vm786, %v401, 0
    %v809 = vsel %vm786, %v405, 0
    %v812 = vsel %vm786, %v409, 0
    %v815 = vsel %vm786, %v413, 0
    %v818 = vsel %vm786, %v417, 0
    %v821 = vsel %vm786, %v421, 0
    %v824 = vsel %vm786, %v425, 0
    %v827 = vsel %vm786, %v429, 0
    %v830 = vsel %vm786, %v433, 0
    %v833 = vsel %vm786, %v437, 0
    %835 = vmatpush.bf16.msra.mxu0 %v680
    %836 = vmatpush.bf16.msra.mxu0 %v678
    %837 = vmatpush.bf16.msra.mxu0 %v676
    %838 = vmatpush.bf16.msra.mxu0 %v674
    %839 = vmatpush.bf16.msra.mxu0 %v672
    %840 = vmatpush.bf16.msra.mxu0 %v670
    %841 = vmatpush.bf16.msra.mxu0 %v668
    %842 = vmatpush.bf16.msra.mxu0 %v666
    %843 = vmatmul.bf16.gmra.mxu0 %v374
    %v844 = vpop.f32.mrf.mxu0
    %v845 = vadd.f32 %v178, %v844
    %v846 = vpop.f32.mrf.mxu0
    %v847 = vadd.f32 %v178, %v846
    %848 = vmatmul.bf16.gmra.mxu0 %v378
    %v849 = vpop.f32.mrf.mxu0
    %v850 = vadd.f32 %v178, %v849
    %v851 = vpop.f32.mrf.mxu0
    %v852 = vadd.f32 %v178, %v851
    %853 = vmatmul.bf16.gmra.mxu0 %v382
    %v854 = vpop.f32.mrf.mxu0
    %v855 = vadd.f32 %v178, %v854
    %v856 = vpop.f32.mrf.mxu0
    %v857 = vadd.f32 %v178, %v856
    %858 = vmatmul.bf16.gmra.mxu0 %v386
    %v859 = vpop.f32.mrf.mxu0
    %v860 = vadd.f32 %v178, %v859
    %v861 = vpop.f32.mrf.mxu0
    %v862 = vadd.f32 %v178, %v861
    %863 = vmatmul.bf16.gmra.mxu0 %v390
    %v864 = vpop.f32.mrf.mxu0
    %v865 = vadd.f32 %v178, %v864
    %v866 = vpop.f32.mrf.mxu0
    %v867 = vadd.f32 %v178, %v866
    %868 = vmatmul.bf16.gmra.mxu0 %v394
    %v869 = vpop.f32.mrf.mxu0
    %v870 = vadd.f32 %v178, %v869
    %v871 = vpop.f32.mrf.mxu0
    %v872 = vadd.f32 %v178, %v871
    %873 = vmatmul.bf16.gmra.mxu0 %v398
    %v874 = vpop.f32.mrf.mxu0
    %v875 = vadd.f32 %v178, %v874
    %v876 = vpop.f32.mrf.mxu0
    %v877 = vadd.f32 %v178, %v876
    %878 = vmatmul.bf16.gmra.mxu0 %v402
    %v879 = vpop.f32.mrf.mxu0
    %v880 = vadd.f32 %v178, %v879
    %v881 = vpop.f32.mrf.mxu0
    %v882 = vadd.f32 %v178, %v881
    %883 = vmatmul.bf16.gmra.mxu0 %v406
    %v884 = vpop.f32.mrf.mxu0
    %v885 = vadd.f32 %v178, %v884
    %v886 = vpop.f32.mrf.mxu0
    %v887 = vadd.f32 %v178, %v886
    %888 = vmatmul.bf16.gmra.mxu0 %v410
    %v889 = vpop.f32.mrf.mxu0
    %v890 = vadd.f32 %v178, %v889
    %v891 = vpop.f32.mrf.mxu0
    %v892 = vadd.f32 %v178, %v891
    %893 = vmatmul.bf16.gmra.mxu0 %v414
    %v894 = vpop.f32.mrf.mxu0
    %v895 = vadd.f32 %v178, %v894
    %v896 = vpop.f32.mrf.mxu0
    %v897 = vadd.f32 %v178, %v896
    %898 = vmatmul.bf16.gmra.mxu0 %v418
    %v899 = vpop.f32.mrf.mxu0
    %v900 = vadd.f32 %v178, %v899
    %v901 = vpop.f32.mrf.mxu0
    %v902 = vadd.f32 %v178, %v901
    %903 = vmatmul.bf16.gmra.mxu0 %v422
    %v904 = vpop.f32.mrf.mxu0
    %v905 = vadd.f32 %v178, %v904
    %v906 = vpop.f32.mrf.mxu0
    %v907 = vadd.f32 %v178, %v906
    %908 = vmatmul.bf16.gmra.mxu0 %v426
    %v909 = vpop.f32.mrf.mxu0
    %v910 = vadd.f32 %v178, %v909
    %v911 = vpop.f32.mrf.mxu0
    %v912 = vadd.f32 %v178, %v911
    %913 = vmatmul.bf16.gmra.mxu0 %v430
    %v914 = vpop.f32.mrf.mxu0
    %v915 = vadd.f32 %v178, %v914
    %v916 = vpop.f32.mrf.mxu0
    %v917 = vadd.f32 %v178, %v916
    %918 = vmatmul.bf16.gmra.mxu0 %v434
    %v919 = vpop.f32.mrf.mxu0
    %v920 = vadd.f32 %v178, %v919
    %v921 = vpop.f32.mrf.mxu0
    %v922 = vadd.f32 %v178, %v921
    %923 = vdwg.mxu0
    %924 = vmatpush.bf16.msra.mxu0 %v696
    %925 = vmatpush.bf16.msra.mxu0 %v694
    %926 = vmatpush.bf16.msra.mxu0 %v692
    %927 = vmatpush.bf16.msra.mxu0 %v690
    %928 = vmatpush.bf16.msra.mxu0 %v688
    %929 = vmatpush.bf16.msra.mxu0 %v686
    %930 = vmatpush.bf16.msra.mxu0 %v684
    %931 = vmatpush.bf16.msra.mxu0 %v682
    %932 = vmatmul.bf16.gmra.mxu0 %v375
    %v933 = vpop.f32.mrf.mxu0
    %v934 = vadd.f32 %v845, %v933
    %v935 = vpop.f32.mrf.mxu0
    %v936 = vadd.f32 %v847, %v935
    %937 = vmatmul.bf16.gmra.mxu0 %v379
    %v938 = vpop.f32.mrf.mxu0
    %v939 = vadd.f32 %v850, %v938
    %v940 = vpop.f32.mrf.mxu0
    %v941 = vadd.f32 %v852, %v940
    %942 = vmatmul.bf16.gmra.mxu0 %v383
    %v943 = vpop.f32.mrf.mxu0
    %v944 = vadd.f32 %v855, %v943
    %v945 = vpop.f32.mrf.mxu0
    %v946 = vadd.f32 %v857, %v945
    %947 = vmatmul.bf16.gmra.mxu0 %v387
    %v948 = vpop.f32.mrf.mxu0
    %v949 = vadd.f32 %v860, %v948
    %v950 = vpop.f32.mrf.mxu0
    %v951 = vadd.f32 %v862, %v950
    %952 = vmatmul.bf16.gmra.mxu0 %v391
    %v953 = vpop.f32.mrf.mxu0
    %v954 = vadd.f32 %v865, %v953
    %v955 = vpop.f32.mrf.mxu0
    %v956 = vadd.f32 %v867, %v955
    %957 = vmatmul.bf16.gmra.mxu0 %v395
    %v958 = vpop.f32.mrf.mxu0
    %v959 = vadd.f32 %v870, %v958
    %v960 = vpop.f32.mrf.mxu0
    %v961 = vadd.f32 %v872, %v960
    %962 = vmatmul.bf16.gmra.mxu0 %v399
    %v963 = vpop.f32.mrf.mxu0
    %v964 = vadd.f32 %v875, %v963
    %v965 = vpop.f32.mrf.mxu0
    %v966 = vadd.f32 %v877, %v965
    %967 = vmatmul.bf16.gmra.mxu0 %v403
    %v968 = vpop.f32.mrf.mxu0
    %v969 = vadd.f32 %v880, %v968
    %v970 = vpop.f32.mrf.mxu0
    %v971 = vadd.f32 %v882, %v970
    %972 = vmatmul.bf16.gmra.mxu0 %v407
    %v973 = vpop.f32.mrf.mxu0
    %v974 = vadd.f32 %v885, %v973
    %v975 = vpop.f32.mrf.mxu0
    %v976 = vadd.f32 %v887, %v975
    %977 = vmatmul.bf16.gmra.mxu0 %v411
    %v978 = vpop.f32.mrf.mxu0
    %v979 = vadd.f32 %v890, %v978
    %v980 = vpop.f32.mrf.mxu0
    %v981 = vadd.f32 %v892, %v980
    %982 = vmatmul.bf16.gmra.mxu0 %v415
    %v983 = vpop.f32.mrf.mxu0
    %v984 = vadd.f32 %v895, %v983
    %v985 = vpop.f32.mrf.mxu0
    %v986 = vadd.f32 %v897, %v985
    %987 = vmatmul.bf16.gmra.mxu0 %v419
    %v988 = vpop.f32.mrf.mxu0
    %v989 = vadd.f32 %v900, %v988
    %v990 = vpop.f32.mrf.mxu0
    %v991 = vadd.f32 %v902, %v990
    %992 = vmatmul.bf16.gmra.mxu0 %v423
    %v993 = vpop.f32.mrf.mxu0
    %v994 = vadd.f32 %v905, %v993
    %v995 = vpop.f32.mrf.mxu0
    %v996 = vadd.f32 %v907, %v995
    %997 = vmatmul.bf16.gmra.mxu0 %v427
    %v998 = vpop.f32.mrf.mxu0
    %v999 = vadd.f32 %v910, %v998
    %v1000 = vpop.f32.mrf.mxu0
    %v1001 = vadd.f32 %v912, %v1000
    %1002 = vmatmul.bf16.gmra.mxu0 %v431
    %v1003 = vpop.f32.mrf.mxu0
    %v1004 = vadd.f32 %v915, %v1003
    %v1005 = vpop.f32.mrf.mxu0
    %v1006 = vadd.f32 %v917, %v1005
    %1007 = vmatmul.bf16.gmra.mxu0 %v435
    %v1008 = vpop.f32.mrf.mxu0
    %v1009 = vadd.f32 %v920, %v1008
    %v1010 = vpop.f32.mrf.mxu0
    %v1011 = vadd.f32 %v922, %v1010
    %1012 = vdwg.mxu0
    %1013 = vmatpush.bf16.msra.mxu0 %v712
    %1014 = vmatpush.bf16.msra.mxu0 %v710
    %1015 = vmatpush.bf16.msra.mxu0 %v708
    %1016 = vmatpush.bf16.msra.mxu0 %v706
    %1017 = vmatpush.bf16.msra.mxu0 %v704
    %1018 = vmatpush.bf16.msra.mxu0 %v702
    %1019 = vmatpush.bf16.msra.mxu0 %v700
    %1020 = vmatpush.bf16.msra.mxu0 %v698
    %1021 = vmatmul.bf16.gmra.mxu0 %v376
    %v1022 = vpop.f32.mrf.mxu0
    %v1023 = vadd.f32 %v934, %v1022
    %v1024 = vpop.f32.mrf.mxu0
    %v1025 = vadd.f32 %v936, %v1024
    %1026 = vmatmul.bf16.gmra.mxu0 %v380
    %v1027 = vpop.f32.mrf.mxu0
    %v1028 = vadd.f32 %v939, %v1027
    %v1029 = vpop.f32.mrf.mxu0
    %v1030 = vadd.f32 %v941, %v1029
    %1031 = vmatmul.bf16.gmra.mxu0 %v384
    %v1032 = vpop.f32.mrf.mxu0
    %v1033 = vadd.f32 %v944, %v1032
    %v1034 = vpop.f32.mrf.mxu0
    %v1035 = vadd.f32 %v946, %v1034
    %1036 = vmatmul.bf16.gmra.mxu0 %v388
    %v1037 = vpop.f32.mrf.mxu0
    %v1038 = vadd.f32 %v949, %v1037
    %v1039 = vpop.f32.mrf.mxu0
    %v1040 = vadd.f32 %v951, %v1039
    %1041 = vmatmul.bf16.gmra.mxu0 %v392
    %v1042 = vpop.f32.mrf.mxu0
    %v1043 = vadd.f32 %v954, %v1042
    %v1044 = vpop.f32.mrf.mxu0
    %v1045 = vadd.f32 %v956, %v1044
    %1046 = vmatmul.bf16.gmra.mxu0 %v396
    %v1047 = vpop.f32.mrf.mxu0
    %v1048 = vadd.f32 %v959, %v1047
    %v1049 = vpop.f32.mrf.mxu0
    %v1050 = vadd.f32 %v961, %v1049
    %1051 = vmatmul.bf16.gmra.mxu0 %v400
    %v1052 = vpop.f32.mrf.mxu0
    %v1053 = vadd.f32 %v964, %v1052
    %v1054 = vpop.f32.mrf.mxu0
    %v1055 = vadd.f32 %v966, %v1054
    %1056 = vmatmul.bf16.gmra.mxu0 %v404
    %v1057 = vpop.f32.mrf.mxu0
    %v1058 = vadd.f32 %v969, %v1057
    %v1059 = vpop.f32.mrf.mxu0
    %v1060 = vadd.f32 %v971, %v1059
    %1061 = vmatmul.bf16.gmra.mxu0 %v408
    %v1062 = vpop.f32.mrf.mxu0
    %v1063 = vadd.f32 %v974, %v1062
    %v1064 = vpop.f32.mrf.mxu0
    %v1065 = vadd.f32 %v976, %v1064
    %1066 = vmatmul.bf16.gmra.mxu0 %v412
    %v1067 = vpop.f32.mrf.mxu0
    %v1068 = vadd.f32 %v979, %v1067
    %v1069 = vpop.f32.mrf.mxu0
    %v1070 = vadd.f32 %v981, %v1069
    %1071 = vmatmul.bf16.gmra.mxu0 %v416
    %v1072 = vpop.f32.mrf.mxu0
    %v1073 = vadd.f32 %v984, %v1072
    %v1074 = vpop.f32.mrf.mxu0
    %v1075 = vadd.f32 %v986, %v1074
    %1076 = vmatmul.bf16.gmra.mxu0 %v420
    %v1077 = vpop.f32.mrf.mxu0
    %v1078 = vadd.f32 %v989, %v1077
    %v1079 = vpop.f32.mrf.mxu0
    %v1080 = vadd.f32 %v991, %v1079
    %1081 = vmatmul.bf16.gmra.mxu0 %v424
    %v1082 = vpop.f32.mrf.mxu0
    %v1083 = vadd.f32 %v994, %v1082
    %v1084 = vpop.f32.mrf.mxu0
    %v1085 = vadd.f32 %v996, %v1084
    %1086 = vmatmul.bf16.gmra.mxu0 %v428
    %v1087 = vpop.f32.mrf.mxu0
    %v1088 = vadd.f32 %v999, %v1087
    %v1089 = vpop.f32.mrf.mxu0
    %v1090 = vadd.f32 %v1001, %v1089
    %1091 = vmatmul.bf16.gmra.mxu0 %v432
    %v1092 = vpop.f32.mrf.mxu0
    %v1093 = vadd.f32 %v1004, %v1092
    %v1094 = vpop.f32.mrf.mxu0
    %v1095 = vadd.f32 %v1006, %v1094
    %1096 = vmatmul.bf16.gmra.mxu0 %v436
    %v1097 = vpop.f32.mrf.mxu0
    %v1098 = vadd.f32 %v1009, %v1097
    %v1099 = vpop.f32.mrf.mxu0
    %v1100 = vadd.f32 %v1011, %v1099
    %1101 = vdwg.mxu0
    %1102 = vmatpush.bf16.msra.mxu0 0
    %1103 = vmatpush.bf16.msra.mxu0 0
    %1104 = vmatpush.bf16.msra.mxu0 %v724
    %1105 = vmatpush.bf16.msra.mxu0 %v722
    %1106 = vmatpush.bf16.msra.mxu0 %v720
    %1107 = vmatpush.bf16.msra.mxu0 %v718
    %1108 = vmatpush.bf16.msra.mxu0 %v716
    %1109 = vmatpush.bf16.msra.mxu0 %v714
    %1110 = vmatmul.bf16.gmra.mxu0 %v788
    %v1111 = vpop.f32.mrf.mxu0
    %v1112 = vadd.f32 %v1023, %v1111
    %v1113 = vpop.f32.mrf.mxu0
    %v1114 = vadd.f32 %v1025, %v1113
    %1115 = vmatmul.bf16.gmra.mxu0 %v791
    %v1116 = vpop.f32.mrf.mxu0
    %v1117 = vadd.f32 %v1028, %v1116
    %v1118 = vpop.f32.mrf.mxu0
    %v1119 = vadd.f32 %v1030, %v1118
    %1120 = vmatmul.bf16.gmra.mxu0 %v794
    %v1121 = vpop.f32.mrf.mxu0
    %v1122 = vadd.f32 %v1033, %v1121
    %v1123 = vpop.f32.mrf.mxu0
    %v1124 = vadd.f32 %v1035, %v1123
    %1125 = vmatmul.bf16.gmra.mxu0 %v797
    %v1126 = vpop.f32.mrf.mxu0
    %v1127 = vadd.f32 %v1038, %v1126
    %v1128 = vpop.f32.mrf.mxu0
    %v1129 = vadd.f32 %v1040, %v1128
    %1130 = vmatmul.bf16.gmra.mxu0 %v800
    %v1131 = vpop.f32.mrf.mxu0
    %v1132 = vadd.f32 %v1043, %v1131
    %v1133 = vpop.f32.mrf.mxu0
    %v1134 = vadd.f32 %v1045, %v1133
    %1135 = vmatmul.bf16.gmra.mxu0 %v803
    %v1136 = vpop.f32.mrf.mxu0
    %v1137 = vadd.f32 %v1048, %v1136
    %v1138 = vpop.f32.mrf.mxu0
    %v1139 = vadd.f32 %v1050, %v1138
    %1140 = vmatmul.bf16.gmra.mxu0 %v806
    %v1141 = vpop.f32.mrf.mxu0
    %v1142 = vadd.f32 %v1053, %v1141
    %v1143 = vpop.f32.mrf.mxu0
    %v1144 = vadd.f32 %v1055, %v1143
    %1145 = vmatmul.bf16.gmra.mxu0 %v809
    %v1146 = vpop.f32.mrf.mxu0
    %v1147 = vadd.f32 %v1058, %v1146
    %v1148 = vpop.f32.mrf.mxu0
    %v1149 = vadd.f32 %v1060, %v1148
    %1150 = vmatmul.bf16.gmra.mxu0 %v812
    %v1151 = vpop.f32.mrf.mxu0
    %v1152 = vadd.f32 %v1063, %v1151
    %v1153 = vpop.f32.mrf.mxu0
    %v1154 = vadd.f32 %v1065, %v1153
    %1155 = vmatmul.bf16.gmra.mxu0 %v815
    %v1156 = vpop.f32.mrf.mxu0
    %v1157 = vadd.f32 %v1068, %v1156
    %v1158 = vpop.f32.mrf.mxu0
    %v1159 = vadd.f32 %v1070, %v1158
    %1160 = vmatmul.bf16.gmra.mxu0 %v818
    %v1161 = vpop.f32.mrf.mxu0
    %v1162 = vadd.f32 %v1073, %v1161
    %v1163 = vpop.f32.mrf.mxu0
    %v1164 = vadd.f32 %v1075, %v1163
    %1165 = vmatmul.bf16.gmra.mxu0 %v821
    %v1166 = vpop.f32.mrf.mxu0
    %v1167 = vadd.f32 %v1078, %v1166
    %v1168 = vpop.f32.mrf.mxu0
    %v1169 = vadd.f32 %v1080, %v1168
    %1170 = vmatmul.bf16.gmra.mxu0 %v824
    %v1171 = vpop.f32.mrf.mxu0
    %v1172 = vadd.f32 %v1083, %v1171
    %v1173 = vpop.f32.mrf.mxu0
    %v1174 = vadd.f32 %v1085, %v1173
    %1175 = vmatmul.bf16.gmra.mxu0 %v827
    %v1176 = vpop.f32.mrf.mxu0
    %v1177 = vadd.f32 %v1088, %v1176
    %v1178 = vpop.f32.mrf.mxu0
    %v1179 = vadd.f32 %v1090, %v1178
    %1180 = vmatmul.bf16.gmra.mxu0 %v830
    %v1181 = vpop.f32.mrf.mxu0
    %v1182 = vadd.f32 %v1093, %v1181
    %v1183 = vpop.f32.mrf.mxu0
    %v1184 = vadd.f32 %v1095, %v1183
    %1185 = vmatmul.bf16.gmra.mxu0 %v833
    %v1186 = vpop.f32.mrf.mxu0
    %v1187 = vadd.f32 %v1098, %v1186
    %v1188 = vpop.f32.mrf.mxu0
    %v1189 = vadd.f32 %v1100, %v1188
    %1190 = vdwg.mxu0
    %1191 = vmatpush.bf16.msra.mxu0 %v681
    %1192 = vmatpush.bf16.msra.mxu0 %v679
    %1193 = vmatpush.bf16.msra.mxu0 %v677
    %1194 = vmatpush.bf16.msra.mxu0 %v675
    %1195 = vmatpush.bf16.msra.mxu0 %v673
    %1196 = vmatpush.bf16.msra.mxu0 %v671
    %1197 = vmatpush.bf16.msra.mxu0 %v669
    %1198 = vmatpush.bf16.msra.mxu0 %v667
    %1199 = vmatmul.bf16.gmra.mxu0 %v374
    %v1200 = vpop.f32.mrf.mxu0
    %v1201 = vadd.f32 %v179, %v1200
    %v1202 = vpop.f32.mrf.mxu0
    %v1203 = vadd.f32 %v179, %v1202
    %1204 = vmatmul.bf16.gmra.mxu0 %v378
    %v1205 = vpop.f32.mrf.mxu0
    %v1206 = vadd.f32 %v179, %v1205
    %v1207 = vpop.f32.mrf.mxu0
    %v1208 = vadd.f32 %v179, %v1207
    %1209 = vmatmul.bf16.gmra.mxu0 %v382
    %v1210 = vpop.f32.mrf.mxu0
    %v1211 = vadd.f32 %v179, %v1210
    %v1212 = vpop.f32.mrf.mxu0
    %v1213 = vadd.f32 %v179, %v1212
    %1214 = vmatmul.bf16.gmra.mxu0 %v386
    %v1215 = vpop.f32.mrf.mxu0
    %v1216 = vadd.f32 %v179, %v1215
    %v1217 = vpop.f32.mrf.mxu0
    %v1218 = vadd.f32 %v179, %v1217
    %1219 = vmatmul.bf16.gmra.mxu0 %v390
    %v1220 = vpop.f32.mrf.mxu0
    %v1221 = vadd.f32 %v179, %v1220
    %v1222 = vpop.f32.mrf.mxu0
    %v1223 = vadd.f32 %v179, %v1222
    %1224 = vmatmul.bf16.gmra.mxu0 %v394
    %v1225 = vpop.f32.mrf.mxu0
    %v1226 = vadd.f32 %v179, %v1225
    %v1227 = vpop.f32.mrf.mxu0
    %v1228 = vadd.f32 %v179, %v1227
    %1229 = vmatmul.bf16.gmra.mxu0 %v398
    %v1230 = vpop.f32.mrf.mxu0
    %v1231 = vadd.f32 %v179, %v1230
    %v1232 = vpop.f32.mrf.mxu0
    %v1233 = vadd.f32 %v179, %v1232
    %1234 = vmatmul.bf16.gmra.mxu0 %v402
    %v1235 = vpop.f32.mrf.mxu0
    %v1236 = vadd.f32 %v179, %v1235
    %v1237 = vpop.f32.mrf.mxu0
    %v1238 = vadd.f32 %v179, %v1237
    %1239 = vmatmul.bf16.gmra.mxu0 %v406
    %v1240 = vpop.f32.mrf.mxu0
    %v1241 = vadd.f32 %v179, %v1240
    %v1242 = vpop.f32.mrf.mxu0
    %v1243 = vadd.f32 %v179, %v1242
    %1244 = vmatmul.bf16.gmra.mxu0 %v410
    %v1245 = vpop.f32.mrf.mxu0
    %v1246 = vadd.f32 %v179, %v1245
    %v1247 = vpop.f32.mrf.mxu0
    %v1248 = vadd.f32 %v179, %v1247
    %1249 = vmatmul.bf16.gmra.mxu0 %v414
    %v1250 = vpop.f32.mrf.mxu0
    %v1251 = vadd.f32 %v179, %v1250
    %v1252 = vpop.f32.mrf.mxu0
    %v1253 = vadd.f32 %v179, %v1252
    %1254 = vmatmul.bf16.gmra.mxu0 %v418
    %v1255 = vpop.f32.mrf.mxu0
    %v1256 = vadd.f32 %v179, %v1255
    %v1257 = vpop.f32.mrf.mxu0
    %v1258 = vadd.f32 %v179, %v1257
    %1259 = vmatmul.bf16.gmra.mxu0 %v422
    %v1260 = vpop.f32.mrf.mxu0
    %v1261 = vadd.f32 %v179, %v1260
    %v1262 = vpop.f32.mrf.mxu0
    %v1263 = vadd.f32 %v179, %v1262
    %1264 = vmatmul.bf16.gmra.mxu0 %v426
    %v1265 = vpop.f32.mrf.mxu0
    %v1266 = vadd.f32 %v179, %v1265
    %v1267 = vpop.f32.mrf.mxu0
    %v1268 = vadd.f32 %v179, %v1267
    %1269 = vmatmul.bf16.gmra.mxu0 %v430
    %v1270 = vpop.f32.mrf.mxu0
    %v1271 = vadd.f32 %v179, %v1270
    %v1272 = vpop.f32.mrf.mxu0
    %v1273 = vadd.f32 %v179, %v1272
    %1274 = vmatmul.bf16.gmra.mxu0 %v434
    %v1275 = vpop.f32.mrf.mxu0
    %v1276 = vadd.f32 %v179, %v1275
    %v1277 = vpop.f32.mrf.mxu0
    %v1278 = vadd.f32 %v179, %v1277
    %1279 = vdwg.mxu0
    %1280 = vmatpush.bf16.msra.mxu0 %v697
    %1281 = vmatpush.bf16.msra.mxu0 %v695
    %1282 = vmatpush.bf16.msra.mxu0 %v693
    %1283 = vmatpush.bf16.msra.mxu0 %v691
    %1284 = vmatpush.bf16.msra.mxu0 %v689
    %1285 = vmatpush.bf16.msra.mxu0 %v687
    %1286 = vmatpush.bf16.msra.mxu0 %v685
    %1287 = vmatpush.bf16.msra.mxu0 %v683
    %1288 = vmatmul.bf16.gmra.mxu0 %v375
    %v1289 = vpop.f32.mrf.mxu0
    %v1290 = vadd.f32 %v1201, %v1289
    %v1291 = vpop.f32.mrf.mxu0
    %v1292 = vadd.f32 %v1203, %v1291
    %1293 = vmatmul.bf16.gmra.mxu0 %v379
    %v1294 = vpop.f32.mrf.mxu0
    %v1295 = vadd.f32 %v1206, %v1294
    %v1296 = vpop.f32.mrf.mxu0
    %v1297 = vadd.f32 %v1208, %v1296
    %1298 = vmatmul.bf16.gmra.mxu0 %v383
    %v1299 = vpop.f32.mrf.mxu0
    %v1300 = vadd.f32 %v1211, %v1299
    %v1301 = vpop.f32.mrf.mxu0
    %v1302 = vadd.f32 %v1213, %v1301
    %1303 = vmatmul.bf16.gmra.mxu0 %v387
    %v1304 = vpop.f32.mrf.mxu0
    %v1305 = vadd.f32 %v1216, %v1304
    %v1306 = vpop.f32.mrf.mxu0
    %v1307 = vadd.f32 %v1218, %v1306
    %1308 = vmatmul.bf16.gmra.mxu0 %v391
    %v1309 = vpop.f32.mrf.mxu0
    %v1310 = vadd.f32 %v1221, %v1309
    %v1311 = vpop.f32.mrf.mxu0
    %v1312 = vadd.f32 %v1223, %v1311
    %1313 = vmatmul.bf16.gmra.mxu0 %v395
    %v1314 = vpop.f32.mrf.mxu0
    %v1315 = vadd.f32 %v1226, %v1314
    %v1316 = vpop.f32.mrf.mxu0
    %v1317 = vadd.f32 %v1228, %v1316
    %1318 = vmatmul.bf16.gmra.mxu0 %v399
    %v1319 = vpop.f32.mrf.mxu0
    %v1320 = vadd.f32 %v1231, %v1319
    %v1321 = vpop.f32.mrf.mxu0
    %v1322 = vadd.f32 %v1233, %v1321
    %1323 = vmatmul.bf16.gmra.mxu0 %v403
    %v1324 = vpop.f32.mrf.mxu0
    %v1325 = vadd.f32 %v1236, %v1324
    %v1326 = vpop.f32.mrf.mxu0
    %v1327 = vadd.f32 %v1238, %v1326
    %1328 = vmatmul.bf16.gmra.mxu0 %v407
    %v1329 = vpop.f32.mrf.mxu0
    %v1330 = vadd.f32 %v1241, %v1329
    %v1331 = vpop.f32.mrf.mxu0
    %v1332 = vadd.f32 %v1243, %v1331
    %1333 = vmatmul.bf16.gmra.mxu0 %v411
    %v1334 = vpop.f32.mrf.mxu0
    %v1335 = vadd.f32 %v1246, %v1334
    %v1336 = vpop.f32.mrf.mxu0
    %v1337 = vadd.f32 %v1248, %v1336
    %1338 = vmatmul.bf16.gmra.mxu0 %v415
    %v1339 = vpop.f32.mrf.mxu0
    %v1340 = vadd.f32 %v1251, %v1339
    %v1341 = vpop.f32.mrf.mxu0
    %v1342 = vadd.f32 %v1253, %v1341
    %1343 = vmatmul.bf16.gmra.mxu0 %v419
    %v1344 = vpop.f32.mrf.mxu0
    %v1345 = vadd.f32 %v1256, %v1344
    %v1346 = vpop.f32.mrf.mxu0
    %v1347 = vadd.f32 %v1258, %v1346
    %1348 = vmatmul.bf16.gmra.mxu0 %v423
    %v1349 = vpop.f32.mrf.mxu0
    %v1350 = vadd.f32 %v1261, %v1349
    %v1351 = vpop.f32.mrf.mxu0
    %v1352 = vadd.f32 %v1263, %v1351
    %1353 = vmatmul.bf16.gmra.mxu0 %v427
    %v1354 = vpop.f32.mrf.mxu0
    %v1355 = vadd.f32 %v1266, %v1354
    %v1356 = vpop.f32.mrf.mxu0
    %v1357 = vadd.f32 %v1268, %v1356
    %1358 = vmatmul.bf16.gmra.mxu0 %v431
    %v1359 = vpop.f32.mrf.mxu0
    %v1360 = vadd.f32 %v1271, %v1359
    %v1361 = vpop.f32.mrf.mxu0
    %v1362 = vadd.f32 %v1273, %v1361
    %1363 = vmatmul.bf16.gmra.mxu0 %v435
    %v1364 = vpop.f32.mrf.mxu0
    %v1365 = vadd.f32 %v1276, %v1364
    %v1366 = vpop.f32.mrf.mxu0
    %v1367 = vadd.f32 %v1278, %v1366
    %1368 = vdwg.mxu0
    %1369 = vmatpush.bf16.msra.mxu0 %v713
    %1370 = vmatpush.bf16.msra.mxu0 %v711
    %1371 = vmatpush.bf16.msra.mxu0 %v709
    %1372 = vmatpush.bf16.msra.mxu0 %v707
    %1373 = vmatpush.bf16.msra.mxu0 %v705
    %1374 = vmatpush.bf16.msra.mxu0 %v703
    %1375 = vmatpush.bf16.msra.mxu0 %v701
    %1376 = vmatpush.bf16.msra.mxu0 %v699
    %1377 = vmatmul.bf16.gmra.mxu0 %v376
    %v1378 = vpop.f32.mrf.mxu0
    %v1379 = vadd.f32 %v1290, %v1378
    %v1380 = vpop.f32.mrf.mxu0
    %v1381 = vadd.f32 %v1292, %v1380
    %1382 = vmatmul.bf16.gmra.mxu0 %v380
    %v1383 = vpop.f32.mrf.mxu0
    %v1384 = vadd.f32 %v1295, %v1383
    %v1385 = vpop.f32.mrf.mxu0
    %v1386 = vadd.f32 %v1297, %v1385
    %1387 = vmatmul.bf16.gmra.mxu0 %v384
    %v1388 = vpop.f32.mrf.mxu0
    %v1389 = vadd.f32 %v1300, %v1388
    %v1390 = vpop.f32.mrf.mxu0
    %v1391 = vadd.f32 %v1302, %v1390
    %1392 = vmatmul.bf16.gmra.mxu0 %v388
    %v1393 = vpop.f32.mrf.mxu0
    %v1394 = vadd.f32 %v1305, %v1393
    %v1395 = vpop.f32.mrf.mxu0
    %v1396 = vadd.f32 %v1307, %v1395
    %1397 = vmatmul.bf16.gmra.mxu0 %v392
    %v1398 = vpop.f32.mrf.mxu0
    %v1399 = vadd.f32 %v1310, %v1398
    %v1400 = vpop.f32.mrf.mxu0
    %v1401 = vadd.f32 %v1312, %v1400
    %1402 = vmatmul.bf16.gmra.mxu0 %v396
    %v1403 = vpop.f32.mrf.mxu0
    %v1404 = vadd.f32 %v1315, %v1403
    %v1405 = vpop.f32.mrf.mxu0
    %v1406 = vadd.f32 %v1317, %v1405
    %1407 = vmatmul.bf16.gmra.mxu0 %v400
    %v1408 = vpop.f32.mrf.mxu0
    %v1409 = vadd.f32 %v1320, %v1408
    %v1410 = vpop.f32.mrf.mxu0
    %v1411 = vadd.f32 %v1322, %v1410
    %1412 = vmatmul.bf16.gmra.mxu0 %v404
    %v1413 = vpop.f32.mrf.mxu0
    %v1414 = vadd.f32 %v1325, %v1413
    %v1415 = vpop.f32.mrf.mxu0
    %v1416 = vadd.f32 %v1327, %v1415
    %1417 = vmatmul.bf16.gmra.mxu0 %v408
    %v1418 = vpop.f32.mrf.mxu0
    %v1419 = vadd.f32 %v1330, %v1418
    %v1420 = vpop.f32.mrf.mxu0
    %v1421 = vadd.f32 %v1332, %v1420
    %1422 = vmatmul.bf16.gmra.mxu0 %v412
    %v1423 = vpop.f32.mrf.mxu0
    %v1424 = vadd.f32 %v1335, %v1423
    %v1425 = vpop.f32.mrf.mxu0
    %v1426 = vadd.f32 %v1337, %v1425
    %1427 = vmatmul.bf16.gmra.mxu0 %v416
    %v1428 = vpop.f32.mrf.mxu0
    %v1429 = vadd.f32 %v1340, %v1428
    %v1430 = vpop.f32.mrf.mxu0
    %v1431 = vadd.f32 %v1342, %v1430
    %1432 = vmatmul.bf16.gmra.mxu0 %v420
    %v1433 = vpop.f32.mrf.mxu0
    %v1434 = vadd.f32 %v1345, %v1433
    %v1435 = vpop.f32.mrf.mxu0
    %v1436 = vadd.f32 %v1347, %v1435
    %1437 = vmatmul.bf16.gmra.mxu0 %v424
    %v1438 = vpop.f32.mrf.mxu0
    %v1439 = vadd.f32 %v1350, %v1438
    %v1440 = vpop.f32.mrf.mxu0
    %v1441 = vadd.f32 %v1352, %v1440
    %1442 = vmatmul.bf16.gmra.mxu0 %v428
    %v1443 = vpop.f32.mrf.mxu0
    %v1444 = vadd.f32 %v1355, %v1443
    %v1445 = vpop.f32.mrf.mxu0
    %v1446 = vadd.f32 %v1357, %v1445
    %1447 = vmatmul.bf16.gmra.mxu0 %v432
    %v1448 = vpop.f32.mrf.mxu0
    %v1449 = vadd.f32 %v1360, %v1448
    %v1450 = vpop.f32.mrf.mxu0
    %v1451 = vadd.f32 %v1362, %v1450
    %1452 = vmatmul.bf16.gmra.mxu0 %v436
    %v1453 = vpop.f32.mrf.mxu0
    %v1454 = vadd.f32 %v1365, %v1453
    %v1455 = vpop.f32.mrf.mxu0
    %v1456 = vadd.f32 %v1367, %v1455
    %1457 = vdwg.mxu0
    %1458 = vmatpush.bf16.msra.mxu0 0
    %1459 = vmatpush.bf16.msra.mxu0 0
    %1460 = vmatpush.bf16.msra.mxu0 %v725
    %1461 = vmatpush.bf16.msra.mxu0 %v723
    %1462 = vmatpush.bf16.msra.mxu0 %v721
    %1463 = vmatpush.bf16.msra.mxu0 %v719
    %1464 = vmatpush.bf16.msra.mxu0 %v717
    %1465 = vmatpush.bf16.msra.mxu0 %v715
    %1466 = vmatmul.bf16.gmra.mxu0 %v788
    %v1467 = vpop.f32.mrf.mxu0
    %v1468 = vadd.f32 %v1379, %v1467
    %v1469 = vpop.f32.mrf.mxu0
    %v1470 = vadd.f32 %v1381, %v1469
    %1471 = vmatmul.bf16.gmra.mxu0 %v791
    %v1472 = vpop.f32.mrf.mxu0
    %v1473 = vadd.f32 %v1384, %v1472
    %v1474 = vpop.f32.mrf.mxu0
    %v1475 = vadd.f32 %v1386, %v1474
    %1476 = vmatmul.bf16.gmra.mxu0 %v794
    %v1477 = vpop.f32.mrf.mxu0
    %v1478 = vadd.f32 %v1389, %v1477
    %v1479 = vpop.f32.mrf.mxu0
    %v1480 = vadd.f32 %v1391, %v1479
    %1481 = vmatmul.bf16.gmra.mxu0 %v797
    %v1482 = vpop.f32.mrf.mxu0
    %v1483 = vadd.f32 %v1394, %v1482
    %v1484 = vpop.f32.mrf.mxu0
    %v1485 = vadd.f32 %v1396, %v1484
    %1486 = vmatmul.bf16.gmra.mxu0 %v800
    %v1487 = vpop.f32.mrf.mxu0
    %v1488 = vadd.f32 %v1399, %v1487
    %v1489 = vpop.f32.mrf.mxu0
    %v1490 = vadd.f32 %v1401, %v1489
    %1491 = vmatmul.bf16.gmra.mxu0 %v803
    %v1492 = vpop.f32.mrf.mxu0
    %v1493 = vadd.f32 %v1404, %v1492
    %v1494 = vpop.f32.mrf.mxu0
    %v1495 = vadd.f32 %v1406, %v1494
    %1496 = vmatmul.bf16.gmra.mxu0 %v806
    %v1497 = vpop.f32.mrf.mxu0
    %v1498 = vadd.f32 %v1409, %v1497
    %v1499 = vpop.f32.mrf.mxu0
    %v1500 = vadd.f32 %v1411, %v1499
    %1501 = vmatmul.bf16.gmra.mxu0 %v809
    %v1502 = vpop.f32.mrf.mxu0
    %v1503 = vadd.f32 %v1414, %v1502
    %v1504 = vpop.f32.mrf.mxu0
    %v1505 = vadd.f32 %v1416, %v1504
    %1506 = vmatmul.bf16.gmra.mxu0 %v812
    %v1507 = vpop.f32.mrf.mxu0
    %v1508 = vadd.f32 %v1419, %v1507
    %v1509 = vpop.f32.mrf.mxu0
    %v1510 = vadd.f32 %v1421, %v1509
    %1511 = vmatmul.bf16.gmra.mxu0 %v815
    %v1512 = vpop.f32.mrf.mxu0
    %v1513 = vadd.f32 %v1424, %v1512
    %v1514 = vpop.f32.mrf.mxu0
    %v1515 = vadd.f32 %v1426, %v1514
    %1516 = vmatmul.bf16.gmra.mxu0 %v818
    %v1517 = vpop.f32.mrf.mxu0
    %v1518 = vadd.f32 %v1429, %v1517
    %v1519 = vpop.f32.mrf.mxu0
    %v1520 = vadd.f32 %v1431, %v1519
    %1521 = vmatmul.bf16.gmra.mxu0 %v821
    %v1522 = vpop.f32.mrf.mxu0
    %v1523 = vadd.f32 %v1434, %v1522
    %v1524 = vpop.f32.mrf.mxu0
    %v1525 = vadd.f32 %v1436, %v1524
    %1526 = vmatmul.bf16.gmra.mxu0 %v824
    %v1527 = vpop.f32.mrf.mxu0
    %v1528 = vadd.f32 %v1439, %v1527
    %v1529 = vpop.f32.mrf.mxu0
    %v1530 = vadd.f32 %v1441, %v1529
    %1531 = vmatmul.bf16.gmra.mxu0 %v827
    %v1532 = vpop.f32.mrf.mxu0
    %v1533 = vadd.f32 %v1444, %v1532
    %v1534 = vpop.f32.mrf.mxu0
    %v1535 = vadd.f32 %v1446, %v1534
    %1536 = vmatmul.bf16.gmra.mxu0 %v830
    %v1537 = vpop.f32.mrf.mxu0
    %v1538 = vadd.f32 %v1449, %v1537
    %v1539 = vpop.f32.mrf.mxu0
    %v1540 = vadd.f32 %v1451, %v1539
    %1541 = vmatmul.bf16.gmra.mxu0 %v833
    %v1542 = vpop.f32.mrf.mxu0
    %v1543 = vadd.f32 %v1454, %v1542
    %v1544 = vpop.f32.mrf.mxu0
    %v1545 = vadd.f32 %v1456, %v1544
    %1546 = vdwg.mxu0
    %v1547 = vmax.f32 %v1112, 0.0
    %v1548 = vmax.f32 %v1468, 0.0
    %v1549 = vmax.f32 %v1114, 0.0
    %v1550 = vmax.f32 %v1470, 0.0
    %v1551 = vmax.f32 %v1117, 0.0
    %v1552 = vmax.f32 %v1473, 0.0
    %v1553 = vmax.f32 %v1119, 0.0
    %v1554 = vmax.f32 %v1475, 0.0
    %v1555 = vmax.f32 %v1122, 0.0
    %v1556 = vmax.f32 %v1478, 0.0
    %v1557 = vmax.f32 %v1124, 0.0
    %v1558 = vmax.f32 %v1480, 0.0
    %v1559 = vmax.f32 %v1127, 0.0
    %v1560 = vmax.f32 %v1483, 0.0
    %v1561 = vmax.f32 %v1129, 0.0
    %v1562 = vmax.f32 %v1485, 0.0
    %v1563 = vmax.f32 %v1132, 0.0
    %v1564 = vmax.f32 %v1488, 0.0
    %v1565 = vmax.f32 %v1134, 0.0
    %v1566 = vmax.f32 %v1490, 0.0
    %v1567 = vmax.f32 %v1137, 0.0
    %v1568 = vmax.f32 %v1493, 0.0
    %v1569 = vmax.f32 %v1139, 0.0
    %v1570 = vmax.f32 %v1495, 0.0
    %v1571 = vmax.f32 %v1142, 0.0
    %v1572 = vmax.f32 %v1498, 0.0
    %v1573 = vmax.f32 %v1144, 0.0
    %v1574 = vmax.f32 %v1500, 0.0
    %v1575 = vmax.f32 %v1147, 0.0
    %v1576 = vmax.f32 %v1503, 0.0
    %v1577 = vmax.f32 %v1149, 0.0
    %v1578 = vmax.f32 %v1505, 0.0
    %v1579 = vmax.f32 %v1152, 0.0
    %v1580 = vmax.f32 %v1508, 0.0
    %v1581 = vmax.f32 %v1154, 0.0
    %v1582 = vmax.f32 %v1510, 0.0
    %v1583 = vmax.f32 %v1157, 0.0
    %v1584 = vmax.f32 %v1513, 0.0
    %v1585 = vmax.f32 %v1159, 0.0
    %v1586 = vmax.f32 %v1515, 0.0
    %v1587 = vmax.f32 %v1162, 0.0
    %v1588 = vmax.f32 %v1518, 0.0
    %v1589 = vmax.f32 %v1164, 0.0
    %v1590 = vmax.f32 %v1520, 0.0
    %v1591 = vmax.f32 %v1167, 0.0
    %v1592 = vmax.f32 %v1523, 0.0
    %v1593 = vmax.f32 %v1169, 0.0
    %v1594 = vmax.f32 %v1525, 0.0
    %v1595 = vmax.f32 %v1172, 0.0
    %v1596 = vmax.f32 %v1528, 0.0
    %v1597 = vmax.f32 %v1174, 0.0
    %v1598 = vmax.f32 %v1530, 0.0
    %v1599 = vmax.f32 %v1177, 0.0
    %v1600 = vmax.f32 %v1533, 0.0
    %v1601 = vmax.f32 %v1179, 0.0
    %v1602 = vmax.f32 %v1535, 0.0
    %v1603 = vmax.f32 %v1182, 0.0
    %v1604 = vmax.f32 %v1538, 0.0
    %v1605 = vmax.f32 %v1184, 0.0
    %v1606 = vmax.f32 %v1540, 0.0
    %v1607 = vmax.f32 %v1187, 0.0
    %v1608 = vmax.f32 %v1543, 0.0
    %v1609 = vmax.f32 %v1189, 0.0
    %v1610 = vmax.f32 %v1545, 0.0
    %v1611 = vmax.f32 %v1547, %v1579
    %v1612 = vmax.f32 %v1548, %v1580
    %v1613 = vmax.f32 %v1549, %v1581
    %v1614 = vmax.f32 %v1550, %v1582
    %v1615 = vmax.f32 %v1551, %v1583
    %v1616 = vmax.f32 %v1552, %v1584
    %v1617 = vmax.f32 %v1553, %v1585
    %v1618 = vmax.f32 %v1554, %v1586
    %v1619 = vmax.f32 %v1555, %v1587
    %v1620 = vmax.f32 %v1556, %v1588
    %v1621 = vmax.f32 %v1557, %v1589
    %v1622 = vmax.f32 %v1558, %v1590
    %v1623 = vmax.f32 %v1559, %v1591
    %v1624 = vmax.f32 %v1560, %v1592
    %v1625 = vmax.f32 %v1561, %v1593
    %v1626 = vmax.f32 %v1562, %v1594
    %v1627 = vmax.f32 %v1563, %v1595
    %v1628 = vmax.f32 %v1564, %v1596
    %v1629 = vmax.f32 %v1565, %v1597
    %v1630 = vmax.f32 %v1566, %v1598
    %v1631 = vmax.f32 %v1567, %v1599
    %v1632 = vmax.f32 %v1568, %v1600
    %v1633 = vmax.f32 %v1569, %v1601
    %v1634 = vmax.f32 %v1570, %v1602
    %v1635 = vmax.f32 %v1571, %v1603
    %v1636 = vmax.f32 %v1572, %v1604
    %v1637 = vmax.f32 %v1573, %v1605
    %v1638 = vmax.f32 %v1574, %v1606
    %v1639 = vmax.f32 %v1575, %v1607
    %v1640 = vmax.f32 %v1576, %v1608
    %v1641 = vmax.f32 %v1577, %v1609
    %v1642 = vmax.f32 %v1578, %v1610
    %v1643 = vld [vmem:[%s3] sm:$0xf]
    %v1644 = vld [vmem:[%s3 + $0x4] sm:$0xf]
    %v1645 = vld [vmem:[%s3 + $0x8] sm:$0xf]
    %v1646 = vld [vmem:[%s3 + $0xc] sm:$0xf]
    %v1647 = vld [vmem:[%s3 + $0x10] sm:$0xf]
    %v1648 = vld [vmem:[%s3 + $0x14] sm:$0xf]
    %v1649 = vld [vmem:[%s3 + $0x18] sm:$0xf]
    %v1650 = vld [vmem:[%s3 + $0x1c] sm:$0xf]
    %v1651 = vld [vmem:[%s3 + $0x20] sm:$0xf]
    %v1652 = vld [vmem:[%s3 + $0x24] sm:$0xf]
    %v1653 = vld [vmem:[%s3 + $0x28] sm:$0xf]
    %v1654 = vld [vmem:[%s3 + $0x2c] sm:$0xf]
    %v1655 = vld [vmem:[%s3 + $0x30] sm:$0xf]
    %v1656 = vld [vmem:[%s3 + $0x34] sm:$0xf]
    %v1657 = vld [vmem:[%s3 + $0x38] sm:$0xf]
    %v1658 = vld [vmem:[%s3 + $0x3c] sm:$0xf]
    %v1659 = vld [vmem:[%s3 + $0x40] sm:$0xf]
    %v1660 = vld [vmem:[%s3 + $0x44] sm:$0xf]
    %v1661 = vld [vmem:[%s3 + $0x48] sm:$0xf]
    %v1662 = vld [vmem:[%s3 + $0x4c] sm:$0xf]
    %v1663 = vld [vmem:[%s3 + $0x50] sm:$0xf]
    %v1664 = vpack.c.bf16 %v1613, %v1611
    %v1665 = vpack.c.bf16 %v1614, %v1612
    %v1666 = vpack.c.bf16 %v1617, %v1615
    %v1667 = vpack.c.bf16 %v1618, %v1616
    %v1668 = vpack.c.bf16 %v1621, %v1619
    %v1669 = vpack.c.bf16 %v1622, %v1620
    %v1670 = vpack.c.bf16 %v1625, %v1623
    %v1671 = vpack.c.bf16 %v1626, %v1624
    %v1672 = vpack.c.bf16 %v1629, %v1627
    %v1673 = vpack.c.bf16 %v1630, %v1628
    %v1674 = vpack.c.bf16 %v1633, %v1631
    %v1675 = vpack.c.bf16 %v1634, %v1632
    %v1676 = vpack.c.bf16 %v1637, %v1635
    %v1677 = vpack.c.bf16 %v1638, %v1636
    %v1678 = vpack.c.bf16 %v1641, %v1639
    %v1679 = vpack.c.bf16 %v1642, %v1640
    %v1701 = vunpack.c.l.b16 %v1643
    %v1702 = vunpack.c.l.b16 %v1644
    %v1703 = vunpack.c.l.b16 %v1645
    %v1704 = vunpack.c.l.b16 %v1646
    %v1705 = vunpack.c.l.b16 %v1647
    %v1706 = vunpack.c.l.b16 %v1648
    %v1707 = vunpack.c.l.b16 %v1649
    %v1708 = vunpack.c.l.b16 %v1650
    %v1709 = vunpack.c.l.b16 %v1651
    %v1710 = vunpack.c.l.b16 %v1652
    %v1711 = vunpack.c.l.b16 %v1653
    %v1712 = vunpack.c.l.b16 %v1654
    %v1713 = vunpack.c.l.b16 %v1655
    %v1714 = vunpack.c.l.b16 %v1656
    %v1715 = vunpack.c.l.b16 %v1657
    %v1716 = vunpack.c.l.b16 %v1658
    %v1717 = vunpack.c.l.b16 %v1659
    %v1718 = vunpack.c.l.b16 %v1660
    %v1719 = vunpack.c.l.b16 %v1661
    %v1720 = vunpack.c.l.b16 %v1662
    %v1721 = vunpack.c.l.b16 %v1663
    %v1722 = vpack.c.b16 %v1702, %v1701
    %v1723 = vpack.c.b16 %v1704, %v1703
    %v1724 = vpack.c.b16 %v1706, %v1705
    %v1725 = vpack.c.b16 %v1708, %v1707
    %v1726 = vpack.c.b16 %v1710, %v1709
    %v1727 = vpack.c.b16 %v1712, %v1711
    %v1728 = vpack.c.b16 %v1714, %v1713
    %v1729 = vpack.c.b16 %v1716, %v1715
    %v1730 = vpack.c.b16 %v1718, %v1717
    %v1731 = vpack.c.b16 %v1720, %v1719
    %v1732 = vpack.c.b16 %v1721, %v1721
    %vm1743 = vcmask 326656
    %v1745 = vsel %vm1743, %v1665, 0
    %v1748 = vsel %vm1743, %v1667, 0
    %v1751 = vsel %vm1743, %v1669, 0
    %v1754 = vsel %vm1743, %v1671, 0
    %v1757 = vsel %vm1743, %v1673, 0
    %v1760 = vsel %vm1743, %v1675, 0
    %v1763 = vsel %vm1743, %v1677, 0
    %v1766 = vsel %vm1743, %v1679, 0
    %vm1768 = vcmask 1043456
    %v1770 = vsel %vm1768, %v1732, 0
    %1772 = vmatpush.bf16.msra.mxu0 %v1729
    %1773 = vmatpush.bf16.msra.mxu0 %v1728
    %1774 = vmatpush.bf16.msra.mxu0 %v1727
    %1775 = vmatpush.bf16.msra.mxu0 %v1726
    %1776 = vmatpush.bf16.msra.mxu0 %v1725
    %1777 = vmatpush.bf16.msra.mxu0 %v1724
    %1778 = vmatpush.bf16.msra.mxu0 %v1723
    %1779 = vmatpush.bf16.msra.mxu0 %v1722
    %1780 = vmatmul.bf16.gmra.mxu0 %v1664
    %v1781 = vpop.f32.mrf.mxu0
    %v1782 = vadd.f32 0.0, %v1781
    %v1783 = vpop.f32.mrf.mxu0
    %v1784 = vadd.f32 0.0, %v1783
    %1785 = vmatmul.bf16.gmra.mxu0 %v1666
    %v1786 = vpop.f32.mrf.mxu0
    %v1787 = vadd.f32 0.0, %v1786
    %v1788 = vpop.f32.mrf.mxu0
    %v1789 = vadd.f32 0.0, %v1788
    %1790 = vmatmul.bf16.gmra.mxu0 %v1668
    %v1791 = vpop.f32.mrf.mxu0
    %v1792 = vadd.f32 0.0, %v1791
    %v1793 = vpop.f32.mrf.mxu0
    %v1794 = vadd.f32 0.0, %v1793
    %1795 = vmatmul.bf16.gmra.mxu0 %v1670
    %v1796 = vpop.f32.mrf.mxu0
    %v1797 = vadd.f32 0.0, %v1796
    %v1798 = vpop.f32.mrf.mxu0
    %v1799 = vadd.f32 0.0, %v1798
    %1800 = vmatmul.bf16.gmra.mxu0 %v1672
    %v1801 = vpop.f32.mrf.mxu0
    %v1802 = vadd.f32 0.0, %v1801
    %v1803 = vpop.f32.mrf.mxu0
    %v1804 = vadd.f32 0.0, %v1803
    %1805 = vmatmul.bf16.gmra.mxu0 %v1674
    %v1806 = vpop.f32.mrf.mxu0
    %v1807 = vadd.f32 0.0, %v1806
    %v1808 = vpop.f32.mrf.mxu0
    %v1809 = vadd.f32 0.0, %v1808
    %1810 = vmatmul.bf16.gmra.mxu0 %v1676
    %v1811 = vpop.f32.mrf.mxu0
    %v1812 = vadd.f32 0.0, %v1811
    %v1813 = vpop.f32.mrf.mxu0
    %v1814 = vadd.f32 0.0, %v1813
    %1815 = vmatmul.bf16.gmra.mxu0 %v1678
    %v1816 = vpop.f32.mrf.mxu0
    %v1817 = vpop.f32.mrf.mxu0
    %1818 = vdwg.mxu0
    %1819 = vmatpush.bf16.msra.mxu0 0
    %1820 = vmatpush.bf16.msra.mxu0 0
    %1821 = vmatpush.bf16.msra.mxu0 0
    %1822 = vmatpush.bf16.msra.mxu0 0
    %1823 = vmatpush.bf16.msra.mxu0 0
    %1824 = vmatpush.bf16.msra.mxu0 %v1770
    %1825 = vmatpush.bf16.msra.mxu0 %v1731
    %1826 = vmatpush.bf16.msra.mxu0 %v1730
    %1827 = vmatmul.bf16.gmra.mxu0 %v1745
    %v1828 = vpop.f32.mrf.mxu0
    %v1829 = vadd.f32 %v1782, %v1828
    %v1830 = vpop.f32.mrf.mxu0
    %v1831 = vadd.f32 %v1784, %v1830
    %1832 = vmatmul.bf16.gmra.mxu0 %v1748
    %v1833 = vpop.f32.mrf.mxu0
    %v1834 = vadd.f32 %v1787, %v1833
    %v1835 = vpop.f32.mrf.mxu0
    %v1836 = vadd.f32 %v1789, %v1835
    %1837 = vmatmul.bf16.gmra.mxu0 %v1751
    %v1838 = vpop.f32.mrf.mxu0
    %v1839 = vadd.f32 %v1792, %v1838
    %v1840 = vpop.f32.mrf.mxu0
    %v1841 = vadd.f32 %v1794, %v1840
    %1842 = vmatmul.bf16.gmra.mxu0 %v1754
    %v1843 = vpop.f32.mrf.mxu0
    %v1844 = vadd.f32 %v1797, %v1843
    %v1845 = vpop.f32.mrf.mxu0
    %v1846 = vadd.f32 %v1799, %v1845
    %1847 = vmatmul.bf16.gmra.mxu0 %v1757
    %v1848 = vpop.f32.mrf.mxu0
    %v1849 = vadd.f32 %v1802, %v1848
    %v1850 = vpop.f32.mrf.mxu0
    %v1851 = vadd.f32 %v1804, %v1850
    %1852 = vmatmul.bf16.gmra.mxu0 %v1760
    %v1853 = vpop.f32.mrf.mxu0
    %v1854 = vadd.f32 %v1807, %v1853
    %v1855 = vpop.f32.mrf.mxu0
    %v1856 = vadd.f32 %v1809, %v1855
    %1857 = vmatmul.bf16.gmra.mxu0 %v1763
    %v1858 = vpop.f32.mrf.mxu0
    %v1859 = vadd.f32 %v1812, %v1858
    %v1860 = vpop.f32.mrf.mxu0
    %v1861 = vadd.f32 %v1814, %v1860
    %1862 = vmatmul.bf16.gmra.mxu0 %v1766
    %v1863 = vpop.f32.mrf.mxu0
    %v1864 = vpop.f32.mrf.mxu0
    %1865 = vdwg.mxu0
    %s1866 = scalar_lea.vmem %s3, 84
    %v1867 = vld [vmem:[%s1866] sm:$0xf]
    %v1868 = vld [vmem:[%s1866 + $0x4] sm:$0xf]
    %v1869 = vld [vmem:[%s1866 + $0x8] sm:$0xf]
    %v1870 = vld [vmem:[%s1866 + $0xc] sm:$0xf]
    %v1871 = vld [vmem:[%s1866 + $0x10] sm:$0xf]
    %v1872 = vld [vmem:[%s1866 + $0x14] sm:$0xf]
    %v1873 = vld [vmem:[%s1866 + $0x18] sm:$0xf]
    %v1874 = vld [vmem:[%s1866 + $0x1c] sm:$0xf]
    %v1875 = vld [vmem:[%s1866 + $0x20] sm:$0xf]
    %v1876 = vld [vmem:[%s1866 + $0x24] sm:$0xf]
    %v1877 = vld [vmem:[%s1866 + $0x28] sm:$0xf]
    %v1878 = vld [vmem:[%s1866 + $0x2c] sm:$0xf]
    %v1879 = vld [vmem:[%s1866 + $0x30] sm:$0xf]
    %v1880 = vld [vmem:[%s1866 + $0x34] sm:$0xf]
    %v1881 = vld [vmem:[%s1866 + $0x38] sm:$0xf]
    %v1882 = vld [vmem:[%s1866 + $0x3c] sm:$0xf]
    %v1883 = vld [vmem:[%s1866 + $0x40] sm:$0xf]
    %v1884 = vld [vmem:[%s1866 + $0x44] sm:$0xf]
    %v1885 = vld [vmem:[%s1866 + $0x48] sm:$0xf]
    %v1886 = vld [vmem:[%s1866 + $0x4c] sm:$0xf]
    %v1887 = vld [vmem:[%s1866 + $0x50] sm:$0xf]
    %v1909 = vunpack.c.l.b16 %v1867
    %v1910 = vunpack.c.l.b16 %v1868
    %v1911 = vunpack.c.l.b16 %v1869
    %v1912 = vunpack.c.l.b16 %v1870
    %v1913 = vunpack.c.l.b16 %v1871
    %v1914 = vunpack.c.l.b16 %v1872
    %v1915 = vunpack.c.l.b16 %v1873
    %v1916 = vunpack.c.l.b16 %v1874
    %v1917 = vunpack.c.l.b16 %v1875
    %v1918 = vunpack.c.l.b16 %v1876
    %v1919 = vunpack.c.l.b16 %v1877
    %v1920 = vunpack.c.l.b16 %v1878
    %v1921 = vunpack.c.l.b16 %v1879
    %v1922 = vunpack.c.l.b16 %v1880
    %v1923 = vunpack.c.l.b16 %v1881
    %v1924 = vunpack.c.l.b16 %v1882
    %v1925 = vunpack.c.l.b16 %v1883
    %v1926 = vunpack.c.l.b16 %v1884
    %v1927 = vunpack.c.l.b16 %v1885
    %v1928 = vunpack.c.l.b16 %v1886
    %v1929 = vunpack.c.l.b16 %v1887
    %v1930 = vpack.c.b16 %v1910, %v1909
    %v1931 = vpack.c.b16 %v1912, %v1911
    %v1932 = vpack.c.b16 %v1914, %v1913
    %v1933 = vpack.c.b16 %v1916, %v1915
    %v1934 = vpack.c.b16 %v1918, %v1917
    %v1935 = vpack.c.b16 %v1920, %v1919
    %v1936 = vpack.c.b16 %v1922, %v1921
    %v1937 = vpack.c.b16 %v1924, %v1923
    %v1938 = vpack.c.b16 %v1926, %v1925
    %v1939 = vpack.c.b16 %v1928, %v1927
    %v1940 = vpack.c.b16 %v1929, %v1929
    %v1952 = vsel %vm1768, %v1940, 0
    %1954 = vmatpush.bf16.msra.mxu0 %v1937
    %1955 = vmatpush.bf16.msra.mxu0 %v1936
    %1956 = vmatpush.bf16.msra.mxu0 %v1935
    %1957 = vmatpush.bf16.msra.mxu0 %v1934
    %1958 = vmatpush.bf16.msra.mxu0 %v1933
    %1959 = vmatpush.bf16.msra.mxu0 %v1932
    %1960 = vmatpush.bf16.msra.mxu0 %v1931
    %1961 = vmatpush.bf16.msra.mxu0 %v1930
    %1962 = vmatmul.bf16.gmra.mxu0 %v1664
    %v1963 = vpop.f32.mrf.mxu0
    %v1964 = vadd.f32 0.0, %v1963
    %v1965 = vpop.f32.mrf.mxu0
    %v1966 = vadd.f32 0.0, %v1965
    %1967 = vmatmul.bf16.gmra.mxu0 %v1666
    %v1968 = vpop.f32.mrf.mxu0
    %v1969 = vadd.f32 0.0, %v1968
    %v1970 = vpop.f32.mrf.mxu0
    %v1971 = vadd.f32 0.0, %v1970
    %1972 = vmatmul.bf16.gmra.mxu0 %v1668
    %v1973 = vpop.f32.mrf.mxu0
    %v1974 = vadd.f32 0.0, %v1973
    %v1975 = vpop.f32.mrf.mxu0
    %v1976 = vadd.f32 0.0, %v1975
    %1977 = vmatmul.bf16.gmra.mxu0 %v1670
    %v1978 = vpop.f32.mrf.mxu0
    %v1979 = vadd.f32 0.0, %v1978
    %v1980 = vpop.f32.mrf.mxu0
    %v1981 = vadd.f32 0.0, %v1980
    %1982 = vmatmul.bf16.gmra.mxu0 %v1672
    %v1983 = vpop.f32.mrf.mxu0
    %v1984 = vadd.f32 0.0, %v1983
    %v1985 = vpop.f32.mrf.mxu0
    %v1986 = vadd.f32 0.0, %v1985
    %1987 = vmatmul.bf16.gmra.mxu0 %v1674
    %v1988 = vpop.f32.mrf.mxu0
    %v1989 = vadd.f32 0.0, %v1988
    %v1990 = vpop.f32.mrf.mxu0
    %v1991 = vadd.f32 0.0, %v1990
    %1992 = vmatmul.bf16.gmra.mxu0 %v1676
    %v1993 = vpop.f32.mrf.mxu0
    %v1994 = vadd.f32 0.0, %v1993
    %v1995 = vpop.f32.mrf.mxu0
    %v1996 = vadd.f32 0.0, %v1995
    %1997 = vmatmul.bf16.gmra.mxu0 %v1678
    %v1998 = vpop.f32.mrf.mxu0
    %v1999 = vpop.f32.mrf.mxu0
    %2000 = vdwg.mxu0
    %2001 = vmatpush.bf16.msra.mxu0 0
    %2002 = vmatpush.bf16.msra.mxu0 0
    %2003 = vmatpush.bf16.msra.mxu0 0
    %2004 = vmatpush.bf16.msra.mxu0 0
    %2005 = vmatpush.bf16.msra.mxu0 0
    %2006 = vmatpush.bf16.msra.mxu0 %v1952
    %2007 = vmatpush.bf16.msra.mxu0 %v1939
    %2008 = vmatpush.bf16.msra.mxu0 %v1938
    %2009 = vmatmul.bf16.gmra.mxu0 %v1745
    %v2010 = vpop.f32.mrf.mxu0
    %v2011 = vadd.f32 %v1964, %v2010
    %v2012 = vpop.f32.mrf.mxu0
    %v2013 = vadd.f32 %v1966, %v2012
    %2014 = vmatmul.bf16.gmra.mxu0 %v1748
    %v2015 = vpop.f32.mrf.mxu0
    %v2016 = vadd.f32 %v1969, %v2015
    %v2017 = vpop.f32.mrf.mxu0
    %v2018 = vadd.f32 %v1971, %v2017
    %2019 = vmatmul.bf16.gmra.mxu0 %v1751
    %v2020 = vpop.f32.mrf.mxu0
    %v2021 = vadd.f32 %v1974, %v2020
    %v2022 = vpop.f32.mrf.mxu0
    %v2023 = vadd.f32 %v1976, %v2022
    %2024 = vmatmul.bf16.gmra.mxu0 %v1754
    %v2025 = vpop.f32.mrf.mxu0
    %v2026 = vadd.f32 %v1979, %v2025
    %v2027 = vpop.f32.mrf.mxu0
    %v2028 = vadd.f32 %v1981, %v2027
    %2029 = vmatmul.bf16.gmra.mxu0 %v1757
    %v2030 = vpop.f32.mrf.mxu0
    %v2031 = vadd.f32 %v1984, %v2030
    %v2032 = vpop.f32.mrf.mxu0
    %v2033 = vadd.f32 %v1986, %v2032
    %2034 = vmatmul.bf16.gmra.mxu0 %v1760
    %v2035 = vpop.f32.mrf.mxu0
    %v2036 = vadd.f32 %v1989, %v2035
    %v2037 = vpop.f32.mrf.mxu0
    %v2038 = vadd.f32 %v1991, %v2037
    %2039 = vmatmul.bf16.gmra.mxu0 %v1763
    %v2040 = vpop.f32.mrf.mxu0
    %v2041 = vadd.f32 %v1994, %v2040
    %v2042 = vpop.f32.mrf.mxu0
    %v2043 = vadd.f32 %v1996, %v2042
    %2044 = vmatmul.bf16.gmra.mxu0 %v1766
    %v2045 = vpop.f32.mrf.mxu0
    %v2046 = vpop.f32.mrf.mxu0
    %2047 = vdwg.mxu0
    %v2048 = vmax.f32 %v1829, %v2011
    %v2049 = vmax.f32 %v1831, %v2013
    %v2050 = vmax.f32 %v1834, %v2016
    %v2051 = vmax.f32 %v1836, %v2018
    %v2052 = vmax.f32 %v1839, %v2021
    %v2053 = vmax.f32 %v1841, %v2023
    %v2054 = vmax.f32 %v1844, %v2026
    %v2055 = vmax.f32 %v1846, %v2028
    %v2056 = vmax.f32 %v1849, %v2031
    %v2057 = vmax.f32 %v1851, %v2033
    %v2058 = vmax.f32 %v1854, %v2036
    %v2059 = vmax.f32 %v1856, %v2038
    %v2060 = vmax.f32 %v1859, %v2041
    %v2061 = vmax.f32 %v1861, %v2043
    %2072 = vrot.lane.b32.xlu0 %v2049, 84
    %v2073 = vpop.permute.xlu0 %2072
    %2074 = vrot.lane.b32.xlu0 %v2050, 84
    %v2075 = vpop.permute.xlu0 %2074
    %2076 = vrot.lane.b32.xlu0 %v2051, 84
    %v2077 = vpop.permute.xlu0 %2076
    %2078 = vrot.lane.b32.xlu0 %v2052, 84
    %v2079 = vpop.permute.xlu0 %2078
    %2080 = vrot.lane.b32.xlu0 %v2053, 84
    %v2081 = vpop.permute.xlu0 %2080
    %2082 = vrot.lane.b32.xlu0 %v2054, 84
    %v2083 = vpop.permute.xlu0 %2082
    %2084 = vrot.lane.b32.xlu0 %v2055, 84
    %v2085 = vpop.permute.xlu0 %2084
    %2086 = vrot.lane.b32.xlu0 %v2056, 84
    %v2087 = vpop.permute.xlu0 %2086
    %2088 = vrot.lane.b32.xlu0 %v2057, 84
    %v2089 = vpop.permute.xlu0 %2088
    %2090 = vrot.lane.b32.xlu0 %v2058, 84
    %v2091 = vpop.permute.xlu0 %2090
    %2103 = vrot.lane.b32.xlu0 %v2050, 40
    %v2104 = vpop.permute.xlu0 %2103
    %2105 = vrot.lane.b32.xlu0 %v2051, 40
    %v2106 = vpop.permute.xlu0 %2105
    %2107 = vrot.lane.b32.xlu0 %v2052, 40
    %v2108 = vpop.permute.xlu0 %2107
    %2109 = vrot.lane.b32.xlu0 %v2053, 40
    %v2110 = vpop.permute.xlu0 %2109
    %2111 = vrot.lane.b32.xlu0 %v2054, 40
    %v2112 = vpop.permute.xlu0 %2111
    %2113 = vrot.lane.b32.xlu0 %v2055, 40
    %v2114 = vpop.permute.xlu0 %2113
    %2115 = vrot.lane.b32.xlu0 %v2056, 40
    %v2116 = vpop.permute.xlu0 %2115
    %2117 = vrot.lane.b32.xlu0 %v2057, 40
    %v2118 = vpop.permute.xlu0 %2117
    %2119 = vrot.lane.b32.xlu0 %v2058, 40
    %v2120 = vpop.permute.xlu0 %2119
    %2121 = vrot.lane.b32.xlu0 %v2059, 40
    %v2122 = vpop.permute.xlu0 %2121
    %2134 = vrot.lane.b32.xlu0 %v2051, 124
    %v2135 = vpop.permute.xlu0 %2134
    %2136 = vrot.lane.b32.xlu0 %v2052, 124
    %v2137 = vpop.permute.xlu0 %2136
    %2138 = vrot.lane.b32.xlu0 %v2053, 124
    %v2139 = vpop.permute.xlu0 %2138
    %2140 = vrot.lane.b32.xlu0 %v2054, 124
    %v2141 = vpop.permute.xlu0 %2140
    %2142 = vrot.lane.b32.xlu0 %v2055, 124
    %v2143 = vpop.permute.xlu0 %2142
    %2144 = vrot.lane.b32.xlu0 %v2056, 124
    %v2145 = vpop.permute.xlu0 %2144
    %2146 = vrot.lane.b32.xlu0 %v2057, 124
    %v2147 = vpop.permute.xlu0 %2146
    %2148 = vrot.lane.b32.xlu0 %v2058, 124
    %v2149 = vpop.permute.xlu0 %2148
    %2150 = vrot.lane.b32.xlu0 %v2059, 124
    %v2151 = vpop.permute.xlu0 %2150
    %2152 = vrot.lane.b32.xlu0 %v2060, 124
    %v2153 = vpop.permute.xlu0 %2152
    %2165 = vrot.lane.b32.xlu0 %v2052, 80
    %v2166 = vpop.permute.xlu0 %2165
    %2167 = vrot.lane.b32.xlu0 %v2053, 80
    %v2168 = vpop.permute.xlu0 %2167
    %2169 = vrot.lane.b32.xlu0 %v2054, 80
    %v2170 = vpop.permute.xlu0 %2169
    %2171 = vrot.lane.b32.xlu0 %v2055, 80
    %v2172 = vpop.permute.xlu0 %2171
    %2173 = vrot.lane.b32.xlu0 %v2056, 80
    %v2174 = vpop.permute.xlu0 %2173
    %2175 = vrot.lane.b32.xlu0 %v2057, 80
    %v2176 = vpop.permute.xlu0 %2175
    %2177 = vrot.lane.b32.xlu0 %v2058, 80
    %v2178 = vpop.permute.xlu0 %2177
    %2179 = vrot.lane.b32.xlu0 %v2059, 80
    %v2180 = vpop.permute.xlu0 %2179
    %2181 = vrot.lane.b32.xlu0 %v2060, 80
    %v2182 = vpop.permute.xlu0 %2181
    %2183 = vrot.lane.b32.xlu0 %v2061, 80
    %v2184 = vpop.permute.xlu0 %2183
    %vm2195 = vcmask 687104
    %v2196 = vsel %vm2195, %v2048, %v2073
    %v2197 = vsel %vm2195, %v2049, %v2075
    %v2198 = vsel %vm2195, %v2050, %v2077
    %v2199 = vsel %vm2195, %v2051, %v2079
    %v2200 = vsel %vm2195, %v2052, %v2081
    %v2201 = vsel %vm2195, %v2053, %v2083
    %v2202 = vsel %vm2195, %v2054, %v2085
    %v2203 = vsel %vm2195, %v2055, %v2087
    %v2204 = vsel %vm2195, %v2056, %v2089
    %v2205 = vsel %vm2195, %v2057, %v2091
    %v2206 = vsel %vm1743, %v2073, %v2104
    %v2207 = vsel %vm1743, %v2075, %v2106
    %v2208 = vsel %vm1743, %v2077, %v2108
    %v2209 = vsel %vm1743, %v2079, %v2110
    %v2210 = vsel %vm1743, %v2081, %v2112
    %v2211 = vsel %vm1743, %v2083, %v2114
    %v2212 = vsel %vm1743, %v2085, %v2116
    %v2213 = vsel %vm1743, %v2087, %v2118
    %v2214 = vsel %vm1743, %v2089, %v2120
    %v2215 = vsel %vm1743, %v2091, %v2122
    %vm2216 = vcmask 1014784
    %v2217 = vsel %vm2216, %v2206, %v2135
    %v2218 = vsel %vm2216, %v2207, %v2137
    %v2219 = vsel %vm2216, %v2208, %v2139
    %v2220 = vsel %vm2216, %v2209, %v2141
    %v2221 = vsel %vm2216, %v2210, %v2143
    %v2222 = vsel %vm2216, %v2211, %v2145
    %v2223 = vsel %vm2216, %v2212, %v2147
    %v2224 = vsel %vm2216, %v2213, %v2149
    %v2225 = vsel %vm2216, %v2214, %v2151
    %v2226 = vsel %vm2216, %v2215, %v2153
    %vm2227 = vcmask 654336
    %v2228 = vsel %vm2227, %v2135, %v2166
    %v2229 = vsel %vm2227, %v2137, %v2168
    %v2230 = vsel %vm2227, %v2139, %v2170
    %v2231 = vsel %vm2227, %v2141, %v2172
    %v2232 = vsel %vm2227, %v2143, %v2174
    %v2233 = vsel %vm2227, %v2145, %v2176
    %v2234 = vsel %vm2227, %v2147, %v2178
    %v2235 = vsel %vm2227, %v2149, %v2180
    %v2236 = vsel %vm2227, %v2151, %v2182
    %v2237 = vsel %vm2227, %v2153, %v2184
    %v2238 = vld [vmem:[%s4] sm:$0xff]
    %v2239 = vld [vmem:[%s4 + $0x8] sm:$0xff]
    %v2240 = vld [vmem:[%s4 + $0x10] sm:$0xff]
    %v2241 = vld [vmem:[%s4 + $0x18] sm:$0xff]
    %v2242 = vld [vmem:[%s4 + $0x20] sm:$0xff]
    %v2243 = vld [vmem:[%s4 + $0x28] sm:$0xff]
    %v2244 = vld [vmem:[%s4 + $0x30] sm:$0xff]
    %v2245 = vld [vmem:[%s4 + $0x38] sm:$0xff]
    %v2246 = vld [vmem:[%s4 + $0x40] sm:$0xff]
    %v2247 = vld [vmem:[%s4 + $0x48] sm:$0xff]
    %v2248 = vld [vmem:[%s4 + $0x50] sm:$0xff]
    %v2249 = vld [vmem:[%s4 + $0x58] sm:$0xff]
    %v2250 = vld [vmem:[%s4 + $0x60] sm:$0xff]
    %v2251 = vld [vmem:[%s4 + $0x68] sm:$0xff]
    %v2252 = vld [vmem:[%s4 + $0x70] sm:$0xff]
    %v2253 = vld [vmem:[%s4 + $0x78] sm:$0xff]
    %v2254 = vld [vmem:[%s4 + $0x80] sm:$0xff]
    %v2255 = vld [vmem:[%s4 + $0x88] sm:$0xff]
    %v2256 = vld [vmem:[%s4 + $0x90] sm:$0xff]
    %v2257 = vld [vmem:[%s4 + $0x98] sm:$0xff]
    %v2258 = vld [vmem:[%s4 + $0xa0] sm:$0xff]
    %v2259 = vld [vmem:[%s4 + $0xa8] sm:$0xff]
    %v2260 = vld [vmem:[%s4 + $0xb0] sm:$0xff]
    %v2261 = vld [vmem:[%s4 + $0xb8] sm:$0xff]
    %v2262 = vld [vmem:[%s4 + $0xc0] sm:$0xff]
    %v2263 = vld [vmem:[%s4 + $0xc8] sm:$0xff]
    %v2264 = vld [vmem:[%s4 + $0xd0] sm:$0xff]
    %v2265 = vld [vmem:[%s4 + $0xd8] sm:$0xff]
    %v2266 = vld [vmem:[%s4 + $0xe0] sm:$0xff]
    %v2267 = vld [vmem:[%s4 + $0xe8] sm:$0xff]
    %v2268 = vld [vmem:[%s4 + $0xf0] sm:$0xff]
    %v2269 = vld [vmem:[%s4 + $0xf8] sm:$0xff]
    %v2270 = vld [vmem:[%s4 + $0x100] sm:$0xff]
    %v2271 = vld [vmem:[%s4 + $0x108] sm:$0xff]
    %v2272 = vld [vmem:[%s4 + $0x110] sm:$0xff]
    %v2273 = vld [vmem:[%s4 + $0x118] sm:$0xff]
    %v2274 = vld [vmem:[%s4 + $0x120] sm:$0xff]
    %v2275 = vld [vmem:[%s4 + $0x128] sm:$0xff]
    %v2276 = vld [vmem:[%s4 + $0x130] sm:$0xff]
    %v2277 = vld [vmem:[%s4 + $0x138] sm:$0xff]
    %v2278 = vld [vmem:[%s4 + $0x140] sm:$0xff]
    %v2279 = vld [vmem:[%s4 + $0x148] sm:$0xff]
    %v2280 = vld [vmem:[%s4 + $0x150] sm:$0xff]
    %v2281 = vld [vmem:[%s4 + $0x158] sm:$0xff]
    %v2282 = vld [vmem:[%s4 + $0x160] sm:$0xff]
    %v2283 = vld [vmem:[%s4 + $0x168] sm:$0xff]
    %v2284 = vld [vmem:[%s4 + $0x170] sm:$0xff]
    %v2285 = vld [vmem:[%s4 + $0x178] sm:$0xff]
    %v2286 = vld [vmem:[%s4 + $0x180] sm:$0xff]
    %v2287 = vld [vmem:[%s4 + $0x188] sm:$0xff]
    %v2288 = vld [vmem:[%s4 + $0x190] sm:$0xff]
    %v2289 = vld [vmem:[%s4 + $0x198] sm:$0xff]
    %v2290 = vld [vmem:[%s4 + $0x1a0] sm:$0x33]
    %v2291 = vpack.c.bf16 %v2197, %v2196
    %v2292 = vpack.c.bf16 %v2218, %v2217
    %v2293 = vpack.c.bf16 %v2229, %v2228
    %v2294 = vpack.c.bf16 %v2168, %v2166
    %v2295 = vpack.c.bf16 %v2199, %v2198
    %v2296 = vpack.c.bf16 %v2220, %v2219
    %v2297 = vpack.c.bf16 %v2231, %v2230
    %v2298 = vpack.c.bf16 %v2172, %v2170
    %v2299 = vpack.c.bf16 %v2201, %v2200
    %v2300 = vpack.c.bf16 %v2222, %v2221
    %v2301 = vpack.c.bf16 %v2233, %v2232
    %v2302 = vpack.c.bf16 %v2176, %v2174
    %v2303 = vpack.c.bf16 %v2203, %v2202
    %v2304 = vpack.c.bf16 %v2224, %v2223
    %v2305 = vpack.c.bf16 %v2235, %v2234
    %v2306 = vpack.c.bf16 %v2180, %v2178
    %v2307 = vpack.c.bf16 %v2205, %v2204
    %v2308 = vpack.c.bf16 %v2226, %v2225
    %v2309 = vpack.c.bf16 %v2237, %v2236
    %v2310 = vpack.c.bf16 %v2184, %v2182
    %v2311 = vld [vmem:[%s5] sm:$0x3]
    %v2313 = vperm.slane %v2311, 0
    %v2314 = vperm.slane %v2311, 1
    %v2370 = vunpack.c.l.b16 %v2238
    %v2371 = vunpack.c.h.b16 %v2238
    %v2372 = vunpack.c.l.b16 %v2239
    %v2373 = vunpack.c.h.b16 %v2239
    %v2374 = vunpack.c.l.b16 %v2240
    %v2375 = vunpack.c.h.b16 %v2240
    %v2376 = vunpack.c.l.b16 %v2241
    %v2377 = vunpack.c.h.b16 %v2241
    %v2378 = vunpack.c.l.b16 %v2242
    %v2379 = vunpack.c.h.b16 %v2242
    %v2380 = vunpack.c.l.b16 %v2243
    %v2381 = vunpack.c.h.b16 %v2243
    %v2382 = vunpack.c.l.b16 %v2244
    %v2383 = vunpack.c.h.b16 %v2244
    %v2384 = vunpack.c.l.b16 %v2245
    %v2385 = vunpack.c.h.b16 %v2245
    %v2386 = vunpack.c.l.b16 %v2246
    %v2387 = vunpack.c.h.b16 %v2246
    %v2388 = vunpack.c.l.b16 %v2247
    %v2389 = vunpack.c.h.b16 %v2247
    %v2390 = vunpack.c.l.b16 %v2248
    %v2391 = vunpack.c.h.b16 %v2248
    %v2392 = vunpack.c.l.b16 %v2249
    %v2393 = vunpack.c.h.b16 %v2249
    %v2394 = vunpack.c.l.b16 %v2250
    %v2395 = vunpack.c.h.b16 %v2250
    %v2396 = vunpack.c.l.b16 %v2251
    %v2397 = vunpack.c.h.b16 %v2251
    %v2398 = vunpack.c.l.b16 %v2252
    %v2399 = vunpack.c.h.b16 %v2252
    %v2400 = vunpack.c.l.b16 %v2253
    %v2401 = vunpack.c.h.b16 %v2253
    %v2402 = vunpack.c.l.b16 %v2254
    %v2403 = vunpack.c.h.b16 %v2254
    %v2404 = vunpack.c.l.b16 %v2255
    %v2405 = vunpack.c.h.b16 %v2255
    %v2406 = vunpack.c.l.b16 %v2256
    %v2407 = vunpack.c.h.b16 %v2256
    %v2408 = vunpack.c.l.b16 %v2257
    %v2409 = vunpack.c.h.b16 %v2257
    %v2410 = vunpack.c.l.b16 %v2258
    %v2411 = vunpack.c.h.b16 %v2258
    %v2412 = vunpack.c.l.b16 %v2259
    %v2413 = vunpack.c.h.b16 %v2259
    %v2414 = vunpack.c.l.b16 %v2260
    %v2415 = vunpack.c.h.b16 %v2260
    %v2416 = vunpack.c.l.b16 %v2261
    %v2417 = vunpack.c.h.b16 %v2261
    %v2418 = vunpack.c.l.b16 %v2262
    %v2419 = vunpack.c.h.b16 %v2262
    %v2420 = vunpack.c.l.b16 %v2263
    %v2421 = vunpack.c.h.b16 %v2263
    %v2422 = vunpack.c.l.b16 %v2264
    %v2423 = vunpack.c.h.b16 %v2264
    %v2424 = vunpack.c.l.b16 %v2265
    %v2425 = vunpack.c.h.b16 %v2265
    %v2426 = vunpack.c.l.b16 %v2266
    %v2427 = vunpack.c.h.b16 %v2266
    %v2428 = vunpack.c.l.b16 %v2267
    %v2429 = vunpack.c.h.b16 %v2267
    %v2430 = vunpack.c.l.b16 %v2268
    %v2431 = vunpack.c.h.b16 %v2268
    %v2432 = vunpack.c.l.b16 %v2269
    %v2433 = vunpack.c.h.b16 %v2269
    %v2434 = vunpack.c.l.b16 %v2270
    %v2435 = vunpack.c.h.b16 %v2270
    %v2436 = vunpack.c.l.b16 %v2271
    %v2437 = vunpack.c.h.b16 %v2271
    %v2438 = vunpack.c.l.b16 %v2272
    %v2439 = vunpack.c.h.b16 %v2272
    %v2440 = vunpack.c.l.b16 %v2273
    %v2441 = vunpack.c.h.b16 %v2273
    %v2442 = vunpack.c.l.b16 %v2274
    %v2443 = vunpack.c.h.b16 %v2274
    %v2444 = vunpack.c.l.b16 %v2275
    %v2445 = vunpack.c.h.b16 %v2275
    %v2446 = vunpack.c.l.b16 %v2276
    %v2447 = vunpack.c.h.b16 %v2276
    %v2448 = vunpack.c.l.b16 %v2277
    %v2449 = vunpack.c.h.b16 %v2277
    %v2450 = vunpack.c.l.b16 %v2278
    %v2451 = vunpack.c.h.b16 %v2278
    %v2452 = vunpack.c.l.b16 %v2279
    %v2453 = vunpack.c.h.b16 %v2279
    %v2454 = vunpack.c.l.b16 %v2280
    %v2455 = vunpack.c.h.b16 %v2280
    %v2456 = vunpack.c.l.b16 %v2281
    %v2457 = vunpack.c.h.b16 %v2281
    %v2458 = vunpack.c.l.b16 %v2282
    %v2459 = vunpack.c.h.b16 %v2282
    %v2460 = vunpack.c.l.b16 %v2283
    %v2461 = vunpack.c.h.b16 %v2283
    %v2462 = vunpack.c.l.b16 %v2284
    %v2463 = vunpack.c.h.b16 %v2284
    %v2464 = vunpack.c.l.b16 %v2285
    %v2465 = vunpack.c.h.b16 %v2285
    %v2466 = vunpack.c.l.b16 %v2286
    %v2467 = vunpack.c.h.b16 %v2286
    %v2468 = vunpack.c.l.b16 %v2287
    %v2469 = vunpack.c.h.b16 %v2287
    %v2470 = vunpack.c.l.b16 %v2288
    %v2471 = vunpack.c.h.b16 %v2288
    %v2472 = vunpack.c.l.b16 %v2289
    %v2473 = vunpack.c.h.b16 %v2289
    %v2474 = vunpack.c.l.b16 %v2290
    %v2475 = vunpack.c.h.b16 %v2290
    %v2476 = vpack.c.b16 %v2372, %v2370
    %v2477 = vpack.c.b16 %v2373, %v2371
    %v2478 = vpack.c.b16 %v2376, %v2374
    %v2479 = vpack.c.b16 %v2377, %v2375
    %v2480 = vpack.c.b16 %v2380, %v2378
    %v2481 = vpack.c.b16 %v2381, %v2379
    %v2482 = vpack.c.b16 %v2384, %v2382
    %v2483 = vpack.c.b16 %v2385, %v2383
    %v2484 = vpack.c.b16 %v2388, %v2386
    %v2485 = vpack.c.b16 %v2389, %v2387
    %v2486 = vpack.c.b16 %v2392, %v2390
    %v2487 = vpack.c.b16 %v2393, %v2391
    %v2488 = vpack.c.b16 %v2396, %v2394
    %v2489 = vpack.c.b16 %v2397, %v2395
    %v2490 = vpack.c.b16 %v2400, %v2398
    %v2491 = vpack.c.b16 %v2401, %v2399
    %v2492 = vpack.c.b16 %v2404, %v2402
    %v2493 = vpack.c.b16 %v2405, %v2403
    %v2494 = vpack.c.b16 %v2408, %v2406
    %v2495 = vpack.c.b16 %v2409, %v2407
    %v2496 = vpack.c.b16 %v2412, %v2410
    %v2497 = vpack.c.b16 %v2413, %v2411
    %v2498 = vpack.c.b16 %v2416, %v2414
    %v2499 = vpack.c.b16 %v2417, %v2415
    %v2500 = vpack.c.b16 %v2420, %v2418
    %v2501 = vpack.c.b16 %v2421, %v2419
    %v2502 = vpack.c.b16 %v2424, %v2422
    %v2503 = vpack.c.b16 %v2425, %v2423
    %v2504 = vpack.c.b16 %v2428, %v2426
    %v2505 = vpack.c.b16 %v2429, %v2427
    %v2506 = vpack.c.b16 %v2432, %v2430
    %v2507 = vpack.c.b16 %v2433, %v2431
    %v2508 = vpack.c.b16 %v2436, %v2434
    %v2509 = vpack.c.b16 %v2437, %v2435
    %v2510 = vpack.c.b16 %v2440, %v2438
    %v2511 = vpack.c.b16 %v2441, %v2439
    %v2512 = vpack.c.b16 %v2444, %v2442
    %v2513 = vpack.c.b16 %v2445, %v2443
    %v2514 = vpack.c.b16 %v2448, %v2446
    %v2515 = vpack.c.b16 %v2449, %v2447
    %v2516 = vpack.c.b16 %v2452, %v2450
    %v2517 = vpack.c.b16 %v2453, %v2451
    %v2518 = vpack.c.b16 %v2456, %v2454
    %v2519 = vpack.c.b16 %v2457, %v2455
    %v2520 = vpack.c.b16 %v2460, %v2458
    %v2521 = vpack.c.b16 %v2461, %v2459
    %v2522 = vpack.c.b16 %v2464, %v2462
    %v2523 = vpack.c.b16 %v2465, %v2463
    %v2524 = vpack.c.b16 %v2468, %v2466
    %v2525 = vpack.c.b16 %v2469, %v2467
    %v2526 = vpack.c.b16 %v2472, %v2470
    %v2527 = vpack.c.b16 %v2473, %v2471
    %v2528 = vpack.c.b16 %v2474, %v2474
    %v2529 = vpack.c.b16 %v2475, %v2475
    %vm2582 = vcmask 293888
    %v2584 = vsel %vm2582, %v2294, 0
    %v2587 = vsel %vm2582, %v2298, 0
    %v2590 = vsel %vm2582, %v2302, 0
    %v2593 = vsel %vm2582, %v2306, 0
    %v2596 = vsel %vm2582, %v2310, 0
    %vm2598 = vcmask 1041408
    %v2600 = vsel %vm2598, %v2528, 0
    %v2603 = vsel %vm2598, %v2529, 0
    %2605 = vmatpush.bf16.msra.mxu0 %v2490
    %2606 = vmatpush.bf16.msra.mxu0 %v2488
    %2607 = vmatpush.bf16.msra.mxu0 %v2486
    %2608 = vmatpush.bf16.msra.mxu0 %v2484
    %2609 = vmatpush.bf16.msra.mxu0 %v2482
    %2610 = vmatpush.bf16.msra.mxu0 %v2480
    %2611 = vmatpush.bf16.msra.mxu0 %v2478
    %2612 = vmatpush.bf16.msra.mxu0 %v2476
    %2613 = vmatmul.bf16.gmra.mxu0 %v2291
    %v2614 = vpop.f32.mrf.mxu0
    %v2615 = vadd.f32 %v2313, %v2614
    %v2616 = vpop.f32.mrf.mxu0
    %v2617 = vadd.f32 %v2313, %v2616
    %2618 = vmatmul.bf16.gmra.mxu0 %v2295
    %v2619 = vpop.f32.mrf.mxu0
    %v2620 = vadd.f32 %v2313, %v2619
    %v2621 = vpop.f32.mrf.mxu0
    %v2622 = vadd.f32 %v2313, %v2621
    %2623 = vmatmul.bf16.gmra.mxu0 %v2299
    %v2624 = vpop.f32.mrf.mxu0
    %v2625 = vadd.f32 %v2313, %v2624
    %v2626 = vpop.f32.mrf.mxu0
    %v2627 = vadd.f32 %v2313, %v2626
    %2628 = vmatmul.bf16.gmra.mxu0 %v2303
    %v2629 = vpop.f32.mrf.mxu0
    %v2630 = vadd.f32 %v2313, %v2629
    %v2631 = vpop.f32.mrf.mxu0
    %v2632 = vadd.f32 %v2313, %v2631
    %2633 = vmatmul.bf16.gmra.mxu0 %v2307
    %v2634 = vpop.f32.mrf.mxu0
    %v2635 = vadd.f32 %v2313, %v2634
    %v2636 = vpop.f32.mrf.mxu0
    %v2637 = vadd.f32 %v2313, %v2636
    %2638 = vdwg.mxu0
    %2639 = vmatpush.bf16.msra.mxu0 %v2506
    %2640 = vmatpush.bf16.msra.mxu0 %v2504
    %2641 = vmatpush.bf16.msra.mxu0 %v2502
    %2642 = vmatpush.bf16.msra.mxu0 %v2500
    %2643 = vmatpush.bf16.msra.mxu0 %v2498
    %2644 = vmatpush.bf16.msra.mxu0 %v2496
    %2645 = vmatpush.bf16.msra.mxu0 %v2494
    %2646 = vmatpush.bf16.msra.mxu0 %v2492
    %2647 = vmatmul.bf16.gmra.mxu0 %v2292
    %v2648 = vpop.f32.mrf.mxu0
    %v2649 = vadd.f32 %v2615, %v2648
    %v2650 = vpop.f32.mrf.mxu0
    %v2651 = vadd.f32 %v2617, %v2650
    %2652 = vmatmul.bf16.gmra.mxu0 %v2296
    %v2653 = vpop.f32.mrf.mxu0
    %v2654 = vadd.f32 %v2620, %v2653
    %v2655 = vpop.f32.mrf.mxu0
    %v2656 = vadd.f32 %v2622, %v2655
    %2657 = vmatmul.bf16.gmra.mxu0 %v2300
    %v2658 = vpop.f32.mrf.mxu0
    %v2659 = vadd.f32 %v2625, %v2658
    %v2660 = vpop.f32.mrf.mxu0
    %v2661 = vadd.f32 %v2627, %v2660
    %2662 = vmatmul.bf16.gmra.mxu0 %v2304
    %v2663 = vpop.f32.mrf.mxu0
    %v2664 = vadd.f32 %v2630, %v2663
    %v2665 = vpop.f32.mrf.mxu0
    %v2666 = vadd.f32 %v2632, %v2665
    %2667 = vmatmul.bf16.gmra.mxu0 %v2308
    %v2668 = vpop.f32.mrf.mxu0
    %v2669 = vadd.f32 %v2635, %v2668
    %v2670 = vpop.f32.mrf.mxu0
    %v2671 = vadd.f32 %v2637, %v2670
    %2672 = vdwg.mxu0
    %2673 = vmatpush.bf16.msra.mxu0 %v2522
    %2674 = vmatpush.bf16.msra.mxu0 %v2520
    %2675 = vmatpush.bf16.msra.mxu0 %v2518
    %2676 = vmatpush.bf16.msra.mxu0 %v2516
    %2677 = vmatpush.bf16.msra.mxu0 %v2514
    %2678 = vmatpush.bf16.msra.mxu0 %v2512
    %2679 = vmatpush.bf16.msra.mxu0 %v2510
    %2680 = vmatpush.bf16.msra.mxu0 %v2508
    %2681 = vmatmul.bf16.gmra.mxu0 %v2293
    %v2682 = vpop.f32.mrf.mxu0
    %v2683 = vadd.f32 %v2649, %v2682
    %v2684 = vpop.f32.mrf.mxu0
    %v2685 = vadd.f32 %v2651, %v2684
    %2686 = vmatmul.bf16.gmra.mxu0 %v2297
    %v2687 = vpop.f32.mrf.mxu0
    %v2688 = vadd.f32 %v2654, %v2687
    %v2689 = vpop.f32.mrf.mxu0
    %v2690 = vadd.f32 %v2656, %v2689
    %2691 = vmatmul.bf16.gmra.mxu0 %v2301
    %v2692 = vpop.f32.mrf.mxu0
    %v2693 = vadd.f32 %v2659, %v2692
    %v2694 = vpop.f32.mrf.mxu0
    %v2695 = vadd.f32 %v2661, %v2694
    %2696 = vmatmul.bf16.gmra.mxu0 %v2305
    %v2697 = vpop.f32.mrf.mxu0
    %v2698 = vadd.f32 %v2664, %v2697
    %v2699 = vpop.f32.mrf.mxu0
    %v2700 = vadd.f32 %v2666, %v2699
    %2701 = vmatmul.bf16.gmra.mxu0 %v2309
    %v2702 = vpop.f32.mrf.mxu0
    %v2703 = vadd.f32 %v2669, %v2702
    %v2704 = vpop.f32.mrf.mxu0
    %v2705 = vadd.f32 %v2671, %v2704
    %2706 = vdwg.mxu0
    %2707 = vmatpush.bf16.msra.mxu0 0
    %2708 = vmatpush.bf16.msra.mxu0 0
    %2709 = vmatpush.bf16.msra.mxu0 0
    %2710 = vmatpush.bf16.msra.mxu0 0
    %2711 = vmatpush.bf16.msra.mxu0 0
    %2712 = vmatpush.bf16.msra.mxu0 %v2600
    %2713 = vmatpush.bf16.msra.mxu0 %v2526
    %2714 = vmatpush.bf16.msra.mxu0 %v2524
    %2715 = vmatmul.bf16.gmra.mxu0 %v2584
    %v2716 = vpop.f32.mrf.mxu0
    %v2717 = vadd.f32 %v2683, %v2716
    %v2718 = vpop.f32.mrf.mxu0
    %v2719 = vadd.f32 %v2685, %v2718
    %2720 = vmatmul.bf16.gmra.mxu0 %v2587
    %v2721 = vpop.f32.mrf.mxu0
    %v2722 = vadd.f32 %v2688, %v2721
    %v2723 = vpop.f32.mrf.mxu0
    %v2724 = vadd.f32 %v2690, %v2723
    %2725 = vmatmul.bf16.gmra.mxu0 %v2590
    %v2726 = vpop.f32.mrf.mxu0
    %v2727 = vadd.f32 %v2693, %v2726
    %v2728 = vpop.f32.mrf.mxu0
    %v2729 = vadd.f32 %v2695, %v2728
    %2730 = vmatmul.bf16.gmra.mxu0 %v2593
    %v2731 = vpop.f32.mrf.mxu0
    %v2732 = vadd.f32 %v2698, %v2731
    %v2733 = vpop.f32.mrf.mxu0
    %v2734 = vadd.f32 %v2700, %v2733
    %2735 = vmatmul.bf16.gmra.mxu0 %v2596
    %v2736 = vpop.f32.mrf.mxu0
    %v2737 = vadd.f32 %v2703, %v2736
    %v2738 = vpop.f32.mrf.mxu0
    %v2739 = vadd.f32 %v2705, %v2738
    %2740 = vdwg.mxu0
    %2741 = vmatpush.bf16.msra.mxu0 %v2491
    %2742 = vmatpush.bf16.msra.mxu0 %v2489
    %2743 = vmatpush.bf16.msra.mxu0 %v2487
    %2744 = vmatpush.bf16.msra.mxu0 %v2485
    %2745 = vmatpush.bf16.msra.mxu0 %v2483
    %2746 = vmatpush.bf16.msra.mxu0 %v2481
    %2747 = vmatpush.bf16.msra.mxu0 %v2479
    %2748 = vmatpush.bf16.msra.mxu0 %v2477
    %2749 = vmatmul.bf16.gmra.mxu0 %v2291
    %v2750 = vpop.f32.mrf.mxu0
    %v2751 = vadd.f32 %v2314, %v2750
    %v2752 = vpop.f32.mrf.mxu0
    %v2753 = vadd.f32 %v2314, %v2752
    %2754 = vmatmul.bf16.gmra.mxu0 %v2295
    %v2755 = vpop.f32.mrf.mxu0
    %v2756 = vadd.f32 %v2314, %v2755
    %v2757 = vpop.f32.mrf.mxu0
    %v2758 = vadd.f32 %v2314, %v2757
    %2759 = vmatmul.bf16.gmra.mxu0 %v2299
    %v2760 = vpop.f32.mrf.mxu0
    %v2761 = vadd.f32 %v2314, %v2760
    %v2762 = vpop.f32.mrf.mxu0
    %v2763 = vadd.f32 %v2314, %v2762
    %2764 = vmatmul.bf16.gmra.mxu0 %v2303
    %v2765 = vpop.f32.mrf.mxu0
    %v2766 = vadd.f32 %v2314, %v2765
    %v2767 = vpop.f32.mrf.mxu0
    %v2768 = vadd.f32 %v2314, %v2767
    %2769 = vmatmul.bf16.gmra.mxu0 %v2307
    %v2770 = vpop.f32.mrf.mxu0
    %v2771 = vadd.f32 %v2314, %v2770
    %v2772 = vpop.f32.mrf.mxu0
    %v2773 = vadd.f32 %v2314, %v2772
    %2774 = vdwg.mxu0
    %2775 = vmatpush.bf16.msra.mxu0 %v2507
    %2776 = vmatpush.bf16.msra.mxu0 %v2505
    %2777 = vmatpush.bf16.msra.mxu0 %v2503
    %2778 = vmatpush.bf16.msra.mxu0 %v2501
    %2779 = vmatpush.bf16.msra.mxu0 %v2499
    %2780 = vmatpush.bf16.msra.mxu0 %v2497
    %2781 = vmatpush.bf16.msra.mxu0 %v2495
    %2782 = vmatpush.bf16.msra.mxu0 %v2493
    %2783 = vmatmul.bf16.gmra.mxu0 %v2292
    %v2784 = vpop.f32.mrf.mxu0
    %v2785 = vadd.f32 %v2751, %v2784
    %v2786 = vpop.f32.mrf.mxu0
    %v2787 = vadd.f32 %v2753, %v2786
    %2788 = vmatmul.bf16.gmra.mxu0 %v2296
    %v2789 = vpop.f32.mrf.mxu0
    %v2790 = vadd.f32 %v2756, %v2789
    %v2791 = vpop.f32.mrf.mxu0
    %v2792 = vadd.f32 %v2758, %v2791
    %2793 = vmatmul.bf16.gmra.mxu0 %v2300
    %v2794 = vpop.f32.mrf.mxu0
    %v2795 = vadd.f32 %v2761, %v2794
    %v2796 = vpop.f32.mrf.mxu0
    %v2797 = vadd.f32 %v2763, %v2796
    %2798 = vmatmul.bf16.gmra.mxu0 %v2304
    %v2799 = vpop.f32.mrf.mxu0
    %v2800 = vadd.f32 %v2766, %v2799
    %v2801 = vpop.f32.mrf.mxu0
    %v2802 = vadd.f32 %v2768, %v2801
    %2803 = vmatmul.bf16.gmra.mxu0 %v2308
    %v2804 = vpop.f32.mrf.mxu0
    %v2805 = vadd.f32 %v2771, %v2804
    %v2806 = vpop.f32.mrf.mxu0
    %v2807 = vadd.f32 %v2773, %v2806
    %2808 = vdwg.mxu0
    %2809 = vmatpush.bf16.msra.mxu0 %v2523
    %2810 = vmatpush.bf16.msra.mxu0 %v2521
    %2811 = vmatpush.bf16.msra.mxu0 %v2519
    %2812 = vmatpush.bf16.msra.mxu0 %v2517
    %2813 = vmatpush.bf16.msra.mxu0 %v2515
    %2814 = vmatpush.bf16.msra.mxu0 %v2513
    %2815 = vmatpush.bf16.msra.mxu0 %v2511
    %2816 = vmatpush.bf16.msra.mxu0 %v2509
    %2817 = vmatmul.bf16.gmra.mxu0 %v2293
    %v2818 = vpop.f32.mrf.mxu0
    %v2819 = vadd.f32 %v2785, %v2818
    %v2820 = vpop.f32.mrf.mxu0
    %v2821 = vadd.f32 %v2787, %v2820
    %2822 = vmatmul.bf16.gmra.mxu0 %v2297
    %v2823 = vpop.f32.mrf.mxu0
    %v2824 = vadd.f32 %v2790, %v2823
    %v2825 = vpop.f32.mrf.mxu0
    %v2826 = vadd.f32 %v2792, %v2825
    %2827 = vmatmul.bf16.gmra.mxu0 %v2301
    %v2828 = vpop.f32.mrf.mxu0
    %v2829 = vadd.f32 %v2795, %v2828
    %v2830 = vpop.f32.mrf.mxu0
    %v2831 = vadd.f32 %v2797, %v2830
    %2832 = vmatmul.bf16.gmra.mxu0 %v2305
    %v2833 = vpop.f32.mrf.mxu0
    %v2834 = vadd.f32 %v2800, %v2833
    %v2835 = vpop.f32.mrf.mxu0
    %v2836 = vadd.f32 %v2802, %v2835
    %2837 = vmatmul.bf16.gmra.mxu0 %v2309
    %v2838 = vpop.f32.mrf.mxu0
    %v2839 = vadd.f32 %v2805, %v2838
    %v2840 = vpop.f32.mrf.mxu0
    %v2841 = vadd.f32 %v2807, %v2840
    %2842 = vdwg.mxu0
    %2843 = vmatpush.bf16.msra.mxu0 0
    %2844 = vmatpush.bf16.msra.mxu0 0
    %2845 = vmatpush.bf16.msra.mxu0 0
    %2846 = vmatpush.bf16.msra.mxu0 0
    %2847 = vmatpush.bf16.msra.mxu0 0
    %2848 = vmatpush.bf16.msra.mxu0 %v2603
    %2849 = vmatpush.bf16.msra.mxu0 %v2527
    %2850 = vmatpush.bf16.msra.mxu0 %v2525
    %2851 = vmatmul.bf16.gmra.mxu0 %v2584
    %v2852 = vpop.f32.mrf.mxu0
    %v2853 = vadd.f32 %v2819, %v2852
    %v2854 = vpop.f32.mrf.mxu0
    %v2855 = vadd.f32 %v2821, %v2854
    %2856 = vmatmul.bf16.gmra.mxu0 %v2587
    %v2857 = vpop.f32.mrf.mxu0
    %v2858 = vadd.f32 %v2824, %v2857
    %v2859 = vpop.f32.mrf.mxu0
    %v2860 = vadd.f32 %v2826, %v2859
    %2861 = vmatmul.bf16.gmra.mxu0 %v2590
    %v2862 = vpop.f32.mrf.mxu0
    %v2863 = vadd.f32 %v2829, %v2862
    %v2864 = vpop.f32.mrf.mxu0
    %v2865 = vadd.f32 %v2831, %v2864
    %2866 = vmatmul.bf16.gmra.mxu0 %v2593
    %v2867 = vpop.f32.mrf.mxu0
    %v2868 = vadd.f32 %v2834, %v2867
    %v2869 = vpop.f32.mrf.mxu0
    %v2870 = vadd.f32 %v2836, %v2869
    %2871 = vmatmul.bf16.gmra.mxu0 %v2596
    %v2872 = vpop.f32.mrf.mxu0
    %v2873 = vadd.f32 %v2839, %v2872
    %v2874 = vpop.f32.mrf.mxu0
    %v2875 = vadd.f32 %v2841, %v2874
    %2876 = vdwg.mxu0
    %v2877 = vmax.f32 %v2717, 0.0
    %v2878 = vmax.f32 %v2853, 0.0
    %v2879 = vmax.f32 %v2719, 0.0
    %v2880 = vmax.f32 %v2855, 0.0
    %v2881 = vmax.f32 %v2722, 0.0
    %v2882 = vmax.f32 %v2858, 0.0
    %v2883 = vmax.f32 %v2724, 0.0
    %v2884 = vmax.f32 %v2860, 0.0
    %v2885 = vmax.f32 %v2727, 0.0
    %v2886 = vmax.f32 %v2863, 0.0
    %v2887 = vmax.f32 %v2729, 0.0
    %v2888 = vmax.f32 %v2865, 0.0
    %v2889 = vmax.f32 %v2732, 0.0
    %v2890 = vmax.f32 %v2868, 0.0
    %v2891 = vmax.f32 %v2734, 0.0
    %v2892 = vmax.f32 %v2870, 0.0
    %v2893 = vmax.f32 %v2737, 0.0
    %v2894 = vmax.f32 %v2873, 0.0
    %v2895 = vmax.f32 %v2739, 0.0
    %v2896 = vmax.f32 %v2875, 0.0
    %v2897 = vld [vmem:[%s6] sm:$0xf]
    %v2898 = vld [vmem:[%s6 + $0x4] sm:$0xf]
    %v2899 = vld [vmem:[%s6 + $0x8] sm:$0xf]
    %v2900 = vld [vmem:[%s6 + $0xc] sm:$0xf]
    %v2901 = vld [vmem:[%s6 + $0x10] sm:$0xf]
    %v2902 = vld [vmem:[%s6 + $0x14] sm:$0xf]
    %v2903 = vld [vmem:[%s6 + $0x18] sm:$0xf]
    %v2904 = vld [vmem:[%s6 + $0x1c] sm:$0xf]
    %v2905 = vld [vmem:[%s6 + $0x20] sm:$0xf]
    %v2906 = vld [vmem:[%s6 + $0x24] sm:$0xf]
    %v2907 = vld [vmem:[%s6 + $0x28] sm:$0xf]
    %v2908 = vld [vmem:[%s6 + $0x2c] sm:$0xf]
    %v2909 = vld [vmem:[%s6 + $0x30] sm:$0xf]
    %v2910 = vld [vmem:[%s6 + $0x34] sm:$0xf]
    %v2911 = vld [vmem:[%s6 + $0x38] sm:$0xf]
    %v2912 = vld [vmem:[%s6 + $0x3c] sm:$0xf]
    %v2913 = vld [vmem:[%s6 + $0x40] sm:$0xf]
    %v2914 = vld [vmem:[%s6 + $0x44] sm:$0xf]
    %v2915 = vld [vmem:[%s6 + $0x48] sm:$0xf]
    %v2916 = vld [vmem:[%s6 + $0x4c] sm:$0xf]
    %v2917 = vpack.c.bf16 %v2879, %v2877
    %v2918 = vpack.c.bf16 %v2880, %v2878
    %v2919 = vpack.c.bf16 %v2883, %v2881
    %v2920 = vpack.c.bf16 %v2884, %v2882
    %v2921 = vpack.c.bf16 %v2887, %v2885
    %v2922 = vpack.c.bf16 %v2888, %v2886
    %v2923 = vpack.c.bf16 %v2891, %v2889
    %v2924 = vpack.c.bf16 %v2892, %v2890
    %v2925 = vpack.c.bf16 %v2895, %v2893
    %v2926 = vpack.c.bf16 %v2896, %v2894
    %v2947 = vunpack.c.l.b16 %v2897
    %v2948 = vunpack.c.l.b16 %v2898
    %v2949 = vunpack.c.l.b16 %v2899
    %v2950 = vunpack.c.l.b16 %v2900
    %v2951 = vunpack.c.l.b16 %v2901
    %v2952 = vunpack.c.l.b16 %v2902
    %v2953 = vunpack.c.l.b16 %v2903
    %v2954 = vunpack.c.l.b16 %v2904
    %v2955 = vunpack.c.l.b16 %v2905
    %v2956 = vunpack.c.l.b16 %v2906
    %v2957 = vunpack.c.l.b16 %v2907
    %v2958 = vunpack.c.l.b16 %v2908
    %v2959 = vunpack.c.l.b16 %v2909
    %v2960 = vunpack.c.l.b16 %v2910
    %v2961 = vunpack.c.l.b16 %v2911
    %v2962 = vunpack.c.l.b16 %v2912
    %v2963 = vunpack.c.l.b16 %v2913
    %v2964 = vunpack.c.l.b16 %v2914
    %v2965 = vunpack.c.l.b16 %v2915
    %v2966 = vunpack.c.l.b16 %v2916
    %v2967 = vpack.c.b16 %v2948, %v2947
    %v2968 = vpack.c.b16 %v2950, %v2949
    %v2969 = vpack.c.b16 %v2952, %v2951
    %v2970 = vpack.c.b16 %v2954, %v2953
    %v2971 = vpack.c.b16 %v2956, %v2955
    %v2972 = vpack.c.b16 %v2958, %v2957
    %v2973 = vpack.c.b16 %v2960, %v2959
    %v2974 = vpack.c.b16 %v2962, %v2961
    %v2975 = vpack.c.b16 %v2964, %v2963
    %v2976 = vpack.c.b16 %v2966, %v2965
    %vm2987 = vcmask 261120
    %v2989 = vsel %vm2987, %v2918, 0
    %v2992 = vsel %vm2987, %v2920, 0
    %v2995 = vsel %vm2987, %v2922, 0
    %v2998 = vsel %vm2987, %v2924, 0
    %v3001 = vsel %vm2987, %v2926, 0
    %3003 = vmatpush.bf16.msra.mxu0 %v2974
    %3004 = vmatpush.bf16.msra.mxu0 %v2973
    %3005 = vmatpush.bf16.msra.mxu0 %v2972
    %3006 = vmatpush.bf16.msra.mxu0 %v2971
    %3007 = vmatpush.bf16.msra.mxu0 %v2970
    %3008 = vmatpush.bf16.msra.mxu0 %v2969
    %3009 = vmatpush.bf16.msra.mxu0 %v2968
    %3010 = vmatpush.bf16.msra.mxu0 %v2967
    %3011 = vmatmul.bf16.gmra.mxu0 %v2917
    %v3012 = vpop.f32.mrf.mxu0
    %v3013 = vadd.f32 0.0, %v3012
    %v3014 = vpop.f32.mrf.mxu0
    %v3015 = vadd.f32 0.0, %v3014
    %3016 = vmatmul.bf16.gmra.mxu0 %v2919
    %v3017 = vpop.f32.mrf.mxu0
    %v3018 = vadd.f32 0.0, %v3017
    %v3019 = vpop.f32.mrf.mxu0
    %v3020 = vadd.f32 0.0, %v3019
    %3021 = vmatmul.bf16.gmra.mxu0 %v2921
    %v3022 = vpop.f32.mrf.mxu0
    %v3023 = vadd.f32 0.0, %v3022
    %v3024 = vpop.f32.mrf.mxu0
    %v3025 = vadd.f32 0.0, %v3024
    %3026 = vmatmul.bf16.gmra.mxu0 %v2923
    %v3027 = vpop.f32.mrf.mxu0
    %v3028 = vadd.f32 0.0, %v3027
    %v3029 = vpop.f32.mrf.mxu0
    %v3030 = vadd.f32 0.0, %v3029
    %3031 = vmatmul.bf16.gmra.mxu0 %v2925
    %v3032 = vpop.f32.mrf.mxu0
    %v3033 = vadd.f32 0.0, %v3032
    %v3034 = vpop.f32.mrf.mxu0
    %v3035 = vadd.f32 0.0, %v3034
    %3036 = vdwg.mxu0
    %3037 = vmatpush.bf16.msra.mxu0 0
    %3038 = vmatpush.bf16.msra.mxu0 0
    %3039 = vmatpush.bf16.msra.mxu0 0
    %3040 = vmatpush.bf16.msra.mxu0 0
    %3041 = vmatpush.bf16.msra.mxu0 0
    %3042 = vmatpush.bf16.msra.mxu0 0
    %3043 = vmatpush.bf16.msra.mxu0 %v2976
    %3044 = vmatpush.bf16.msra.mxu0 %v2975
    %3045 = vmatmul.bf16.gmra.mxu0 %v2989
    %v3046 = vpop.f32.mrf.mxu0
    %v3047 = vadd.f32 %v3013, %v3046
    %v3048 = vpop.f32.mrf.mxu0
    %v3049 = vadd.f32 %v3015, %v3048
    %3050 = vmatmul.bf16.gmra.mxu0 %v2992
    %v3051 = vpop.f32.mrf.mxu0
    %v3052 = vadd.f32 %v3018, %v3051
    %v3053 = vpop.f32.mrf.mxu0
    %v3054 = vadd.f32 %v3020, %v3053
    %3055 = vmatmul.bf16.gmra.mxu0 %v2995
    %v3056 = vpop.f32.mrf.mxu0
    %v3057 = vadd.f32 %v3023, %v3056
    %v3058 = vpop.f32.mrf.mxu0
    %v3059 = vadd.f32 %v3025, %v3058
    %3060 = vmatmul.bf16.gmra.mxu0 %v2998
    %v3061 = vpop.f32.mrf.mxu0
    %v3062 = vadd.f32 %v3028, %v3061
    %v3063 = vpop.f32.mrf.mxu0
    %v3064 = vadd.f32 %v3030, %v3063
    %3065 = vmatmul.bf16.gmra.mxu0 %v3001
    %v3066 = vpop.f32.mrf.mxu0
    %v3067 = vadd.f32 %v3033, %v3066
    %v3068 = vpop.f32.mrf.mxu0
    %v3069 = vadd.f32 %v3035, %v3068
    %3070 = vdwg.mxu0
    %s3071 = scalar_lea.vmem %s6, 80
    %v3072 = vld [vmem:[%s3071] sm:$0xf]
    %v3073 = vld [vmem:[%s3071 + $0x4] sm:$0xf]
    %v3074 = vld [vmem:[%s3071 + $0x8] sm:$0xf]
    %v3075 = vld [vmem:[%s3071 + $0xc] sm:$0xf]
    %v3076 = vld [vmem:[%s3071 + $0x10] sm:$0xf]
    %v3077 = vld [vmem:[%s3071 + $0x14] sm:$0xf]
    %v3078 = vld [vmem:[%s3071 + $0x18] sm:$0xf]
    %v3079 = vld [vmem:[%s3071 + $0x1c] sm:$0xf]
    %v3080 = vld [vmem:[%s3071 + $0x20] sm:$0xf]
    %v3081 = vld [vmem:[%s3071 + $0x24] sm:$0xf]
    %v3082 = vld [vmem:[%s3071 + $0x28] sm:$0xf]
    %v3083 = vld [vmem:[%s3071 + $0x2c] sm:$0xf]
    %v3084 = vld [vmem:[%s3071 + $0x30] sm:$0xf]
    %v3085 = vld [vmem:[%s3071 + $0x34] sm:$0xf]
    %v3086 = vld [vmem:[%s3071 + $0x38] sm:$0xf]
    %v3087 = vld [vmem:[%s3071 + $0x3c] sm:$0xf]
    %v3088 = vld [vmem:[%s3071 + $0x40] sm:$0xf]
    %v3089 = vld [vmem:[%s3071 + $0x44] sm:$0xf]
    %v3090 = vld [vmem:[%s3071 + $0x48] sm:$0xf]
    %v3091 = vld [vmem:[%s3071 + $0x4c] sm:$0xf]
    %v3112 = vunpack.c.l.b16 %v3072
    %v3113 = vunpack.c.l.b16 %v3073
    %v3114 = vunpack.c.l.b16 %v3074
    %v3115 = vunpack.c.l.b16 %v3075
    %v3116 = vunpack.c.l.b16 %v3076
    %v3117 = vunpack.c.l.b16 %v3077
    %v3118 = vunpack.c.l.b16 %v3078
    %v3119 = vunpack.c.l.b16 %v3079
    %v3120 = vunpack.c.l.b16 %v3080
    %v3121 = vunpack.c.l.b16 %v3081
    %v3122 = vunpack.c.l.b16 %v3082
    %v3123 = vunpack.c.l.b16 %v3083
    %v3124 = vunpack.c.l.b16 %v3084
    %v3125 = vunpack.c.l.b16 %v3085
    %v3126 = vunpack.c.l.b16 %v3086
    %v3127 = vunpack.c.l.b16 %v3087
    %v3128 = vunpack.c.l.b16 %v3088
    %v3129 = vunpack.c.l.b16 %v3089
    %v3130 = vunpack.c.l.b16 %v3090
    %v3131 = vunpack.c.l.b16 %v3091
    %v3132 = vpack.c.b16 %v3113, %v3112
    %v3133 = vpack.c.b16 %v3115, %v3114
    %v3134 = vpack.c.b16 %v3117, %v3116
    %v3135 = vpack.c.b16 %v3119, %v3118
    %v3136 = vpack.c.b16 %v3121, %v3120
    %v3137 = vpack.c.b16 %v3123, %v3122
    %v3138 = vpack.c.b16 %v3125, %v3124
    %v3139 = vpack.c.b16 %v3127, %v3126
    %v3140 = vpack.c.b16 %v3129, %v3128
    %v3141 = vpack.c.b16 %v3131, %v3130
    %3152 = vmatpush.bf16.msra.mxu0 %v3139
    %3153 = vmatpush.bf16.msra.mxu0 %v3138
    %3154 = vmatpush.bf16.msra.mxu0 %v3137
    %3155 = vmatpush.bf16.msra.mxu0 %v3136
    %3156 = vmatpush.bf16.msra.mxu0 %v3135
    %3157 = vmatpush.bf16.msra.mxu0 %v3134
    %3158 = vmatpush.bf16.msra.mxu0 %v3133
    %3159 = vmatpush.bf16.msra.mxu0 %v3132
    %3160 = vmatmul.bf16.gmra.mxu0 %v2917
    %v3161 = vpop.f32.mrf.mxu0
    %v3162 = vadd.f32 0.0, %v3161
    %v3163 = vpop.f32.mrf.mxu0
    %v3164 = vadd.f32 0.0, %v3163
    %3165 = vmatmul.bf16.gmra.mxu0 %v2919
    %v3166 = vpop.f32.mrf.mxu0
    %v3167 = vadd.f32 0.0, %v3166
    %v3168 = vpop.f32.mrf.mxu0
    %v3169 = vadd.f32 0.0, %v3168
    %3170 = vmatmul.bf16.gmra.mxu0 %v2921
    %v3171 = vpop.f32.mrf.mxu0
    %v3172 = vadd.f32 0.0, %v3171
    %v3173 = vpop.f32.mrf.mxu0
    %v3174 = vadd.f32 0.0, %v3173
    %3175 = vmatmul.bf16.gmra.mxu0 %v2923
    %v3176 = vpop.f32.mrf.mxu0
    %v3177 = vadd.f32 0.0, %v3176
    %v3178 = vpop.f32.mrf.mxu0
    %v3179 = vadd.f32 0.0, %v3178
    %3180 = vmatmul.bf16.gmra.mxu0 %v2925
    %v3181 = vpop.f32.mrf.mxu0
    %v3182 = vadd.f32 0.0, %v3181
    %v3183 = vpop.f32.mrf.mxu0
    %v3184 = vadd.f32 0.0, %v3183
    %3185 = vdwg.mxu0
    %3186 = vmatpush.bf16.msra.mxu0 0
    %3187 = vmatpush.bf16.msra.mxu0 0
    %3188 = vmatpush.bf16.msra.mxu0 0
    %3189 = vmatpush.bf16.msra.mxu0 0
    %3190 = vmatpush.bf16.msra.mxu0 0
    %3191 = vmatpush.bf16.msra.mxu0 0
    %3192 = vmatpush.bf16.msra.mxu0 %v3141
    %3193 = vmatpush.bf16.msra.mxu0 %v3140
    %3194 = vmatmul.bf16.gmra.mxu0 %v2989
    %v3195 = vpop.f32.mrf.mxu0
    %v3196 = vadd.f32 %v3162, %v3195
    %v3197 = vpop.f32.mrf.mxu0
    %v3198 = vadd.f32 %v3164, %v3197
    %3199 = vmatmul.bf16.gmra.mxu0 %v2992
    %v3200 = vpop.f32.mrf.mxu0
    %v3201 = vadd.f32 %v3167, %v3200
    %v3202 = vpop.f32.mrf.mxu0
    %v3203 = vadd.f32 %v3169, %v3202
    %3204 = vmatmul.bf16.gmra.mxu0 %v2995
    %v3205 = vpop.f32.mrf.mxu0
    %v3206 = vadd.f32 %v3172, %v3205
    %v3207 = vpop.f32.mrf.mxu0
    %v3208 = vadd.f32 %v3174, %v3207
    %3209 = vmatmul.bf16.gmra.mxu0 %v2998
    %v3210 = vpop.f32.mrf.mxu0
    %v3211 = vadd.f32 %v3177, %v3210
    %v3212 = vpop.f32.mrf.mxu0
    %v3213 = vadd.f32 %v3179, %v3212
    %3214 = vmatmul.bf16.gmra.mxu0 %v3001
    %v3215 = vpop.f32.mrf.mxu0
    %v3216 = vadd.f32 %v3182, %v3215
    %v3217 = vpop.f32.mrf.mxu0
    %v3218 = vadd.f32 %v3184, %v3217
    %3219 = vdwg.mxu0
    %v3220 = vmax.f32 %v3047, %v3196
    %v3221 = vmax.f32 %v3049, %v3198
    %v3222 = vmax.f32 %v3052, %v3201
    %v3223 = vmax.f32 %v3054, %v3203
    %v3224 = vmax.f32 %v3057, %v3206
    %v3225 = vmax.f32 %v3059, %v3208
    %v3226 = vmax.f32 %v3062, %v3211
    %v3227 = vmax.f32 %v3064, %v3213
    %v3228 = vmax.f32 %v3067, %v3216
    %v3229 = vmax.f32 %v3069, %v3218
    %v3230 = vmax.f32 %v3220, %v3221
    %v3231 = vmax.f32 %v3222, %v3223
    %v3232 = vmax.f32 %v3224, %v3225
    %v3233 = vmax.f32 %v3226, %v3227
    %v3234 = vmax.f32 %v3228, %v3229
    %3236 = vrot.lane.b32.xlu0 %v3231, 80
    %v3237 = vpop.permute.xlu0 %3236
    %3240 = vrot.lane.b32.xlu0 %v3232, 32
    %v3241 = vpop.permute.xlu0 %3240
    %3244 = vrot.lane.b32.xlu0 %v3233, 112
    %v3245 = vpop.permute.xlu0 %3244
    %3248 = vrot.lane.b32.xlu0 %v3234, 64
    %v3249 = vpop.permute.xlu0 %3248
    %v3251 = vsel %vm2227, %v3230, %v3237
    %v3252 = vsel %vm2987, %v3237, %v3241
    %vm3253 = vcmask 916480
    %v3254 = vsel %vm3253, %v3252, %v3245
    %vm3255 = vcmask 523264
    %v3256 = vsel %vm3255, %v3245, %v3249
    %v3257 = vld [vmem:[%s7] sm:$0xff]
    %v3258 = vld [vmem:[%s7 + $0x8] sm:$0xff]
    %v3259 = vld [vmem:[%s7 + $0x10] sm:$0xff]
    %v3260 = vld [vmem:[%s7 + $0x18] sm:$0xff]
    %v3261 = vld [vmem:[%s7 + $0x20] sm:$0xff]
    %v3262 = vld [vmem:[%s7 + $0x28] sm:$0xff]
    %v3263 = vld [vmem:[%s7 + $0x30] sm:$0xff]
    %v3264 = vld [vmem:[%s7 + $0x38] sm:$0xff]
    %v3265 = vld [vmem:[%s7 + $0x40] sm:$0xff]
    %v3266 = vld [vmem:[%s7 + $0x48] sm:$0xff]
    %v3267 = vld [vmem:[%s7 + $0x50] sm:$0xff]
    %v3268 = vld [vmem:[%s7 + $0x58] sm:$0xff]
    %v3269 = vld [vmem:[%s7 + $0x60] sm:$0xff]
    %v3270 = vld [vmem:[%s7 + $0x68] sm:$0xff]
    %v3271 = vld [vmem:[%s7 + $0x70] sm:$0xff]
    %v3272 = vld [vmem:[%s7 + $0x78] sm:$0xff]
    %v3273 = vld [vmem:[%s7 + $0x80] sm:$0xff]
    %v3274 = vld [vmem:[%s7 + $0x88] sm:$0xff]
    %v3275 = vld [vmem:[%s7 + $0x90] sm:$0xff]
    %v3276 = vld [vmem:[%s7 + $0x98] sm:$0xff]
    %v3277 = vld [vmem:[%s7 + $0xa0] sm:$0xff]
    %v3278 = vld [vmem:[%s7 + $0xa8] sm:$0xff]
    %v3279 = vld [vmem:[%s7 + $0xb0] sm:$0xff]
    %v3280 = vld [vmem:[%s7 + $0xb8] sm:$0xff]
    %v3281 = vld [vmem:[%s7 + $0xc0] sm:$0xff]
    %v3282 = vld [vmem:[%s7 + $0xc8] sm:$0xff]
    %v3283 = vld [vmem:[%s7 + $0xd0] sm:$0xff]
    %v3284 = vld [vmem:[%s7 + $0xd8] sm:$0xff]
    %v3285 = vld [vmem:[%s7 + $0xe0] sm:$0xff]
    %v3286 = vld [vmem:[%s7 + $0xe8] sm:$0xff]
    %v3287 = vld [vmem:[%s7 + $0xf0] sm:$0xff]
    %v3288 = vld [vmem:[%s7 + $0xf8] sm:$0xff]
    %v3289 = vld [vmem:[%s7 + $0x100] sm:$0xff]
    %v3290 = vld [vmem:[%s7 + $0x108] sm:$0xff]
    %v3291 = vld [vmem:[%s7 + $0x110] sm:$0xff]
    %v3292 = vld [vmem:[%s7 + $0x118] sm:$0xff]
    %v3293 = vld [vmem:[%s7 + $0x120] sm:$0xff]
    %v3294 = vld [vmem:[%s7 + $0x128] sm:$0xff]
    %v3295 = vld [vmem:[%s7 + $0x130] sm:$0xff]
    %v3296 = vld [vmem:[%s7 + $0x138] sm:$0xff]
    %v3297 = vld [vmem:[%s7 + $0x140] sm:$0xff]
    %v3298 = vld [vmem:[%s7 + $0x148] sm:$0xff]
    %v3299 = vld [vmem:[%s7 + $0x150] sm:$0xff]
    %v3300 = vld [vmem:[%s7 + $0x158] sm:$0xff]
    %v3301 = vld [vmem:[%s7 + $0x160] sm:$0xff]
    %v3302 = vld [vmem:[%s7 + $0x168] sm:$0xff]
    %v3303 = vld [vmem:[%s7 + $0x170] sm:$0xff]
    %v3304 = vld [vmem:[%s7 + $0x178] sm:$0xff]
    %v3305 = vld [vmem:[%s7 + $0x180] sm:$0xff]
    %v3306 = vld [vmem:[%s7 + $0x188] sm:$0xff]
    %v3307 = vpack.c.bf16 %v3251, %v3251
    %v3308 = vpack.c.bf16 %v3254, %v3254
    %v3309 = vpack.c.bf16 %v3256, %v3256
    %v3310 = vpack.c.bf16 %v3249, %v3249
    %v3311 = vld [vmem:[%s8] sm:$0x3]
    %v3313 = vperm.slane %v3311, 0
    %v3314 = vperm.slane %v3311, 1
    %v3367 = vunpack.c.l.b16 %v3257
    %v3368 = vunpack.c.h.b16 %v3257
    %v3369 = vunpack.c.l.b16 %v3258
    %v3370 = vunpack.c.h.b16 %v3258
    %v3371 = vunpack.c.l.b16 %v3259
    %v3372 = vunpack.c.h.b16 %v3259
    %v3373 = vunpack.c.l.b16 %v3260
    %v3374 = vunpack.c.h.b16 %v3260
    %v3375 = vunpack.c.l.b16 %v3261
    %v3376 = vunpack.c.h.b16 %v3261
    %v3377 = vunpack.c.l.b16 %v3262
    %v3378 = vunpack.c.h.b16 %v3262
    %v3379 = vunpack.c.l.b16 %v3263
    %v3380 = vunpack.c.h.b16 %v3263
    %v3381 = vunpack.c.l.b16 %v3264
    %v3382 = vunpack.c.h.b16 %v3264
    %v3383 = vunpack.c.l.b16 %v3265
    %v3384 = vunpack.c.h.b16 %v3265
    %v3385 = vunpack.c.l.b16 %v3266
    %v3386 = vunpack.c.h.b16 %v3266
    %v3387 = vunpack.c.l.b16 %v3267
    %v3388 = vunpack.c.h.b16 %v3267
    %v3389 = vunpack.c.l.b16 %v3268
    %v3390 = vunpack.c.h.b16 %v3268
    %v3391 = vunpack.c.l.b16 %v3269
    %v3392 = vunpack.c.h.b16 %v3269
    %v3393 = vunpack.c.l.b16 %v3270
    %v3394 = vunpack.c.h.b16 %v3270
    %v3395 = vunpack.c.l.b16 %v3271
    %v3396 = vunpack.c.h.b16 %v3271
    %v3397 = vunpack.c.l.b16 %v3272
    %v3398 = vunpack.c.h.b16 %v3272
    %v3399 = vunpack.c.l.b16 %v3273
    %v3400 = vunpack.c.h.b16 %v3273
    %v3401 = vunpack.c.l.b16 %v3274
    %v3402 = vunpack.c.h.b16 %v3274
    %v3403 = vunpack.c.l.b16 %v3275
    %v3404 = vunpack.c.h.b16 %v3275
    %v3405 = vunpack.c.l.b16 %v3276
    %v3406 = vunpack.c.h.b16 %v3276
    %v3407 = vunpack.c.l.b16 %v3277
    %v3408 = vunpack.c.h.b16 %v3277
    %v3409 = vunpack.c.l.b16 %v3278
    %v3410 = vunpack.c.h.b16 %v3278
    %v3411 = vunpack.c.l.b16 %v3279
    %v3412 = vunpack.c.h.b16 %v3279
    %v3413 = vunpack.c.l.b16 %v3280
    %v3414 = vunpack.c.h.b16 %v3280
    %v3415 = vunpack.c.l.b16 %v3281
    %v3416 = vunpack.c.h.b16 %v3281
    %v3417 = vunpack.c.l.b16 %v3282
    %v3418 = vunpack.c.h.b16 %v3282
    %v3419 = vunpack.c.l.b16 %v3283
    %v3420 = vunpack.c.h.b16 %v3283
    %v3421 = vunpack.c.l.b16 %v3284
    %v3422 = vunpack.c.h.b16 %v3284
    %v3423 = vunpack.c.l.b16 %v3285
    %v3424 = vunpack.c.h.b16 %v3285
    %v3425 = vunpack.c.l.b16 %v3286
    %v3426 = vunpack.c.h.b16 %v3286
    %v3427 = vunpack.c.l.b16 %v3287
    %v3428 = vunpack.c.h.b16 %v3287
    %v3429 = vunpack.c.l.b16 %v3288
    %v3430 = vunpack.c.h.b16 %v3288
    %v3431 = vunpack.c.l.b16 %v3289
    %v3432 = vunpack.c.h.b16 %v3289
    %v3433 = vunpack.c.l.b16 %v3290
    %v3434 = vunpack.c.h.b16 %v3290
    %v3435 = vunpack.c.l.b16 %v3291
    %v3436 = vunpack.c.h.b16 %v3291
    %v3437 = vunpack.c.l.b16 %v3292
    %v3438 = vunpack.c.h.b16 %v3292
    %v3439 = vunpack.c.l.b16 %v3293
    %v3440 = vunpack.c.h.b16 %v3293
    %v3441 = vunpack.c.l.b16 %v3294
    %v3442 = vunpack.c.h.b16 %v3294
    %v3443 = vunpack.c.l.b16 %v3295
    %v3444 = vunpack.c.h.b16 %v3295
    %v3445 = vunpack.c.l.b16 %v3296
    %v3446 = vunpack.c.h.b16 %v3296
    %v3447 = vunpack.c.l.b16 %v3297
    %v3448 = vunpack.c.h.b16 %v3297
    %v3449 = vunpack.c.l.b16 %v3298
    %v3450 = vunpack.c.h.b16 %v3298
    %v3451 = vunpack.c.l.b16 %v3299
    %v3452 = vunpack.c.h.b16 %v3299
    %v3453 = vunpack.c.l.b16 %v3300
    %v3454 = vunpack.c.h.b16 %v3300
    %v3455 = vunpack.c.l.b16 %v3301
    %v3456 = vunpack.c.h.b16 %v3301
    %v3457 = vunpack.c.l.b16 %v3302
    %v3458 = vunpack.c.h.b16 %v3302
    %v3459 = vunpack.c.l.b16 %v3303
    %v3460 = vunpack.c.h.b16 %v3303
    %v3461 = vunpack.c.l.b16 %v3304
    %v3462 = vunpack.c.h.b16 %v3304
    %v3463 = vunpack.c.l.b16 %v3305
    %v3464 = vunpack.c.h.b16 %v3305
    %v3465 = vunpack.c.l.b16 %v3306
    %v3466 = vunpack.c.h.b16 %v3306
    %v3467 = vpack.c.b16 %v3369, %v3367
    %v3468 = vpack.c.b16 %v3370, %v3368
    %v3469 = vpack.c.b16 %v3373, %v3371
    %v3470 = vpack.c.b16 %v3374, %v3372
    %v3471 = vpack.c.b16 %v3377, %v3375
    %v3472 = vpack.c.b16 %v3378, %v3376
    %v3473 = vpack.c.b16 %v3381, %v3379
    %v3474 = vpack.c.b16 %v3382, %v3380
    %v3475 = vpack.c.b16 %v3385, %v3383
    %v3476 = vpack.c.b16 %v3386, %v3384
    %v3477 = vpack.c.b16 %v3389, %v3387
    %v3478 = vpack.c.b16 %v3390, %v3388
    %v3479 = vpack.c.b16 %v3393, %v3391
    %v3480 = vpack.c.b16 %v3394, %v3392
    %v3481 = vpack.c.b16 %v3397, %v3395
    %v3482 = vpack.c.b16 %v3398, %v3396
    %v3483 = vpack.c.b16 %v3401, %v3399
    %v3484 = vpack.c.b16 %v3402, %v3400
    %v3485 = vpack.c.b16 %v3405, %v3403
    %v3486 = vpack.c.b16 %v3406, %v3404
    %v3487 = vpack.c.b16 %v3409, %v3407
    %v3488 = vpack.c.b16 %v3410, %v3408
    %v3489 = vpack.c.b16 %v3413, %v3411
    %v3490 = vpack.c.b16 %v3414, %v3412
    %v3491 = vpack.c.b16 %v3417, %v3415
    %v3492 = vpack.c.b16 %v3418, %v3416
    %v3493 = vpack.c.b16 %v3421, %v3419
    %v3494 = vpack.c.b16 %v3422, %v3420
    %v3495 = vpack.c.b16 %v3425, %v3423
    %v3496 = vpack.c.b16 %v3426, %v3424
    %v3497 = vpack.c.b16 %v3429, %v3427
    %v3498 = vpack.c.b16 %v3430, %v3428
    %v3499 = vpack.c.b16 %v3433, %v3431
    %v3500 = vpack.c.b16 %v3434, %v3432
    %v3501 = vpack.c.b16 %v3437, %v3435
    %v3502 = vpack.c.b16 %v3438, %v3436
    %v3503 = vpack.c.b16 %v3441, %v3439
    %v3504 = vpack.c.b16 %v3442, %v3440
    %v3505 = vpack.c.b16 %v3445, %v3443
    %v3506 = vpack.c.b16 %v3446, %v3444
    %v3507 = vpack.c.b16 %v3449, %v3447
    %v3508 = vpack.c.b16 %v3450, %v3448
    %v3509 = vpack.c.b16 %v3453, %v3451
    %v3510 = vpack.c.b16 %v3454, %v3452
    %v3511 = vpack.c.b16 %v3457, %v3455
    %v3512 = vpack.c.b16 %v3458, %v3456
    %v3513 = vpack.c.b16 %v3461, %v3459
    %v3514 = vpack.c.b16 %v3462, %v3460
    %v3515 = vpack.c.b16 %v3465, %v3463
    %v3516 = vpack.c.b16 %v3466, %v3464
    %vm3567 = vcmask 130048
    %v3569 = vsel %vm3567, %v3310, 0
    %3571 = vmatpush.bf16.msra.mxu0 %v3481
    %3572 = vmatpush.bf16.msra.mxu0 %v3479
    %3573 = vmatpush.bf16.msra.mxu0 %v3477
    %3574 = vmatpush.bf16.msra.mxu0 %v3475
    %3575 = vmatpush.bf16.msra.mxu0 %v3473
    %3576 = vmatpush.bf16.msra.mxu0 %v3471
    %3577 = vmatpush.bf16.msra.mxu0 %v3469
    %3578 = vmatpush.bf16.msra.mxu0 %v3467
    %3579 = vmatmul.bf16.gmra.mxu0 %v3307
    %v3580 = vpop.f32.mrf.mxu0
    %v3581 = vadd.f32 %v3313, %v3580
    %v3582 = vpop.f32.mrf.mxu0
    %3583 = vdwg.mxu0
    %3584 = vmatpush.bf16.msra.mxu0 %v3497
    %3585 = vmatpush.bf16.msra.mxu0 %v3495
    %3586 = vmatpush.bf16.msra.mxu0 %v3493
    %3587 = vmatpush.bf16.msra.mxu0 %v3491
    %3588 = vmatpush.bf16.msra.mxu0 %v3489
    %3589 = vmatpush.bf16.msra.mxu0 %v3487
    %3590 = vmatpush.bf16.msra.mxu0 %v3485
    %3591 = vmatpush.bf16.msra.mxu0 %v3483
    %3592 = vmatmul.bf16.gmra.mxu0 %v3308
    %v3593 = vpop.f32.mrf.mxu0
    %v3594 = vadd.f32 %v3581, %v3593
    %v3595 = vpop.f32.mrf.mxu0
    %3596 = vdwg.mxu0
    %3597 = vmatpush.bf16.msra.mxu0 %v3513
    %3598 = vmatpush.bf16.msra.mxu0 %v3511
    %3599 = vmatpush.bf16.msra.mxu0 %v3509
    %3600 = vmatpush.bf16.msra.mxu0 %v3507
    %3601 = vmatpush.bf16.msra.mxu0 %v3505
    %3602 = vmatpush.bf16.msra.mxu0 %v3503
    %3603 = vmatpush.bf16.msra.mxu0 %v3501
    %3604 = vmatpush.bf16.msra.mxu0 %v3499
    %3605 = vmatmul.bf16.gmra.mxu0 %v3309
    %v3606 = vpop.f32.mrf.mxu0
    %v3607 = vadd.f32 %v3594, %v3606
    %v3608 = vpop.f32.mrf.mxu0
    %3609 = vdwg.mxu0
    %3610 = vmatpush.bf16.msra.mxu0 0
    %3611 = vmatpush.bf16.msra.mxu0 0
    %3612 = vmatpush.bf16.msra.mxu0 0
    %3613 = vmatpush.bf16.msra.mxu0 0
    %3614 = vmatpush.bf16.msra.mxu0 0
    %3615 = vmatpush.bf16.msra.mxu0 0
    %3616 = vmatpush.bf16.msra.mxu0 0
    %3617 = vmatpush.bf16.msra.mxu0 %v3515
    %3618 = vmatmul.bf16.gmra.mxu0 %v3569
    %v3619 = vpop.f32.mrf.mxu0
    %v3620 = vadd.f32 %v3607, %v3619
    %v3621 = vpop.f32.mrf.mxu0
    %3622 = vdwg.mxu0
    %3623 = vmatpush.bf16.msra.mxu0 %v3482
    %3624 = vmatpush.bf16.msra.mxu0 %v3480
    %3625 = vmatpush.bf16.msra.mxu0 %v3478
    %3626 = vmatpush.bf16.msra.mxu0 %v3476
    %3627 = vmatpush.bf16.msra.mxu0 %v3474
    %3628 = vmatpush.bf16.msra.mxu0 %v3472
    %3629 = vmatpush.bf16.msra.mxu0 %v3470
    %3630 = vmatpush.bf16.msra.mxu0 %v3468
    %3631 = vmatmul.bf16.gmra.mxu0 %v3307
    %v3632 = vpop.f32.mrf.mxu0
    %v3633 = vadd.f32 %v3314, %v3632
    %v3634 = vpop.f32.mrf.mxu0
    %3635 = vdwg.mxu0
    %3636 = vmatpush.bf16.msra.mxu0 %v3498
    %3637 = vmatpush.bf16.msra.mxu0 %v3496
    %3638 = vmatpush.bf16.msra.mxu0 %v3494
    %3639 = vmatpush.bf16.msra.mxu0 %v3492
    %3640 = vmatpush.bf16.msra.mxu0 %v3490
    %3641 = vmatpush.bf16.msra.mxu0 %v3488
    %3642 = vmatpush.bf16.msra.mxu0 %v3486
    %3643 = vmatpush.bf16.msra.mxu0 %v3484
    %3644 = vmatmul.bf16.gmra.mxu0 %v3308
    %v3645 = vpop.f32.mrf.mxu0
    %v3646 = vadd.f32 %v3633, %v3645
    %v3647 = vpop.f32.mrf.mxu0
    %3648 = vdwg.mxu0
    %3649 = vmatpush.bf16.msra.mxu0 %v3514
    %3650 = vmatpush.bf16.msra.mxu0 %v3512
    %3651 = vmatpush.bf16.msra.mxu0 %v3510
    %3652 = vmatpush.bf16.msra.mxu0 %v3508
    %3653 = vmatpush.bf16.msra.mxu0 %v3506
    %3654 = vmatpush.bf16.msra.mxu0 %v3504
    %3655 = vmatpush.bf16.msra.mxu0 %v3502
    %3656 = vmatpush.bf16.msra.mxu0 %v3500
    %3657 = vmatmul.bf16.gmra.mxu0 %v3309
    %v3658 = vpop.f32.mrf.mxu0
    %v3659 = vadd.f32 %v3646, %v3658
    %v3660 = vpop.f32.mrf.mxu0
    %3661 = vdwg.mxu0
    %3662 = vmatpush.bf16.msra.mxu0 0
    %3663 = vmatpush.bf16.msra.mxu0 0
    %3664 = vmatpush.bf16.msra.mxu0 0
    %3665 = vmatpush.bf16.msra.mxu0 0
    %3666 = vmatpush.bf16.msra.mxu0 0
    %3667 = vmatpush.bf16.msra.mxu0 0
    %3668 = vmatpush.bf16.msra.mxu0 0
    %3669 = vmatpush.bf16.msra.mxu0 %v3516
    %3670 = vmatmul.bf16.gmra.mxu0 %v3569
    %v3671 = vpop.f32.mrf.mxu0
    %v3672 = vadd.f32 %v3659, %v3671
    %v3673 = vpop.f32.mrf.mxu0
    %3674 = vdwg.mxu0
    %v3675 = vmax.f32 %v3620, 0.0
    %v3676 = vmax.f32 %v3672, 0.0
    %v3677 = vld [vmem:[%s9] sm:$0xff]
    %v3678 = vld [vmem:[%s9 + $0x8] sm:$0xff]
    %v3679 = vld [vmem:[%s9 + $0x10] sm:$0xff]
    %v3680 = vld [vmem:[%s9 + $0x18] sm:$0xff]
    %v3681 = vld [vmem:[%s9 + $0x20] sm:$0xff]
    %v3682 = vld [vmem:[%s9 + $0x28] sm:$0xff]
    %v3683 = vld [vmem:[%s9 + $0x30] sm:$0xff]
    %v3684 = vld [vmem:[%s9 + $0x38] sm:$0xff]
    %v3685 = vld [vmem:[%s9 + $0x40] sm:$0xff]
    %v3686 = vld [vmem:[%s9 + $0x48] sm:$0xff]
    %v3687 = vld [vmem:[%s9 + $0x50] sm:$0xff]
    %v3688 = vld [vmem:[%s9 + $0x58] sm:$0xff]
    %v3689 = vld [vmem:[%s9 + $0x60] sm:$0xff]
    %v3690 = vld [vmem:[%s9 + $0x68] sm:$0xff]
    %v3691 = vld [vmem:[%s9 + $0x70] sm:$0xff]
    %v3692 = vld [vmem:[%s9 + $0x78] sm:$0xff]
    %v3693 = vld [vmem:[%s9 + $0x80] sm:$0xff]
    %v3694 = vld [vmem:[%s9 + $0x88] sm:$0xff]
    %v3695 = vld [vmem:[%s9 + $0x90] sm:$0xff]
    %v3696 = vld [vmem:[%s9 + $0x98] sm:$0xff]
    %v3697 = vld [vmem:[%s9 + $0xa0] sm:$0xff]
    %v3698 = vld [vmem:[%s9 + $0xa8] sm:$0xff]
    %v3699 = vld [vmem:[%s9 + $0xb0] sm:$0xff]
    %v3700 = vld [vmem:[%s9 + $0xb8] sm:$0xff]
    %v3701 = vld [vmem:[%s9 + $0xc0] sm:$0xff]
    %v3702 = vpack.c.bf16 %v3675, %v3675
    %v3703 = vpack.c.bf16 %v3676, %v3676
    %v3704 = vld [vmem:[%s10] sm:$0x3]
    %v3706 = vperm.slane %v3704, 0
    %v3707 = vperm.slane %v3704, 1
    %v3735 = vunpack.c.l.b16 %v3677
    %v3736 = vunpack.c.h.b16 %v3677
    %v3737 = vunpack.c.l.b16 %v3678
    %v3738 = vunpack.c.h.b16 %v3678
    %v3739 = vunpack.c.l.b16 %v3679
    %v3740 = vunpack.c.h.b16 %v3679
    %v3741 = vunpack.c.l.b16 %v3680
    %v3742 = vunpack.c.h.b16 %v3680
    %v3743 = vunpack.c.l.b16 %v3681
    %v3744 = vunpack.c.h.b16 %v3681
    %v3745 = vunpack.c.l.b16 %v3682
    %v3746 = vunpack.c.h.b16 %v3682
    %v3747 = vunpack.c.l.b16 %v3683
    %v3748 = vunpack.c.h.b16 %v3683
    %v3749 = vunpack.c.l.b16 %v3684
    %v3750 = vunpack.c.h.b16 %v3684
    %v3751 = vunpack.c.l.b16 %v3685
    %v3752 = vunpack.c.h.b16 %v3685
    %v3753 = vunpack.c.l.b16 %v3686
    %v3754 = vunpack.c.h.b16 %v3686
    %v3755 = vunpack.c.l.b16 %v3687
    %v3756 = vunpack.c.h.b16 %v3687
    %v3757 = vunpack.c.l.b16 %v3688
    %v3758 = vunpack.c.h.b16 %v3688
    %v3759 = vunpack.c.l.b16 %v3689
    %v3760 = vunpack.c.h.b16 %v3689
    %v3761 = vunpack.c.l.b16 %v3690
    %v3762 = vunpack.c.h.b16 %v3690
    %v3763 = vunpack.c.l.b16 %v3691
    %v3764 = vunpack.c.h.b16 %v3691
    %v3765 = vunpack.c.l.b16 %v3692
    %v3766 = vunpack.c.h.b16 %v3692
    %v3767 = vunpack.c.l.b16 %v3693
    %v3768 = vunpack.c.h.b16 %v3693
    %v3769 = vunpack.c.l.b16 %v3694
    %v3770 = vunpack.c.h.b16 %v3694
    %v3771 = vunpack.c.l.b16 %v3695
    %v3772 = vunpack.c.h.b16 %v3695
    %v3773 = vunpack.c.l.b16 %v3696
    %v3774 = vunpack.c.h.b16 %v3696
    %v3775 = vunpack.c.l.b16 %v3697
    %v3776 = vunpack.c.h.b16 %v3697
    %v3777 = vunpack.c.l.b16 %v3698
    %v3778 = vunpack.c.h.b16 %v3698
    %v3779 = vunpack.c.l.b16 %v3699
    %v3780 = vunpack.c.h.b16 %v3699
    %v3781 = vunpack.c.l.b16 %v3700
    %v3782 = vunpack.c.h.b16 %v3700
    %v3783 = vunpack.c.l.b16 %v3701
    %v3784 = vunpack.c.h.b16 %v3701
    %v3785 = vpack.c.b16 %v3737, %v3735
    %v3786 = vpack.c.b16 %v3738, %v3736
    %v3787 = vpack.c.b16 %v3741, %v3739
    %v3788 = vpack.c.b16 %v3742, %v3740
    %v3789 = vpack.c.b16 %v3745, %v3743
    %v3790 = vpack.c.b16 %v3746, %v3744
    %v3791 = vpack.c.b16 %v3749, %v3747
    %v3792 = vpack.c.b16 %v3750, %v3748
    %v3793 = vpack.c.b16 %v3753, %v3751
    %v3794 = vpack.c.b16 %v3754, %v3752
    %v3795 = vpack.c.b16 %v3757, %v3755
    %v3796 = vpack.c.b16 %v3758, %v3756
    %v3797 = vpack.c.b16 %v3761, %v3759
    %v3798 = vpack.c.b16 %v3762, %v3760
    %v3799 = vpack.c.b16 %v3765, %v3763
    %v3800 = vpack.c.b16 %v3766, %v3764
    %v3801 = vpack.c.b16 %v3769, %v3767
    %v3802 = vpack.c.b16 %v3770, %v3768
    %v3803 = vpack.c.b16 %v3773, %v3771
    %v3804 = vpack.c.b16 %v3774, %v3772
    %v3805 = vpack.c.b16 %v3777, %v3775
    %v3806 = vpack.c.b16 %v3778, %v3776
    %v3807 = vpack.c.b16 %v3781, %v3779
    %v3808 = vpack.c.b16 %v3782, %v3780
    %v3809 = vpack.c.b16 %v3783, %v3783
    %v3810 = vpack.c.b16 %v3784, %v3784
    %vm3835 = vcmask 588800
    %v3837 = vsel %vm3835, %v3703, 0
    %v3840 = vsel %vm1768, %v3809, 0
    %v3843 = vsel %vm1768, %v3810, 0
    %3845 = vmatpush.bf16.msra.mxu0 %v3799
    %3846 = vmatpush.bf16.msra.mxu0 %v3797
    %3847 = vmatpush.bf16.msra.mxu0 %v3795
    %3848 = vmatpush.bf16.msra.mxu0 %v3793
    %3849 = vmatpush.bf16.msra.mxu0 %v3791
    %3850 = vmatpush.bf16.msra.mxu0 %v3789
    %3851 = vmatpush.bf16.msra.mxu0 %v3787
    %3852 = vmatpush.bf16.msra.mxu0 %v3785
    %3853 = vmatmul.bf16.gmra.mxu0 %v3702
    %v3854 = vpop.f32.mrf.mxu0
    %v3855 = vadd.f32 %v3706, %v3854
    %v3856 = vpop.f32.mrf.mxu0
    %3857 = vdwg.mxu0
    %3858 = vmatpush.bf16.msra.mxu0 0
    %3859 = vmatpush.bf16.msra.mxu0 0
    %3860 = vmatpush.bf16.msra.mxu0 0
    %3861 = vmatpush.bf16.msra.mxu0 %v3840
    %3862 = vmatpush.bf16.msra.mxu0 %v3807
    %3863 = vmatpush.bf16.msra.mxu0 %v3805
    %3864 = vmatpush.bf16.msra.mxu0 %v3803
    %3865 = vmatpush.bf16.msra.mxu0 %v3801
    %3866 = vmatmul.bf16.gmra.mxu0 %v3837
    %v3867 = vpop.f32.mrf.mxu0
    %v3868 = vadd.f32 %v3855, %v3867
    %v3869 = vpop.f32.mrf.mxu0
    %3870 = vdwg.mxu0
    %3871 = vmatpush.bf16.msra.mxu0 %v3800
    %3872 = vmatpush.bf16.msra.mxu0 %v3798
    %3873 = vmatpush.bf16.msra.mxu0 %v3796
    %3874 = vmatpush.bf16.msra.mxu0 %v3794
    %3875 = vmatpush.bf16.msra.mxu0 %v3792
    %3876 = vmatpush.bf16.msra.mxu0 %v3790
    %3877 = vmatpush.bf16.msra.mxu0 %v3788
    %3878 = vmatpush.bf16.msra.mxu0 %v3786
    %3879 = vmatmul.bf16.gmra.mxu0 %v3702
    %v3880 = vpop.f32.mrf.mxu0
    %v3881 = vadd.f32 %v3707, %v3880
    %v3882 = vpop.f32.mrf.mxu0
    %3883 = vdwg.mxu0
    %3884 = vmatpush.bf16.msra.mxu0 0
    %3885 = vmatpush.bf16.msra.mxu0 0
    %3886 = vmatpush.bf16.msra.mxu0 0
    %3887 = vmatpush.bf16.msra.mxu0 %v3843
    %3888 = vmatpush.bf16.msra.mxu0 %v3808
    %3889 = vmatpush.bf16.msra.mxu0 %v3806
    %3890 = vmatpush.bf16.msra.mxu0 %v3804
    %3891 = vmatpush.bf16.msra.mxu0 %v3802
    %3892 = vmatmul.bf16.gmra.mxu0 %v3837
    %v3893 = vpop.f32.mrf.mxu0
    %v3894 = vadd.f32 %v3881, %v3893
    %v3895 = vpop.f32.mrf.mxu0
    %3896 = vdwg.mxu0
    %v3897 = vmax.f32 %v3868, 0.0
    %v3898 = vmax.f32 %v3894, 0.0
    %v3899 = vld [vmem:[%s11] sm:$0xf]
    %v3900 = vld [vmem:[%s11 + $0x4] sm:$0xf]
    %v3901 = vld [vmem:[%s11 + $0x8] sm:$0xf]
    %v3902 = vld [vmem:[%s11 + $0xc] sm:$0xf]
    %v3903 = vld [vmem:[%s11 + $0x10] sm:$0xf]
    %v3904 = vld [vmem:[%s11 + $0x14] sm:$0xf]
    %v3905 = vld [vmem:[%s11 + $0x18] sm:$0xf]
    %v3906 = vld [vmem:[%s11 + $0x1c] sm:$0xf]
    %v3907 = vld [vmem:[%s11 + $0x20] sm:$0xf]
    %v3908 = vld [vmem:[%s11 + $0x24] sm:$0xf]
    %v3909 = vld [vmem:[%s11 + $0x28] sm:$0xf]
    %v3910 = vld [vmem:[%s11 + $0x2c] sm:$0xf]
    %v3911 = vld [vmem:[%s11 + $0x30] sm:$0xf]
    %v3912 = vld [vmem:[%s11 + $0x34] sm:$0xf]
    %v3913 = vld [vmem:[%s11 + $0x38] sm:$0xf]
    %v3914 = vld [vmem:[%s11 + $0x3c] sm:$0xf]
    %v3915 = vld [vmem:[%s11 + $0x40] sm:$0xf]
    %v3916 = vld [vmem:[%s11 + $0x44] sm:$0xf]
    %v3917 = vld [vmem:[%s11 + $0x48] sm:$0xf]
    %v3918 = vld [vmem:[%s11 + $0x4c] sm:$0xf]
    %v3919 = vld [vmem:[%s11 + $0x50] sm:$0xf]
    %v3920 = vld [vmem:[%s11 + $0x54] sm:$0xf]
    %v3921 = vld [vmem:[%s11 + $0x58] sm:$0xf]
    %v3922 = vld [vmem:[%s11 + $0x5c] sm:$0xf]
    %v3923 = vld [vmem:[%s11 + $0x60] sm:$0xf]
    %v3924 = vpack.c.bf16 %v3897, %v3897
    %v3925 = vpack.c.bf16 %v3898, %v3898
    %v3926 = vld [vmem:[%s12] sm:$0x1]
    %v3928 = vperm.slane %v3926, 0
    %v3955 = vunpack.c.l.b16 %v3899
    %v3956 = vunpack.c.l.b16 %v3900
    %v3957 = vunpack.c.l.b16 %v3901
    %v3958 = vunpack.c.l.b16 %v3902
    %v3959 = vunpack.c.l.b16 %v3903
    %v3960 = vunpack.c.l.b16 %v3904
    %v3961 = vunpack.c.l.b16 %v3905
    %v3962 = vunpack.c.l.b16 %v3906
    %v3963 = vunpack.c.l.b16 %v3907
    %v3964 = vunpack.c.l.b16 %v3908
    %v3965 = vunpack.c.l.b16 %v3909
    %v3966 = vunpack.c.l.b16 %v3910
    %v3967 = vunpack.c.l.b16 %v3911
    %v3968 = vunpack.c.l.b16 %v3912
    %v3969 = vunpack.c.l.b16 %v3913
    %v3970 = vunpack.c.l.b16 %v3914
    %v3971 = vunpack.c.l.b16 %v3915
    %v3972 = vunpack.c.l.b16 %v3916
    %v3973 = vunpack.c.l.b16 %v3917
    %v3974 = vunpack.c.l.b16 %v3918
    %v3975 = vunpack.c.l.b16 %v3919
    %v3976 = vunpack.c.l.b16 %v3920
    %v3977 = vunpack.c.l.b16 %v3921
    %v3978 = vunpack.c.l.b16 %v3922
    %v3979 = vunpack.c.l.b16 %v3923
    %v3980 = vpack.c.b16 %v3956, %v3955
    %v3981 = vpack.c.b16 %v3958, %v3957
    %v3982 = vpack.c.b16 %v3960, %v3959
    %v3983 = vpack.c.b16 %v3962, %v3961
    %v3984 = vpack.c.b16 %v3964, %v3963
    %v3985 = vpack.c.b16 %v3966, %v3965
    %v3986 = vpack.c.b16 %v3968, %v3967
    %v3987 = vpack.c.b16 %v3970, %v3969
    %v3988 = vpack.c.b16 %v3972, %v3971
    %v3989 = vpack.c.b16 %v3974, %v3973
    %v3990 = vpack.c.b16 %v3976, %v3975
    %v3991 = vpack.c.b16 %v3978, %v3977
    %v3992 = vpack.c.b16 %v3979, %v3979
    %v4006 = vsel %vm3835, %v3925, 0
    %v4009 = vsel %vm1768, %v3992, 0
    %4011 = vmatpush.bf16.msra.mxu0 %v3987
    %4012 = vmatpush.bf16.msra.mxu0 %v3986
    %4013 = vmatpush.bf16.msra.mxu0 %v3985
    %4014 = vmatpush.bf16.msra.mxu0 %v3984
    %4015 = vmatpush.bf16.msra.mxu0 %v3983
    %4016 = vmatpush.bf16.msra.mxu0 %v3982
    %4017 = vmatpush.bf16.msra.mxu0 %v3981
    %4018 = vmatpush.bf16.msra.mxu0 %v3980
    %4019 = vmatmul.bf16.gmra.mxu0 %v3924
    %v4020 = vpop.f32.mrf.mxu0
    %v4021 = vadd.f32 %v3928, %v4020
    %v4022 = vpop.f32.mrf.mxu0
    %4023 = vdwg.mxu0
    %4024 = vmatpush.bf16.msra.mxu0 0
    %4025 = vmatpush.bf16.msra.mxu0 0
    %4026 = vmatpush.bf16.msra.mxu0 0
    %4027 = vmatpush.bf16.msra.mxu0 %v4009
    %4028 = vmatpush.bf16.msra.mxu0 %v3991
    %4029 = vmatpush.bf16.msra.mxu0 %v3990
    %4030 = vmatpush.bf16.msra.mxu0 %v3989
    %4031 = vmatpush.bf16.msra.mxu0 %v3988
    %4032 = vmatmul.bf16.gmra.mxu0 %v4006
    %v4033 = vpop.f32.mrf.mxu0
    %v4034 = vadd.f32 %v4021, %v4033
    %v4035 = vpop.f32.mrf.mxu0
    %4036 = vdwg.mxu0
    %vm4037 = vcmask 80896
    %v4038 = vsel %vm4037, %v4034, -inf
    %4039 = vmax.xlane.f32.xlu0 %v4038
    %v4040 = vpop.xlane.xlu0 %4039
    %v4041 = vsub.f32 %v4034, %v4040
    %v4042 = vmul.f32 %v4041, 1.442695
    %v4043 = vpow.pop %v4042
    %v4044 = vsel %vm4037, %v4043, 0.0
    %4045 = vadd.xlane.f32.xlu0 %v4044
    %v4046 = vpop.xlane.xlu0 %4045
    %v4047 = vlog2.pop %v4046
    %v4048 = vmul.f32 %v4047, 0.6931472
    %v4049 = vadd.f32 %v4048, %v4040
    %vm4050 = vcmask 162896
    %v4051 = vsel %vm4050, %v4034, -inf
    %4052 = vmax.xlane.f32.xlu0 %v4051
    %v4053 = vpop.xlane.xlu0 %4052
    %v4054 = vsub.f32 %v4034, %v4053
    %v4055 = vmul.f32 %v4054, 1.442695
    %v4056 = vpow.pop %v4055
    %4058 = vrot.lane.b32.xlu0 %v4056, 118
    %v4059 = vpop.permute.xlu0 %4058
    %v4061 = vsel %vm4037, %v4059, 0.0
    %4062 = vadd.xlane.f32.xlu0 %v4061
    %v4063 = vpop.xlane.xlu0 %4062
    %v4064 = vlog2.pop %v4063
    %v4065 = vmul.f32 %v4064, 0.6931472
    %v4066 = vadd.f32 %v4065, %v4053
    %vm4067 = vcmask 7168
    %v4068 = vsel %vm4067, %v4049, %v4066
    %vm4069 = vcmask 15360
    %v4070 = vsel %vm4069, %v4068, -inf
    %4071 = vmax.xlane.f32.xlu0 %v4070
    %v4072 = vpop.xlane.xlu0 %4071
    %v4073 = vsub.f32 %v4068, %v4072
    %v4074 = vmul.f32 %v4073, 1.442695
    %v4075 = vpow.pop %v4074
    %v4076 = vsel %vm4069, %v4075, 0.0
    %4077 = vadd.xlane.f32.xlu0 %v4076
    %v4078 = vpop.xlane.xlu0 %4077
    %v4079 = vrcp.pop %v4078
    %v4080 = vmul.f32 %v4078, %v4079
    %v4081 = vsub.f32 1.0, %v4080
    %v4082 = vmul.f32 %v4079, %v4081
    %v4083 = vadd.f32 %v4079, %v4082
    %vm4084 = vweird.f32 %v4078
    %vm4085 = vweird.f32 %v4079
    %vm4086 = vmor %vm4084, %vm4085
    %v4087 = vsel %vm4086, %v4079, %v4083
    %v4088 = vand.u32 2147483647, %v4078
    %vm4089 = vcmp.eq.f32.partialorder %v4088, 8.507059e+37
    %v4090 = vand.u32 %v4078, 2147483648
    %v4091 = vor.u32 1.1754944e-38, %v4090
    %v4092 = vsel %vm4089, %v4091, %v4087
    %v4093 = vmul.f32 %v4075, %v4092
    %v4094 = vld [vmem:[%s13] sm:$0xf]
    %v4095 = vld [vmem:[%s13 + $0x4] sm:$0xf]
    %v4096 = vld [vmem:[%s13 + $0x8] sm:$0xf]
    %v4097 = vld [vmem:[%s13 + $0xc] sm:$0xf]
    %v4098 = vld [vmem:[%s13 + $0x10] sm:$0xf]
    %v4099 = vld [vmem:[%s13 + $0x14] sm:$0xf]
    %v4100 = vld [vmem:[%s13 + $0x18] sm:$0xf]
    %v4101 = vld [vmem:[%s13 + $0x1c] sm:$0xf]
    %v4102 = vld [vmem:[%s13 + $0x20] sm:$0xf]
    %v4103 = vld [vmem:[%s13 + $0x24] sm:$0xf]
    %v4104 = vld [vmem:[%s13 + $0x28] sm:$0xf]
    %v4105 = vld [vmem:[%s13 + $0x2c] sm:$0xf]
    %v4106 = vld [vmem:[%s13 + $0x30] sm:$0xf]
    %v4107 = vld [vmem:[%s13 + $0x34] sm:$0xf]
    %v4108 = vld [vmem:[%s13 + $0x38] sm:$0xf]
    %v4109 = vld [vmem:[%s13 + $0x3c] sm:$0xf]
    %v4110 = vld [vmem:[%s13 + $0x40] sm:$0xf]
    %v4111 = vld [vmem:[%s13 + $0x44] sm:$0xf]
    %v4112 = vld [vmem:[%s13 + $0x48] sm:$0xf]
    %v4113 = vld [vmem:[%s13 + $0x4c] sm:$0xf]
    %v4114 = vld [vmem:[%s13 + $0x50] sm:$0xf]
    %v4115 = vld [vmem:[%s13 + $0x54] sm:$0xf]
    %v4116 = vld [vmem:[%s13 + $0x58] sm:$0xf]
    %v4117 = vld [vmem:[%s13 + $0x5c] sm:$0xf]
    %v4118 = vld [vmem:[%s13 + $0x60] sm:$0xf]
    %v4119 = vld [vmem:[%s13 + $0x64] sm:$0xf]
    %v4120 = vld [vmem:[%s13 + $0x68] sm:$0xf]
    %v4121 = vld [vmem:[%s13 + $0x6c] sm:$0xf]
    %v4122 = vld [vmem:[%s13 + $0x70] sm:$0xf]
    %v4123 = vld [vmem:[%s13 + $0x74] sm:$0xf]
    %v4124 = vld [vmem:[%s13 + $0x78] sm:$0xf]
    %v4125 = vld [vmem:[%s13 + $0x7c] sm:$0xf]
    %v4126 = vld [vmem:[%s13 + $0x80] sm:$0xf]
    %v4127 = vld [vmem:[%s13 + $0x84] sm:$0xf]
    %v4128 = vld [vmem:[%s13 + $0x88] sm:$0xf]
    %v4129 = vld [vmem:[%s13 + $0x8c] sm:$0xf]
    %v4130 = vld [vmem:[%s13 + $0x90] sm:$0xf]
    %v4131 = vld [vmem:[%s13 + $0x94] sm:$0xf]
    %v4132 = vld [vmem:[%s13 + $0x98] sm:$0xf]
    %v4133 = vld [vmem:[%s13 + $0x9c] sm:$0xf]
    %v4134 = vld [vmem:[%s13 + $0xa0] sm:$0xf]
    %v4135 = vld [vmem:[%s13 + $0xa4] sm:$0xf]
    %v4136 = vld [vmem:[%s13 + $0xa8] sm:$0xf]
    %v4137 = vld [vmem:[%s13 + $0xac] sm:$0xf]
    %v4138 = vld [vmem:[%s13 + $0xb0] sm:$0xf]
    %v4139 = vld [vmem:[%s13 + $0xb4] sm:$0xf]
    %v4140 = vld [vmem:[%s13 + $0xb8] sm:$0xf]
    %v4141 = vld [vmem:[%s13 + $0xbc] sm:$0xf]
    %v4142 = vld [vmem:[%s13 + $0xc0] sm:$0xf]
    %v4143 = vld [vmem:[%s13 + $0xc4] sm:$0xf]
    %v4144 = vld [vmem:[%s14] sm:$0x1]
    %v4146 = vperm.slane %v4144, 0
    %v4198 = vunpack.c.l.b16 %v4094
    %v4199 = vunpack.c.l.b16 %v4095
    %v4200 = vunpack.c.l.b16 %v4096
    %v4201 = vunpack.c.l.b16 %v4097
    %v4202 = vunpack.c.l.b16 %v4098
    %v4203 = vunpack.c.l.b16 %v4099
    %v4204 = vunpack.c.l.b16 %v4100
    %v4205 = vunpack.c.l.b16 %v4101
    %v4206 = vunpack.c.l.b16 %v4102
    %v4207 = vunpack.c.l.b16 %v4103
    %v4208 = vunpack.c.l.b16 %v4104
    %v4209 = vunpack.c.l.b16 %v4105
    %v4210 = vunpack.c.l.b16 %v4106
    %v4211 = vunpack.c.l.b16 %v4107
    %v4212 = vunpack.c.l.b16 %v4108
    %v4213 = vunpack.c.l.b16 %v4109
    %v4214 = vunpack.c.l.b16 %v4110
    %v4215 = vunpack.c.l.b16 %v4111
    %v4216 = vunpack.c.l.b16 %v4112
    %v4217 = vunpack.c.l.b16 %v4113
    %v4218 = vunpack.c.l.b16 %v4114
    %v4219 = vunpack.c.l.b16 %v4115
    %v4220 = vunpack.c.l.b16 %v4116
    %v4221 = vunpack.c.l.b16 %v4117
    %v4222 = vunpack.c.l.b16 %v4118
    %v4223 = vunpack.c.l.b16 %v4119
    %v4224 = vunpack.c.l.b16 %v4120
    %v4225 = vunpack.c.l.b16 %v4121
    %v4226 = vunpack.c.l.b16 %v4122
    %v4227 = vunpack.c.l.b16 %v4123
    %v4228 = vunpack.c.l.b16 %v4124
    %v4229 = vunpack.c.l.b16 %v4125
    %v4230 = vunpack.c.l.b16 %v4126
    %v4231 = vunpack.c.l.b16 %v4127
    %v4232 = vunpack.c.l.b16 %v4128
    %v4233 = vunpack.c.l.b16 %v4129
    %v4234 = vunpack.c.l.b16 %v4130
    %v4235 = vunpack.c.l.b16 %v4131
    %v4236 = vunpack.c.l.b16 %v4132
    %v4237 = vunpack.c.l.b16 %v4133
    %v4238 = vunpack.c.l.b16 %v4134
    %v4239 = vunpack.c.l.b16 %v4135
    %v4240 = vunpack.c.l.b16 %v4136
    %v4241 = vunpack.c.l.b16 %v4137
    %v4242 = vunpack.c.l.b16 %v4138
    %v4243 = vunpack.c.l.b16 %v4139
    %v4244 = vunpack.c.l.b16 %v4140
    %v4245 = vunpack.c.l.b16 %v4141
    %v4246 = vunpack.c.l.b16 %v4142
    %v4247 = vunpack.c.l.b16 %v4143
    %v4248 = vpack.c.b16 %v4199, %v4198
    %v4249 = vpack.c.b16 %v4201, %v4200
    %v4250 = vpack.c.b16 %v4203, %v4202
    %v4251 = vpack.c.b16 %v4205, %v4204
    %v4252 = vpack.c.b16 %v4207, %v4206
    %v4253 = vpack.c.b16 %v4209, %v4208
    %v4254 = vpack.c.b16 %v4211, %v4210
    %v4255 = vpack.c.b16 %v4213, %v4212
    %v4256 = vpack.c.b16 %v4215, %v4214
    %v4257 = vpack.c.b16 %v4217, %v4216
    %v4258 = vpack.c.b16 %v4219, %v4218
    %v4259 = vpack.c.b16 %v4221, %v4220
    %v4260 = vpack.c.b16 %v4223, %v4222
    %v4261 = vpack.c.b16 %v4225, %v4224
    %v4262 = vpack.c.b16 %v4227, %v4226
    %v4263 = vpack.c.b16 %v4229, %v4228
    %v4264 = vpack.c.b16 %v4231, %v4230
    %v4265 = vpack.c.b16 %v4233, %v4232
    %v4266 = vpack.c.b16 %v4235, %v4234
    %v4267 = vpack.c.b16 %v4237, %v4236
    %v4268 = vpack.c.b16 %v4239, %v4238
    %v4269 = vpack.c.b16 %v4241, %v4240
    %v4270 = vpack.c.b16 %v4243, %v4242
    %v4271 = vpack.c.b16 %v4245, %v4244
    %v4272 = vpack.c.b16 %v4247, %v4246
    %4298 = vmatpush.bf16.msra.mxu0 %v4255
    %4299 = vmatpush.bf16.msra.mxu0 %v4254
    %4300 = vmatpush.bf16.msra.mxu0 %v4253
    %4301 = vmatpush.bf16.msra.mxu0 %v4252
    %4302 = vmatpush.bf16.msra.mxu0 %v4251
    %4303 = vmatpush.bf16.msra.mxu0 %v4250
    %4304 = vmatpush.bf16.msra.mxu0 %v4249
    %4305 = vmatpush.bf16.msra.mxu0 %v4248
    %4306 = vmatmul.bf16.gmra.mxu0 %v3307
    %v4307 = vpop.f32.mrf.mxu0
    %v4308 = vadd.f32 %v4146, %v4307
    %v4309 = vpop.f32.mrf.mxu0
    %4310 = vdwg.mxu0
    %4311 = vmatpush.bf16.msra.mxu0 %v4263
    %4312 = vmatpush.bf16.msra.mxu0 %v4262
    %4313 = vmatpush.bf16.msra.mxu0 %v4261
    %4314 = vmatpush.bf16.msra.mxu0 %v4260
    %4315 = vmatpush.bf16.msra.mxu0 %v4259
    %4316 = vmatpush.bf16.msra.mxu0 %v4258
    %4317 = vmatpush.bf16.msra.mxu0 %v4257
    %4318 = vmatpush.bf16.msra.mxu0 %v4256
    %4319 = vmatmul.bf16.gmra.mxu0 %v3308
    %v4320 = vpop.f32.mrf.mxu0
    %v4321 = vadd.f32 %v4308, %v4320
    %v4322 = vpop.f32.mrf.mxu0
    %4323 = vdwg.mxu0
    %4324 = vmatpush.bf16.msra.mxu0 %v4271
    %4325 = vmatpush.bf16.msra.mxu0 %v4270
    %4326 = vmatpush.bf16.msra.mxu0 %v4269
    %4327 = vmatpush.bf16.msra.mxu0 %v4268
    %4328 = vmatpush.bf16.msra.mxu0 %v4267
    %4329 = vmatpush.bf16.msra.mxu0 %v4266
    %4330 = vmatpush.bf16.msra.mxu0 %v4265
    %4331 = vmatpush.bf16.msra.mxu0 %v4264
    %4332 = vmatmul.bf16.gmra.mxu0 %v3309
    %v4333 = vpop.f32.mrf.mxu0
    %v4334 = vadd.f32 %v4321, %v4333
    %v4335 = vpop.f32.mrf.mxu0
    %4336 = vdwg.mxu0
    %4337 = vmatpush.bf16.msra.mxu0 0
    %4338 = vmatpush.bf16.msra.mxu0 0
    %4339 = vmatpush.bf16.msra.mxu0 0
    %4340 = vmatpush.bf16.msra.mxu0 0
    %4341 = vmatpush.bf16.msra.mxu0 0
    %4342 = vmatpush.bf16.msra.mxu0 0
    %4343 = vmatpush.bf16.msra.mxu0 0
    %4344 = vmatpush.bf16.msra.mxu0 %v4272
    %4345 = vmatmul.bf16.gmra.mxu0 %v3569
    %v4346 = vpop.f32.mrf.mxu0
    %v4347 = vadd.f32 %v4334, %v4346
    %v4348 = vpop.f32.mrf.mxu0
    %4349 = vdwg.mxu0
    %v4350 = vsel %vm4037, %v4347, -inf
    %4351 = vmax.xlane.f32.xlu0 %v4350
    %v4352 = vpop.xlane.xlu0 %4351
    %v4353 = vsub.f32 %v4347, %v4352
    %v4354 = vmul.f32 %v4353, 1.442695
    %v4355 = vpow.pop %v4354
    %v4356 = vsel %vm4037, %v4355, 0.0
    %4357 = vadd.xlane.f32.xlu0 %v4356
    %v4358 = vpop.xlane.xlu0 %4357
    %v4359 = vlog2.pop %v4358
    %v4360 = vmul.f32 %v4359, 0.6931472
    %v4361 = vadd.f32 %v4360, %v4352
    %v4362 = vsel %vm4050, %v4347, -inf
    %4363 = vmax.xlane.f32.xlu0 %v4362
    %v4364 = vpop.xlane.xlu0 %4363
    %v4365 = vsub.f32 %v4347, %v4364
    %v4366 = vmul.f32 %v4365, 1.442695
    %v4367 = vpow.pop %v4366
    %4369 = vrot.lane.b32.xlu0 %v4367, 118
    %v4370 = vpop.permute.xlu0 %4369
    %v4372 = vsel %vm4037, %v4370, 0.0
    %4373 = vadd.xlane.f32.xlu0 %v4372
    %v4374 = vpop.xlane.xlu0 %4373
    %v4375 = vlog2.pop %v4374
    %v4376 = vmul.f32 %v4375, 0.6931472
    %v4377 = vadd.f32 %v4376, %v4364
    %vm4378 = vcmask 244896
    %v4379 = vsel %vm4378, %v4347, -inf
    %4380 = vmax.xlane.f32.xlu0 %v4379
    %v4381 = vpop.xlane.xlu0 %4380
    %v4382 = vsub.f32 %v4347, %v4381
    %v4383 = vmul.f32 %v4382, 1.442695
    %v4384 = vpow.pop %v4383
    %4386 = vrot.lane.b32.xlu0 %v4384, 108
    %v4387 = vpop.permute.xlu0 %4386
    %v4389 = vsel %vm4037, %v4387, 0.0
    %4390 = vadd.xlane.f32.xlu0 %v4389
    %v4391 = vpop.xlane.xlu0 %4390
    %v4392 = vlog2.pop %v4391
    %v4393 = vmul.f32 %v4392, 0.6931472
    %v4394 = vadd.f32 %v4393, %v4381
    %vm4395 = vcmask 326896
    %v4396 = vsel %vm4395, %v4347, -inf
    %4397 = vmax.xlane.f32.xlu0 %v4396
    %v4398 = vpop.xlane.xlu0 %4397
    %v4399 = vsub.f32 %v4347, %v4398
    %v4400 = vmul.f32 %v4399, 1.442695
    %v4401 = vpow.pop %v4400
    %4403 = vrot.lane.b32.xlu0 %v4401, 98
    %v4404 = vpop.permute.xlu0 %4403
    %v4406 = vsel %vm4037, %v4404, 0.0
    %4407 = vadd.xlane.f32.xlu0 %v4406
    %v4408 = vpop.xlane.xlu0 %4407
    %v4409 = vlog2.pop %v4408
    %v4410 = vmul.f32 %v4409, 0.6931472
    %v4411 = vadd.f32 %v4410, %v4398
    %vm4412 = vcmask 408896
    %v4413 = vsel %vm4412, %v4347, -inf
    %4414 = vmax.xlane.f32.xlu0 %v4413
    %v4415 = vpop.xlane.xlu0 %4414
    %v4416 = vsub.f32 %v4347, %v4415
    %v4417 = vmul.f32 %v4416, 1.442695
    %v4418 = vpow.pop %v4417
    %4420 = vrot.lane.b32.xlu0 %v4418, 88
    %v4421 = vpop.permute.xlu0 %4420
    %v4423 = vsel %vm4037, %v4421, 0.0
    %4424 = vadd.xlane.f32.xlu0 %v4423
    %v4425 = vpop.xlane.xlu0 %4424
    %v4426 = vlog2.pop %v4425
    %v4427 = vmul.f32 %v4426, 0.6931472
    %v4428 = vadd.f32 %v4427, %v4415
    %vm4429 = vcmask 490896
    %v4430 = vsel %vm4429, %v4347, -inf
    %4431 = vmax.xlane.f32.xlu0 %v4430
    %v4432 = vpop.xlane.xlu0 %4431
    %v4433 = vsub.f32 %v4347, %v4432
    %v4434 = vmul.f32 %v4433, 1.442695
    %v4435 = vpow.pop %v4434
    %4437 = vrot.lane.b32.xlu0 %v4435, 78
    %v4438 = vpop.permute.xlu0 %4437
    %v4440 = vsel %vm4037, %v4438, 0.0
    %4441 = vadd.xlane.f32.xlu0 %v4440
    %v4442 = vpop.xlane.xlu0 %4441
    %v4443 = vlog2.pop %v4442
    %v4444 = vmul.f32 %v4443, 0.6931472
    %v4445 = vadd.f32 %v4444, %v4432
    %vm4446 = vcmask 572896
    %v4447 = vsel %vm4446, %v4347, -inf
    %4448 = vmax.xlane.f32.xlu0 %v4447
    %v4449 = vpop.xlane.xlu0 %4448
    %v4450 = vsub.f32 %v4347, %v4449
    %v4451 = vmul.f32 %v4450, 1.442695
    %v4452 = vpow.pop %v4451
    %4454 = vrot.lane.b32.xlu0 %v4452, 68
    %v4455 = vpop.permute.xlu0 %4454
    %v4457 = vsel %vm4037, %v4455, 0.0
    %4458 = vadd.xlane.f32.xlu0 %v4457
    %v4459 = vpop.xlane.xlu0 %4458
    %v4460 = vlog2.pop %v4459
    %v4461 = vmul.f32 %v4460, 0.6931472
    %v4462 = vadd.f32 %v4461, %v4449
    %vm4463 = vcmask 654896
    %v4464 = vsel %vm4463, %v4347, -inf
    %4465 = vmax.xlane.f32.xlu0 %v4464
    %v4466 = vpop.xlane.xlu0 %4465
    %v4467 = vsub.f32 %v4347, %v4466
    %v4468 = vmul.f32 %v4467, 1.442695
    %v4469 = vpow.pop %v4468
    %4471 = vrot.lane.b32.xlu0 %v4469, 58
    %v4472 = vpop.permute.xlu0 %4471
    %v4474 = vsel %vm4037, %v4472, 0.0
    %4475 = vadd.xlane.f32.xlu0 %v4474
    %v4476 = vpop.xlane.xlu0 %4475
    %v4477 = vlog2.pop %v4476
    %v4478 = vmul.f32 %v4477, 0.6931472
    %v4479 = vadd.f32 %v4478, %v4466
    %vm4480 = vcmask 736896
    %v4481 = vsel %vm4480, %v4347, -inf
    %4482 = vmax.xlane.f32.xlu0 %v4481
    %v4483 = vpop.xlane.xlu0 %4482
    %v4484 = vsub.f32 %v4347, %v4483
    %v4485 = vmul.f32 %v4484, 1.442695
    %v4486 = vpow.pop %v4485
    %4488 = vrot.lane.b32.xlu0 %v4486, 48
    %v4489 = vpop.permute.xlu0 %4488
    %v4491 = vsel %vm4037, %v4489, 0.0
    %4492 = vadd.xlane.f32.xlu0 %v4491
    %v4493 = vpop.xlane.xlu0 %4492
    %v4494 = vlog2.pop %v4493
    %v4495 = vmul.f32 %v4494, 0.6931472
    %v4496 = vadd.f32 %v4495, %v4483
    %vm4497 = vcmask 818896
    %v4498 = vsel %vm4497, %v4347, -inf
    %4499 = vmax.xlane.f32.xlu0 %v4498
    %v4500 = vpop.xlane.xlu0 %4499
    %v4501 = vsub.f32 %v4347, %v4500
    %v4502 = vmul.f32 %v4501, 1.442695
    %v4503 = vpow.pop %v4502
    %4505 = vrot.lane.b32.xlu0 %v4503, 38
    %v4506 = vpop.permute.xlu0 %4505
    %v4508 = vsel %vm4037, %v4506, 0.0
    %4509 = vadd.xlane.f32.xlu0 %v4508
    %v4510 = vpop.xlane.xlu0 %4509
    %v4511 = vlog2.pop %v4510
    %v4512 = vmul.f32 %v4511, 0.6931472
    %v4513 = vadd.f32 %v4512, %v4500
    %v4514 = vsel %vm4067, %v4361, %v4377
    %v4515 = vsel %vm4069, %v4514, %v4394
    %vm4516 = vcmask 23552
    %v4517 = vsel %vm4516, %v4515, %v4411
    %vm4518 = vcmask 31744
    %v4519 = vsel %vm4518, %v4517, %v4428
    %vm4520 = vcmask 39936
    %v4521 = vsel %vm4520, %v4519, %v4445
    %vm4522 = vcmask 48128
    %v4523 = vsel %vm4522, %v4521, %v4462
    %vm4524 = vcmask 56320
    %v4525 = vsel %vm4524, %v4523, %v4479
    %vm4526 = vcmask 64512
    %v4527 = vsel %vm4526, %v4525, %v4496
    %vm4528 = vcmask 72704
    %v4529 = vsel %vm4528, %v4527, %v4513
    %v4530 = vsel %vm4037, %v4529, -inf
    %4531 = vmax.xlane.f32.xlu0 %v4530
    %v4532 = vpop.xlane.xlu0 %4531
    %v4533 = vsub.f32 %v4529, %v4532
    %v4534 = vmul.f32 %v4533, 1.442695
    %v4535 = vpow.pop %v4534
    %v4536 = vsel %vm4037, %v4535, 0.0
    %4537 = vadd.xlane.f32.xlu0 %v4536
    %v4538 = vpop.xlane.xlu0 %4537
    %v4539 = vrcp.pop %v4538
    %v4540 = vmul.f32 %v4538, %v4539
    %v4541 = vsub.f32 1.0, %v4540
    %v4542 = vmul.f32 %v4539, %v4541
    %v4543 = vadd.f32 %v4539, %v4542
    %vm4544 = vweird.f32 %v4538
    %vm4545 = vweird.f32 %v4539
    %vm4546 = vmor %vm4544, %vm4545
    %v4547 = vsel %vm4546, %v4539, %v4543
    %v4548 = vand.u32 2147483647, %v4538
    %vm4549 = vcmp.eq.f32.partialorder %v4548, 8.507059e+37
    %v4550 = vand.u32 %v4538, 2147483648
    %v4551 = vor.u32 1.1754944e-38, %v4550
    %v4552 = vsel %vm4549, %v4551, %v4547
    %v4553 = vmul.f32 %v4535, %v4552
    %4555 = vrot.lane.b32.xlu0 %v4553, 2
    %v4556 = vpop.permute.xlu0 %4555
    %v4558 = vsel %vm4069, %v4093, %v4556
    %vm4559 = vcmask 97280
    %v4560 = vsel %vm4559, %v4558, 0.0
    %4561 = vst [vmem:[#allocation2] sm:$0xff] %v4560
    // Predicated region
    $region62: #{tpu_custom_call.1} parent=1 // pred_check
      _
    $region63: #{tpu_custom_call.1} parent=1 // pred_check_branch
      %4563 = sbr.rel (0) target = $region65
    $region64: #{tpu_custom_call.1} parent=1 // pred_region
      %4565 = vsyncadd [#allocation3], 0
      %s4567 = sshll.u32 [#allocation2], 4
      %s4568 = int_to_ptr.vmem [resolvable:$true] %s4567
      %s4569 = sshll.u32 %s15, 4
      %s4570 = int_to_ptr.hbm [resolvable:$true] %s4569
      %4572 = dma.vmem_to_hbm [thread:$0]  %s4568, 128, %s4570, [#allocation3]
    $region65: #{tpu_custom_call.1} parent=1 // pred_fallthru
      _
    // Predicated region
    $region66: #{tpu_custom_call.1} parent=1 // pred_check
      _
    $region67: #{tpu_custom_call.1} parent=1 // pred_check_branch
      %4574 = sbr.rel (0) target = $region69
    $region68: #{tpu_custom_call.1} parent=1 // pred_region
      %4576 = dma.done [#allocation3], 128
    $region69: #{tpu_custom_call.1} parent=1 // pred_fallthru
      _
    %4577 = vsyncpa [#allocation3], 1

</llo_original>
